<compile_context>
chip_gen: v5e
topology: v5e:2x2
jax: 0.10.0
libtpu: 0.0.40
codegen_flags: <defaults>
</compile_context>

<pallas_src>
import numpy as np
import jax
import jax.numpy as jnp
from jax.experimental import pallas as pl
from jax.experimental.pallas import tpu as pltpu  # noqa: F401  (kept for TPU-specific tuning)

# ----------------------------- small config ---------------------------------
B = 4            # number of docs (len(pos_list)) == BERT batch
S = 8            # sequence length
D = 128          # hidden size / emb_dim (stands in for 768)
NH = 2           # attention heads
HD = D // NH     # head dim
FF = 256         # FFN intermediate size
NLAYERS = 2      # synthetic BERT depth
VOCAB = 50
TYPE_VOCAB = 2
MAX_POS_BERT = 16    # BERT position table (>= S)
MAX_POS = 64         # module's position_enc table (stands in for 1000)
UTIL_OUT = 100       # utility head output dim
PAD_OUT = 128        # lane-dense padded output width
EPS = 1e-12          # BERT LayerNorm eps
F32 = jnp.float32
BF16 = jnp.bfloat16


# ------------------- position_encoding_init (exact port) --------------------
def position_encoding_init(max_pos, emb_dim):
    position_enc = np.array(
        [[pos / np.power(10000, 2 * (j // 2) / emb_dim) for j in range(emb_dim)]
         if pos != 0 else np.zeros(emb_dim) for pos in range(max_pos)])
    position_enc[1:, 0::2] = np.sin(position_enc[1:, 0::2])
    position_enc[1:, 1::2] = np.cos(position_enc[1:, 1::2])
    return jnp.asarray(position_enc, dtype=F32)


# ------------------------------ in-kernel helpers ----------------------------
def _layernorm(x, g, b):
    mu = jnp.mean(x, axis=-1, keepdims=True)
    var = jnp.mean((x - mu) ** 2, axis=-1, keepdims=True)
    return (x - mu) * jax.lax.rsqrt(var + EPS) * g + b


def _gelu(x):
    # TODO(synk): tanh approximation; HF BERT default 'gelu' is the exact erf form (~1e-3 diff).
    return 0.5 * x * (1.0 + jnp.tanh(0.7978845608028654 * (x + 0.044715 * x * x * x)))


# ------------------------------- fused kernel --------------------------------
def fused_forward_kernel(emb_ref, mask_ref, eg_ref, eb_ref,
                         wqkv_ref, bqkv_ref, wo_ref, bo_ref, g1_ref, be1_ref,
                         w1_ref, b1_ref, w2_ref, b2_ref, g2_ref, be2_ref,
                         pos_ref, wih_ref, whh_ref, lb_ref, uw_ref, ub_ref,
                         out_ref):
    # ---- embedding LayerNorm over all B*S rows ----
    x = _layernorm(emb_ref[...], eg_ref[...], eb_ref[...])          # (B*S, D) f32
    mask_add = mask_ref[...]                                        # (B, S) additive mask

    # ---- BERT encoder layers (static unroll; all weights resident in VMEM) ----
    for l in range(NLAYERS):
        # fused QKV projection: one (B*S, D) x (D, 3D) matmul (scale folded into wq/bq)
        qkv = (jnp.dot(x.astype(BF16), wqkv_ref[l], preferred_element_type=F32)
               + bqkv_ref[l])                                       # (B*S, 3D) f32

        # attention per (batch, head); tiny S=8 tiles, statically unrolled
        ctx_heads = [[] for _ in range(NH)]
        for b in range(B):
            r0, r1 = b * S, (b + 1) * S
            madd = mask_add[b:b + 1, :]                             # (1, S)
            for h in range(NH):
                c0 = h * HD
                qh = qkv[r0:r1, c0:c0 + HD]                         # (S, HD)
                kh = qkv[r0:r1, D + c0:D + c0 + HD]
                vh = qkv[r0:r1, 2 * D + c0:2 * D + c0 + HD]
                s = jax.lax.dot_general(qh, kh, (((1,), (1,)), ((), ())),
                                        preferred_element_type=F32) + madd
                s = s - jnp.max(s, axis=-1, keepdims=True)
                p = jnp.exp(s)
                p = p * pl.reciprocal(jnp.sum(p, axis=-1, keepdims=True), approx=True)
                ctx_heads[h].append(jnp.dot(p, vh, preferred_element_type=F32))  # (S, HD)

        # output projection accumulated per head (sublane stack over batches; no lane concat)
        wo = wo_ref[l]                                              # (D, D) bf16
        attn = bo_ref[l]                                            # (1, D) broadcasts
        for h in range(NH):
            ctx_h = jnp.concatenate(ctx_heads[h], axis=0)           # (B*S, HD)
            attn = attn + jnp.dot(ctx_h.astype(BF16), wo[h * HD:(h + 1) * HD, :],
                                  preferred_element_type=F32)
        x = _layernorm(x + attn, g1_ref[l], be1_ref[l])

        # FFN
        hmid = _gelu(jnp.dot(x.astype(BF16), w1_ref[l], preferred_element_type=F32)
                     + b1_ref[l])                                   # (B*S, FF)
        ffn = (jnp.dot(hmid.astype(BF16), w2_ref[l], preferred_element_type=F32)
               + b2_ref[l])                                         # (B*S, D)
        x = _layernorm(x + ffn, g2_ref[l], be2_ref[l])

    # ---- CLS rows + position_enc(pos_list) -> LSTM (seq_len=B, batch=1) ----
    cls = jnp.concatenate([x[b * S:b * S + 1, :] for b in range(B)], axis=0)   # (B, D)
    lstm_in = cls + pos_ref[...]                                               # (B, D)

    # input projection hoisted out of the recurrence: one (B,D)x(D,4D) matmul
    xproj = (jnp.dot(lstm_in.astype(BF16), wih_ref[...], preferred_element_type=F32)
             + lb_ref[...])                                                    # (B, 4D)
    whh = whh_ref[...]                                                         # (D, 4D) bf16

    h = jnp.zeros((1, D), F32)
    c = jnp.zeros((1, D), F32)
    outs = []
    for t in range(B):                                  # static unroll, serial recurrence
        gates = xproj[t:t + 1, :] + jnp.dot(h.astype(BF16), whh,
                                            preferred_element_type=F32)        # (1, 4D)
        i_g = jax.nn.sigmoid(gates[:, 0 * D:1 * D])
        f_g = jax.nn.sigmoid(gates[:, 1 * D:2 * D])
        g_g = jnp.tanh(gates[:, 2 * D:3 * D])
        o_g = jax.nn.sigmoid(gates[:, 3 * D:4 * D])
        c = f_g * c + i_g * g_g
        h = o_g * jnp.tanh(c)
        outs.append(h)
    lstm_out = jnp.concatenate(outs, axis=0)                                   # (B, D)

    # ---- utility head, lane-dense 128-wide output (sliced to 100 outside) ----
    out_ref[...] = (jnp.dot(lstm_out.astype(BF16), uw_ref[...],
                            preferred_element_type=F32) + ub_ref[...])


# ------------------------------ parameter init --------------------------------
def init_params(key):
    keys = iter(jax.random.split(key, 64))

    def nrm(shape, scale=0.02):
        return scale * jax.random.normal(next(keys), shape, dtype=F32)

    p = {
        'word_emb': nrm((VOCAB, D)),
        'bert_pos_emb': nrm((MAX_POS_BERT, D)),
        'type_emb': nrm((TYPE_VOCAB, D)),
        'emb_ln_g': jnp.ones((1, D), F32),
        'emb_ln_b': jnp.zeros((1, D), F32),
        'position_enc': position_encoding_init(MAX_POS, D),
    }

    scale = 1.0 / float(np.sqrt(HD))
    wqkv, bqkv, wo, bo, g1, be1 = [], [], [], [], [], []
    w1, b1, w2, b2, g2, be2 = [], [], [], [], [], []
    for _ in range(NLAYERS):
        wq, wk, wv = nrm((D, D)), nrm((D, D)), nrm((D, D))
        bq = jnp.zeros((1, D), F32)
        bk = jnp.zeros((1, D), F32)
        bv = jnp.zeros((1, D), F32)
        # fold 1/sqrt(HD) into the Q projection (weight AND bias)
        wqkv.append(jnp.concatenate([wq * scale, wk, wv], axis=1))   # (D, 3D)
        bqkv.append(jnp.concatenate([bq * scale, bk, bv], axis=1))   # (1, 3D)
        wo.append(nrm((D, D)));   bo.append(jnp.zeros((1, D), F32))
        g1.append(jnp.ones((1, D), F32)); be1.append(jnp.zeros((1, D), F32))
        w1.append(nrm((D, FF)));  b1.append(jnp.zeros((1, FF), F32))
        w2.append(nrm((FF, D)));  b2.append(jnp.zeros((1, D), F32))
        g2.append(jnp.ones((1, D), F32)); be2.append(jnp.zeros((1, D), F32))

    p['wqkv'] = jnp.stack(wqkv).astype(BF16)   # (L, D, 3D)
    p['bqkv'] = jnp.stack(bqkv)                # (L, 1, 3D)
    p['wo'] = jnp.stack(wo).astype(BF16)       # (L, D, D)
    p['bo'] = jnp.stack(bo)
    p['g1'] = jnp.stack(g1); p['be1'] = jnp.stack(be1)
    p['w1'] = jnp.stack(w1).astype(BF16)       # (L, D, FF)
    p['b1'] = jnp.stack(b1)
    p['w2'] = jnp.stack(w2).astype(BF16)       # (L, FF, D)
    p['b2'] = jnp.stack(b2)
    p['g2'] = jnp.stack(g2); p['be2'] = jnp.stack(be2)

    # LSTM params (PyTorch layout: weight_ih (4H, in), weight_hh (4H, H), biases (4H,))
    w_ih = nrm((4 * D, D), 0.05)
    w_hh = nrm((4 * D, D), 0.05)
    b_ih = nrm((4 * D,), 0.05)
    b_hh = nrm((4 * D,), 0.05)
    p['lstm_wih_T'] = w_ih.T.astype(BF16)                 # (D, 4D)
    p['lstm_whh_T'] = w_hh.T.astype(BF16)                 # (D, 4D)
    p['lstm_b'] = (b_ih + b_hh).reshape(1, 4 * D)         # (1, 4D) f32

    # utility head: Linear(D, 100), padded to 128 lanes (lane-dense stores)
    w_util = nrm((UTIL_OUT, D))
    uw_pad = jnp.zeros((D, PAD_OUT), F32).at[:, :UTIL_OUT].set(w_util.T)
    p['util_w_pad'] = uw_pad.astype(BF16)                 # (D, 128)
    p['util_b_pad'] = jnp.zeros((1, PAD_OUT), F32)        # (1, 128)
    # TODO(synk): utility_pair (Linear(200,10)->Linear(10,1)->Sigmoid) is unused in forward; not implemented.
    return p


# -------------------------------- forward -------------------------------------
def bert_qpp_forward(params, pos_list, input_ids, attention_mask, token_type_ids):
    # BERT embedding gathers are glue (plain JAX); everything else runs in one Pallas kernel.
    positions = jnp.arange(S)
    emb = (params['word_emb'][input_ids]
           + params['bert_pos_emb'][positions][None, :, :]
           + params['type_emb'][token_type_ids]).reshape(B * S, D)              # (B*S, D)

    mask_add = (1.0 - attention_mask.astype(F32)) * (-1e9)                      # (B, S)
    pos_rows = params['position_enc'][jnp.asarray(pos_list, jnp.int32)]         # (B, D)

    out_pad = pl.pallas_call(
        fused_forward_kernel,
        out_shape=jax.ShapeDtypeStruct((B, PAD_OUT), F32),
    )(emb, mask_add, params['emb_ln_g'], params['emb_ln_b'],
      params['wqkv'], params['bqkv'], params['wo'], params['bo'],
      params['g1'], params['be1'], params['w1'], params['b1'],
      params['w2'], params['b2'], params['g2'], params['be2'],
      pos_rows, params['lstm_wih_T'], params['lstm_whh_T'], params['lstm_b'],
      params['util_w_pad'], params['util_b_pad'])

    return out_pad[:, :UTIL_OUT]                                                # (B, 100)


# ---------------------------------- main ---------------------------------------
if __name__ == "__main__":
    key = jax.random.PRNGKey(0)
    k_params, k_ids = jax.random.split(key)

    params = init_params(k_params)

    input_ids = jax.random.randint(k_ids, (B, S), 1, VOCAB, dtype=jnp.int32)
    lengths = jnp.array([8, 6, 8, 5], dtype=jnp.int32)
    attention_mask = (jnp.arange(S)[None, :] < lengths[:, None]).astype(jnp.int32)
    token_type_ids = jnp.zeros((B, S), dtype=jnp.int32)
    pos_list = jnp.arange(1, B + 1, dtype=jnp.int32)

    fwd = jax.jit(bert_qpp_forward)
    out = fwd(params, pos_list, input_ids, attention_mask, token_type_ids)
    out = jax.block_until_ready(out)

    assert out.shape == (B, UTIL_OUT), out.shape
    assert jnp.all(jnp.isfinite(out))
    print("KERNEL_OK")
</pallas_src>

<mosaic_0001>
module attributes {stable_mosaic.version = 11 : i64} {
  func.func @fused_forward_kernel(%arg0: memref<32x128xf32, #tpu.memory_space<vmem>>, %arg1: memref<4x8xf32, #tpu.memory_space<vmem>>, %arg2: memref<1x128xf32, #tpu.memory_space<vmem>>, %arg3: memref<1x128xf32, #tpu.memory_space<vmem>>, %arg4: memref<2x128x384xbf16, #tpu.memory_space<vmem>>, %arg5: memref<2x1x384xf32, #tpu.memory_space<vmem>>, %arg6: memref<2x128x128xbf16, #tpu.memory_space<vmem>>, %arg7: memref<2x1x128xf32, #tpu.memory_space<vmem>>, %arg8: memref<2x1x128xf32, #tpu.memory_space<vmem>>, %arg9: memref<2x1x128xf32, #tpu.memory_space<vmem>>, %arg10: memref<2x128x256xbf16, #tpu.memory_space<vmem>>, %arg11: memref<2x1x256xf32, #tpu.memory_space<vmem>>, %arg12: memref<2x256x128xbf16, #tpu.memory_space<vmem>>, %arg13: memref<2x1x128xf32, #tpu.memory_space<vmem>>, %arg14: memref<2x1x128xf32, #tpu.memory_space<vmem>>, %arg15: memref<2x1x128xf32, #tpu.memory_space<vmem>>, %arg16: memref<4x128xf32, #tpu.memory_space<vmem>>, %arg17: memref<128x512xbf16, #tpu.memory_space<vmem>>, %arg18: memref<128x512xbf16, #tpu.memory_space<vmem>>, %arg19: memref<1x512xf32, #tpu.memory_space<vmem>>, %arg20: memref<128x128xbf16, #tpu.memory_space<vmem>>, %arg21: memref<1x128xf32, #tpu.memory_space<vmem>>, %arg22: memref<4x128xf32, #tpu.memory_space<vmem>>) attributes {dimension_semantics = [], scalar_prefetch = 0 : i64, scratch_operands = 0 : i64, tpu.core_type = #tpu.core_type<tc>} {
    %c0 = arith.constant 0 : index
    %c0_0 = arith.constant 0 : index
    %0 = vector.load %arg0[%c0, %c0_0] : memref<32x128xf32, #tpu.memory_space<vmem>>, vector<32x128xf32>
    %c0_1 = arith.constant 0 : index
    %c0_2 = arith.constant 0 : index
    %1 = vector.load %arg2[%c0_1, %c0_2] : memref<1x128xf32, #tpu.memory_space<vmem>>, vector<1x128xf32>
    %c0_3 = arith.constant 0 : index
    %c0_4 = arith.constant 0 : index
    %2 = vector.load %arg3[%c0_3, %c0_4] : memref<1x128xf32, #tpu.memory_space<vmem>>, vector<1x128xf32>
    %cst = arith.constant dense<0.000000e+00> : vector<32xf32>
    %3 = vector.multi_reduction <add>, %0, %cst [1] : vector<32x128xf32> to vector<32xf32>
    %4 = vector.shape_cast %3 : vector<32xf32> to vector<32x1xf32>
    %cst_5 = arith.constant 1.280000e+02 : f32
    %5 = vector.broadcast %cst_5 : f32 to vector<32x1xf32>
    %6 = arith.divf %4, %5 : vector<32x1xf32>
    %7 = vector.broadcast %6 : vector<32x1xf32> to vector<32x128xf32>
    %8 = arith.subf %0, %7 : vector<32x128xf32>
    %9 = arith.mulf %8, %8 : vector<32x128xf32>
    %cst_6 = arith.constant dense<0.000000e+00> : vector<32xf32>
    %10 = vector.multi_reduction <add>, %9, %cst_6 [1] : vector<32x128xf32> to vector<32xf32>
    %11 = vector.shape_cast %10 : vector<32xf32> to vector<32x1xf32>
    %cst_7 = arith.constant 1.280000e+02 : f32
    %12 = vector.broadcast %cst_7 : f32 to vector<32x1xf32>
    %13 = arith.divf %11, %12 : vector<32x1xf32>
    %14 = vector.broadcast %6 : vector<32x1xf32> to vector<32x128xf32>
    %15 = arith.subf %0, %14 : vector<32x128xf32>
    %cst_8 = arith.constant 9.99999996E-13 : f32
    %16 = vector.broadcast %cst_8 : f32 to vector<32x1xf32>
    %17 = arith.addf %13, %16 : vector<32x1xf32>
    %18 = math.rsqrt %17 : vector<32x1xf32>
    %19 = vector.broadcast %18 : vector<32x1xf32> to vector<32x128xf32>
    %20 = arith.mulf %15, %19 : vector<32x128xf32>
    %21 = vector.broadcast %1 : vector<1x128xf32> to vector<32x128xf32>
    %22 = arith.mulf %20, %21 : vector<32x128xf32>
    %23 = vector.broadcast %2 : vector<1x128xf32> to vector<32x128xf32>
    %24 = arith.addf %22, %23 : vector<32x128xf32>
    %c0_9 = arith.constant 0 : index
    %c0_10 = arith.constant 0 : index
    %25 = vector.load %arg1[%c0_9, %c0_10] : memref<4x8xf32, #tpu.memory_space<vmem>>, vector<4x8xf32>
    %26 = arith.truncf %24 : vector<32x128xf32> to vector<32x128xbf16>
    %c0_11 = arith.constant 0 : index
    %c0_12 = arith.constant 0 : index
    %c0_13 = arith.constant 0 : index
    %27 = vector.load %arg4[%c0_11, %c0_12, %c0_13] : memref<2x128x384xbf16, #tpu.memory_space<vmem>>, vector<1x128x384xbf16>
    %28 = vector.shape_cast %27 : vector<1x128x384xbf16> to vector<128x384xbf16>
    %cst_14 = arith.constant dense<0.000000e+00> : vector<32x384xf32>
    %29 = tpu.matmul %26, %28, %cst_14 {dimension_numbers = #tpu.dot_dimension_numbers<[1], [0], [0], [1], [0, 0, 1, 1], [], []>} : vector<32x128xbf16>, vector<128x384xbf16>, vector<32x384xf32> -> vector<32x384xf32>
    %c0_15 = arith.constant 0 : index
    %c0_16 = arith.constant 0 : index
    %c0_17 = arith.constant 0 : index
    %30 = vector.load %arg5[%c0_15, %c0_16, %c0_17] : memref<2x1x384xf32, #tpu.memory_space<vmem>>, vector<1x1x384xf32>
    %31 = vector.shape_cast %30 : vector<1x1x384xf32> to vector<1x384xf32>
    %32 = vector.broadcast %31 : vector<1x384xf32> to vector<32x384xf32>
    %33 = arith.addf %29, %32 : vector<32x384xf32>
    %34 = vector.extract_strided_slice %25 {offsets = [0, 0], sizes = [1, 8], strides = [1, 1]} : vector<4x8xf32> to vector<1x8xf32>
    %35 = vector.extract_strided_slice %33 {offsets = [0, 0], sizes = [8, 64], strides = [1, 1]} : vector<32x384xf32> to vector<8x64xf32>
    %36 = vector.extract_strided_slice %33 {offsets = [0, 128], sizes = [8, 64], strides = [1, 1]} : vector<32x384xf32> to vector<8x64xf32>
    %37 = vector.extract_strided_slice %33 {offsets = [0, 256], sizes = [8, 64], strides = [1, 1]} : vector<32x384xf32> to vector<8x64xf32>
    %cst_18 = arith.constant dense<0.000000e+00> : vector<8x8xf32>
    %38 = tpu.matmul %35, %36, %cst_18 {dimension_numbers = #tpu.dot_dimension_numbers<[1], [1], [0], [0], [0, 0, 1, 0], [], []>} : vector<8x64xf32>, vector<8x64xf32>, vector<8x8xf32> -> vector<8x8xf32>
    %39 = vector.broadcast %34 : vector<1x8xf32> to vector<8x8xf32>
    %40 = arith.addf %38, %39 : vector<8x8xf32>
    %cst_19 = arith.constant dense<0xFF800000> : vector<8xf32>
    %41 = vector.multi_reduction <maximumf>, %40, %cst_19 [1] : vector<8x8xf32> to vector<8xf32>
    %42 = vector.shape_cast %41 : vector<8xf32> to vector<8x1xf32>
    %43 = vector.broadcast %42 : vector<8x1xf32> to vector<8x8xf32>
    %44 = arith.subf %40, %43 : vector<8x8xf32>
    %45 = math.exp %44 : vector<8x8xf32>
    %cst_20 = arith.constant dense<0.000000e+00> : vector<8xf32>
    %46 = vector.multi_reduction <add>, %45, %cst_20 [1] : vector<8x8xf32> to vector<8xf32>
    %47 = vector.shape_cast %46 : vector<8xf32> to vector<8x1xf32>
    %48 = tpu.reciprocal %47 {approx = true} : vector<8x1xf32> -> vector<8x1xf32>
    %49 = vector.broadcast %48 : vector<8x1xf32> to vector<8x8xf32>
    %50 = arith.mulf %45, %49 : vector<8x8xf32>
    %cst_21 = arith.constant dense<0.000000e+00> : vector<8x64xf32>
    %51 = tpu.matmul %50, %37, %cst_21 {dimension_numbers = #tpu.dot_dimension_numbers<[1], [0], [0], [1], [0, 0, 1, 1], [], []>} : vector<8x8xf32>, vector<8x64xf32>, vector<8x64xf32> -> vector<8x64xf32>
    %52 = vector.extract_strided_slice %33 {offsets = [0, 64], sizes = [8, 64], strides = [1, 1]} : vector<32x384xf32> to vector<8x64xf32>
    %53 = vector.extract_strided_slice %33 {offsets = [0, 192], sizes = [8, 64], strides = [1, 1]} : vector<32x384xf32> to vector<8x64xf32>
    %54 = vector.extract_strided_slice %33 {offsets = [0, 320], sizes = [8, 64], strides = [1, 1]} : vector<32x384xf32> to vector<8x64xf32>
    %cst_22 = arith.constant dense<0.000000e+00> : vector<8x8xf32>
    %55 = tpu.matmul %52, %53, %cst_22 {dimension_numbers = #tpu.dot_dimension_numbers<[1], [1], [0], [0], [0, 0, 1, 0], [], []>} : vector<8x64xf32>, vector<8x64xf32>, vector<8x8xf32> -> vector<8x8xf32>
    %56 = vector.broadcast %34 : vector<1x8xf32> to vector<8x8xf32>
    %57 = arith.addf %55, %56 : vector<8x8xf32>
    %cst_23 = arith.constant dense<0xFF800000> : vector<8xf32>
    %58 = vector.multi_reduction <maximumf>, %57, %cst_23 [1] : vector<8x8xf32> to vector<8xf32>
    %59 = vector.shape_cast %58 : vector<8xf32> to vector<8x1xf32>
    %60 = vector.broadcast %59 : vector<8x1xf32> to vector<8x8xf32>
    %61 = arith.subf %57, %60 : vector<8x8xf32>
    %62 = math.exp %61 : vector<8x8xf32>
    %cst_24 = arith.constant dense<0.000000e+00> : vector<8xf32>
    %63 = vector.multi_reduction <add>, %62, %cst_24 [1] : vector<8x8xf32> to vector<8xf32>
    %64 = vector.shape_cast %63 : vector<8xf32> to vector<8x1xf32>
    %65 = tpu.reciprocal %64 {approx = true} : vector<8x1xf32> -> vector<8x1xf32>
    %66 = vector.broadcast %65 : vector<8x1xf32> to vector<8x8xf32>
    %67 = arith.mulf %62, %66 : vector<8x8xf32>
    %cst_25 = arith.constant dense<0.000000e+00> : vector<8x64xf32>
    %68 = tpu.matmul %67, %54, %cst_25 {dimension_numbers = #tpu.dot_dimension_numbers<[1], [0], [0], [1], [0, 0, 1, 1], [], []>} : vector<8x8xf32>, vector<8x64xf32>, vector<8x64xf32> -> vector<8x64xf32>
    %69 = vector.extract_strided_slice %25 {offsets = [1, 0], sizes = [1, 8], strides = [1, 1]} : vector<4x8xf32> to vector<1x8xf32>
    %70 = vector.extract_strided_slice %33 {offsets = [8, 0], sizes = [8, 64], strides = [1, 1]} : vector<32x384xf32> to vector<8x64xf32>
    %71 = vector.extract_strided_slice %33 {offsets = [8, 128], sizes = [8, 64], strides = [1, 1]} : vector<32x384xf32> to vector<8x64xf32>
    %72 = vector.extract_strided_slice %33 {offsets = [8, 256], sizes = [8, 64], strides = [1, 1]} : vector<32x384xf32> to vector<8x64xf32>
    %cst_26 = arith.constant dense<0.000000e+00> : vector<8x8xf32>
    %73 = tpu.matmul %70, %71, %cst_26 {dimension_numbers = #tpu.dot_dimension_numbers<[1], [1], [0], [0], [0, 0, 1, 0], [], []>} : vector<8x64xf32>, vector<8x64xf32>, vector<8x8xf32> -> vector<8x8xf32>
    %74 = vector.broadcast %69 : vector<1x8xf32> to vector<8x8xf32>
    %75 = arith.addf %73, %74 : vector<8x8xf32>
    %cst_27 = arith.constant dense<0xFF800000> : vector<8xf32>
    %76 = vector.multi_reduction <maximumf>, %75, %cst_27 [1] : vector<8x8xf32> to vector<8xf32>
    %77 = vector.shape_cast %76 : vector<8xf32> to vector<8x1xf32>
    %78 = vector.broadcast %77 : vector<8x1xf32> to vector<8x8xf32>
    %79 = arith.subf %75, %78 : vector<8x8xf32>
    %80 = math.exp %79 : vector<8x8xf32>
    %cst_28 = arith.constant dense<0.000000e+00> : vector<8xf32>
    %81 = vector.multi_reduction <add>, %80, %cst_28 [1] : vector<8x8xf32> to vector<8xf32>
    %82 = vector.shape_cast %81 : vector<8xf32> to vector<8x1xf32>
    %83 = tpu.reciprocal %82 {approx = true} : vector<8x1xf32> -> vector<8x1xf32>
    %84 = vector.broadcast %83 : vector<8x1xf32> to vector<8x8xf32>
    %85 = arith.mulf %80, %84 : vector<8x8xf32>
    %cst_29 = arith.constant dense<0.000000e+00> : vector<8x64xf32>
    %86 = tpu.matmul %85, %72, %cst_29 {dimension_numbers = #tpu.dot_dimension_numbers<[1], [0], [0], [1], [0, 0, 1, 1], [], []>} : vector<8x8xf32>, vector<8x64xf32>, vector<8x64xf32> -> vector<8x64xf32>
    %87 = vector.extract_strided_slice %33 {offsets = [8, 64], sizes = [8, 64], strides = [1, 1]} : vector<32x384xf32> to vector<8x64xf32>
    %88 = vector.extract_strided_slice %33 {offsets = [8, 192], sizes = [8, 64], strides = [1, 1]} : vector<32x384xf32> to vector<8x64xf32>
    %89 = vector.extract_strided_slice %33 {offsets = [8, 320], sizes = [8, 64], strides = [1, 1]} : vector<32x384xf32> to vector<8x64xf32>
    %cst_30 = arith.constant dense<0.000000e+00> : vector<8x8xf32>
    %90 = tpu.matmul %87, %88, %cst_30 {dimension_numbers = #tpu.dot_dimension_numbers<[1], [1], [0], [0], [0, 0, 1, 0], [], []>} : vector<8x64xf32>, vector<8x64xf32>, vector<8x8xf32> -> vector<8x8xf32>
    %91 = vector.broadcast %69 : vector<1x8xf32> to vector<8x8xf32>
    %92 = arith.addf %90, %91 : vector<8x8xf32>
    %cst_31 = arith.constant dense<0xFF800000> : vector<8xf32>
    %93 = vector.multi_reduction <maximumf>, %92, %cst_31 [1] : vector<8x8xf32> to vector<8xf32>
    %94 = vector.shape_cast %93 : vector<8xf32> to vector<8x1xf32>
    %95 = vector.broadcast %94 : vector<8x1xf32> to vector<8x8xf32>
    %96 = arith.subf %92, %95 : vector<8x8xf32>
    %97 = math.exp %96 : vector<8x8xf32>
    %cst_32 = arith.constant dense<0.000000e+00> : vector<8xf32>
    %98 = vector.multi_reduction <add>, %97, %cst_32 [1] : vector<8x8xf32> to vector<8xf32>
    %99 = vector.shape_cast %98 : vector<8xf32> to vector<8x1xf32>
    %100 = tpu.reciprocal %99 {approx = true} : vector<8x1xf32> -> vector<8x1xf32>
    %101 = vector.broadcast %100 : vector<8x1xf32> to vector<8x8xf32>
    %102 = arith.mulf %97, %101 : vector<8x8xf32>
    %cst_33 = arith.constant dense<0.000000e+00> : vector<8x64xf32>
    %103 = tpu.matmul %102, %89, %cst_33 {dimension_numbers = #tpu.dot_dimension_numbers<[1], [0], [0], [1], [0, 0, 1, 1], [], []>} : vector<8x8xf32>, vector<8x64xf32>, vector<8x64xf32> -> vector<8x64xf32>
    %104 = vector.extract_strided_slice %25 {offsets = [2, 0], sizes = [1, 8], strides = [1, 1]} : vector<4x8xf32> to vector<1x8xf32>
    %105 = vector.extract_strided_slice %33 {offsets = [16, 0], sizes = [8, 64], strides = [1, 1]} : vector<32x384xf32> to vector<8x64xf32>
    %106 = vector.extract_strided_slice %33 {offsets = [16, 128], sizes = [8, 64], strides = [1, 1]} : vector<32x384xf32> to vector<8x64xf32>
    %107 = vector.extract_strided_slice %33 {offsets = [16, 256], sizes = [8, 64], strides = [1, 1]} : vector<32x384xf32> to vector<8x64xf32>
    %cst_34 = arith.constant dense<0.000000e+00> : vector<8x8xf32>
    %108 = tpu.matmul %105, %106, %cst_34 {dimension_numbers = #tpu.dot_dimension_numbers<[1], [1], [0], [0], [0, 0, 1, 0], [], []>} : vector<8x64xf32>, vector<8x64xf32>, vector<8x8xf32> -> vector<8x8xf32>
    %109 = vector.broadcast %104 : vector<1x8xf32> to vector<8x8xf32>
    %110 = arith.addf %108, %109 : vector<8x8xf32>
    %cst_35 = arith.constant dense<0xFF800000> : vector<8xf32>
    %111 = vector.multi_reduction <maximumf>, %110, %cst_35 [1] : vector<8x8xf32> to vector<8xf32>
    %112 = vector.shape_cast %111 : vector<8xf32> to vector<8x1xf32>
    %113 = vector.broadcast %112 : vector<8x1xf32> to vector<8x8xf32>
    %114 = arith.subf %110, %113 : vector<8x8xf32>
    %115 = math.exp %114 : vector<8x8xf32>
    %cst_36 = arith.constant dense<0.000000e+00> : vector<8xf32>
    %116 = vector.multi_reduction <add>, %115, %cst_36 [1] : vector<8x8xf32> to vector<8xf32>
    %117 = vector.shape_cast %116 : vector<8xf32> to vector<8x1xf32>
    %118 = tpu.reciprocal %117 {approx = true} : vector<8x1xf32> -> vector<8x1xf32>
    %119 = vector.broadcast %118 : vector<8x1xf32> to vector<8x8xf32>
    %120 = arith.mulf %115, %119 : vector<8x8xf32>
    %cst_37 = arith.constant dense<0.000000e+00> : vector<8x64xf32>
    %121 = tpu.matmul %120, %107, %cst_37 {dimension_numbers = #tpu.dot_dimension_numbers<[1], [0], [0], [1], [0, 0, 1, 1], [], []>} : vector<8x8xf32>, vector<8x64xf32>, vector<8x64xf32> -> vector<8x64xf32>
    %122 = vector.extract_strided_slice %33 {offsets = [16, 64], sizes = [8, 64], strides = [1, 1]} : vector<32x384xf32> to vector<8x64xf32>
    %123 = vector.extract_strided_slice %33 {offsets = [16, 192], sizes = [8, 64], strides = [1, 1]} : vector<32x384xf32> to vector<8x64xf32>
    %124 = vector.extract_strided_slice %33 {offsets = [16, 320], sizes = [8, 64], strides = [1, 1]} : vector<32x384xf32> to vector<8x64xf32>
    %cst_38 = arith.constant dense<0.000000e+00> : vector<8x8xf32>
    %125 = tpu.matmul %122, %123, %cst_38 {dimension_numbers = #tpu.dot_dimension_numbers<[1], [1], [0], [0], [0, 0, 1, 0], [], []>} : vector<8x64xf32>, vector<8x64xf32>, vector<8x8xf32> -> vector<8x8xf32>
    %126 = vector.broadcast %104 : vector<1x8xf32> to vector<8x8xf32>
    %127 = arith.addf %125, %126 : vector<8x8xf32>
    %cst_39 = arith.constant dense<0xFF800000> : vector<8xf32>
    %128 = vector.multi_reduction <maximumf>, %127, %cst_39 [1] : vector<8x8xf32> to vector<8xf32>
    %129 = vector.shape_cast %128 : vector<8xf32> to vector<8x1xf32>
    %130 = vector.broadcast %129 : vector<8x1xf32> to vector<8x8xf32>
    %131 = arith.subf %127, %130 : vector<8x8xf32>
    %132 = math.exp %131 : vector<8x8xf32>
    %cst_40 = arith.constant dense<0.000000e+00> : vector<8xf32>
    %133 = vector.multi_reduction <add>, %132, %cst_40 [1] : vector<8x8xf32> to vector<8xf32>
    %134 = vector.shape_cast %133 : vector<8xf32> to vector<8x1xf32>
    %135 = tpu.reciprocal %134 {approx = true} : vector<8x1xf32> -> vector<8x1xf32>
    %136 = vector.broadcast %135 : vector<8x1xf32> to vector<8x8xf32>
    %137 = arith.mulf %132, %136 : vector<8x8xf32>
    %cst_41 = arith.constant dense<0.000000e+00> : vector<8x64xf32>
    %138 = tpu.matmul %137, %124, %cst_41 {dimension_numbers = #tpu.dot_dimension_numbers<[1], [0], [0], [1], [0, 0, 1, 1], [], []>} : vector<8x8xf32>, vector<8x64xf32>, vector<8x64xf32> -> vector<8x64xf32>
    %139 = vector.extract_strided_slice %25 {offsets = [3, 0], sizes = [1, 8], strides = [1, 1]} : vector<4x8xf32> to vector<1x8xf32>
    %140 = vector.extract_strided_slice %33 {offsets = [24, 0], sizes = [8, 64], strides = [1, 1]} : vector<32x384xf32> to vector<8x64xf32>
    %141 = vector.extract_strided_slice %33 {offsets = [24, 128], sizes = [8, 64], strides = [1, 1]} : vector<32x384xf32> to vector<8x64xf32>
    %142 = vector.extract_strided_slice %33 {offsets = [24, 256], sizes = [8, 64], strides = [1, 1]} : vector<32x384xf32> to vector<8x64xf32>
    %cst_42 = arith.constant dense<0.000000e+00> : vector<8x8xf32>
    %143 = tpu.matmul %140, %141, %cst_42 {dimension_numbers = #tpu.dot_dimension_numbers<[1], [1], [0], [0], [0, 0, 1, 0], [], []>} : vector<8x64xf32>, vector<8x64xf32>, vector<8x8xf32> -> vector<8x8xf32>
    %144 = vector.broadcast %139 : vector<1x8xf32> to vector<8x8xf32>
    %145 = arith.addf %143, %144 : vector<8x8xf32>
    %cst_43 = arith.constant dense<0xFF800000> : vector<8xf32>
    %146 = vector.multi_reduction <maximumf>, %145, %cst_43 [1] : vector<8x8xf32> to vector<8xf32>
    %147 = vector.shape_cast %146 : vector<8xf32> to vector<8x1xf32>
    %148 = vector.broadcast %147 : vector<8x1xf32> to vector<8x8xf32>
    %149 = arith.subf %145, %148 : vector<8x8xf32>
    %150 = math.exp %149 : vector<8x8xf32>
    %cst_44 = arith.constant dense<0.000000e+00> : vector<8xf32>
    %151 = vector.multi_reduction <add>, %150, %cst_44 [1] : vector<8x8xf32> to vector<8xf32>
    %152 = vector.shape_cast %151 : vector<8xf32> to vector<8x1xf32>
    %153 = tpu.reciprocal %152 {approx = true} : vector<8x1xf32> -> vector<8x1xf32>
    %154 = vector.broadcast %153 : vector<8x1xf32> to vector<8x8xf32>
    %155 = arith.mulf %150, %154 : vector<8x8xf32>
    %cst_45 = arith.constant dense<0.000000e+00> : vector<8x64xf32>
    %156 = tpu.matmul %155, %142, %cst_45 {dimension_numbers = #tpu.dot_dimension_numbers<[1], [0], [0], [1], [0, 0, 1, 1], [], []>} : vector<8x8xf32>, vector<8x64xf32>, vector<8x64xf32> -> vector<8x64xf32>
    %157 = vector.extract_strided_slice %33 {offsets = [24, 64], sizes = [8, 64], strides = [1, 1]} : vector<32x384xf32> to vector<8x64xf32>
    %158 = vector.extract_strided_slice %33 {offsets = [24, 192], sizes = [8, 64], strides = [1, 1]} : vector<32x384xf32> to vector<8x64xf32>
    %159 = vector.extract_strided_slice %33 {offsets = [24, 320], sizes = [8, 64], strides = [1, 1]} : vector<32x384xf32> to vector<8x64xf32>
    %cst_46 = arith.constant dense<0.000000e+00> : vector<8x8xf32>
    %160 = tpu.matmul %157, %158, %cst_46 {dimension_numbers = #tpu.dot_dimension_numbers<[1], [1], [0], [0], [0, 0, 1, 0], [], []>} : vector<8x64xf32>, vector<8x64xf32>, vector<8x8xf32> -> vector<8x8xf32>
    %161 = vector.broadcast %139 : vector<1x8xf32> to vector<8x8xf32>
    %162 = arith.addf %160, %161 : vector<8x8xf32>
    %cst_47 = arith.constant dense<0xFF800000> : vector<8xf32>
    %163 = vector.multi_reduction <maximumf>, %162, %cst_47 [1] : vector<8x8xf32> to vector<8xf32>
    %164 = vector.shape_cast %163 : vector<8xf32> to vector<8x1xf32>
    %165 = vector.broadcast %164 : vector<8x1xf32> to vector<8x8xf32>
    %166 = arith.subf %162, %165 : vector<8x8xf32>
    %167 = math.exp %166 : vector<8x8xf32>
    %cst_48 = arith.constant dense<0.000000e+00> : vector<8xf32>
    %168 = vector.multi_reduction <add>, %167, %cst_48 [1] : vector<8x8xf32> to vector<8xf32>
    %169 = vector.shape_cast %168 : vector<8xf32> to vector<8x1xf32>
    %170 = tpu.reciprocal %169 {approx = true} : vector<8x1xf32> -> vector<8x1xf32>
    %171 = vector.broadcast %170 : vector<8x1xf32> to vector<8x8xf32>
    %172 = arith.mulf %167, %171 : vector<8x8xf32>
    %cst_49 = arith.constant dense<0.000000e+00> : vector<8x64xf32>
    %173 = tpu.matmul %172, %159, %cst_49 {dimension_numbers = #tpu.dot_dimension_numbers<[1], [0], [0], [1], [0, 0, 1, 1], [], []>} : vector<8x8xf32>, vector<8x64xf32>, vector<8x64xf32> -> vector<8x64xf32>
    %c0_50 = arith.constant 0 : index
    %c0_51 = arith.constant 0 : index
    %c0_52 = arith.constant 0 : index
    %174 = vector.load %arg6[%c0_50, %c0_51, %c0_52] : memref<2x128x128xbf16, #tpu.memory_space<vmem>>, vector<1x128x128xbf16>
    %175 = vector.shape_cast %174 : vector<1x128x128xbf16> to vector<128x128xbf16>
    %c0_53 = arith.constant 0 : index
    %c0_54 = arith.constant 0 : index
    %c0_55 = arith.constant 0 : index
    %176 = vector.load %arg7[%c0_53, %c0_54, %c0_55] : memref<2x1x128xf32, #tpu.memory_space<vmem>>, vector<1x1x128xf32>
    %177 = vector.shape_cast %176 : vector<1x1x128xf32> to vector<1x128xf32>
    %178 = tpu.concatenate %51, %86, %121, %156 in 0 : vector<8x64xf32>, vector<8x64xf32>, vector<8x64xf32>, vector<8x64xf32> -> vector<32x64xf32>
    %179 = arith.truncf %178 : vector<32x64xf32> to vector<32x64xbf16>
    %180 = vector.extract_strided_slice %175 {offsets = [0, 0], sizes = [64, 128], strides = [1, 1]} : vector<128x128xbf16> to vector<64x128xbf16>
    %cst_56 = arith.constant dense<0.000000e+00> : vector<32x128xf32>
    %181 = tpu.matmul %179, %180, %cst_56 {dimension_numbers = #tpu.dot_dimension_numbers<[1], [0], [0], [1], [0, 0, 1, 1], [], []>} : vector<32x64xbf16>, vector<64x128xbf16>, vector<32x128xf32> -> vector<32x128xf32>
    %182 = vector.broadcast %177 : vector<1x128xf32> to vector<32x128xf32>
    %183 = arith.addf %182, %181 : vector<32x128xf32>
    %184 = tpu.concatenate %68, %103, %138, %173 in 0 : vector<8x64xf32>, vector<8x64xf32>, vector<8x64xf32>, vector<8x64xf32> -> vector<32x64xf32>
    %185 = arith.truncf %184 : vector<32x64xf32> to vector<32x64xbf16>
    %186 = vector.extract_strided_slice %175 {offsets = [64, 0], sizes = [64, 128], strides = [1, 1]} : vector<128x128xbf16> to vector<64x128xbf16>
    %cst_57 = arith.constant dense<0.000000e+00> : vector<32x128xf32>
    %187 = tpu.matmul %185, %186, %cst_57 {dimension_numbers = #tpu.dot_dimension_numbers<[1], [0], [0], [1], [0, 0, 1, 1], [], []>} : vector<32x64xbf16>, vector<64x128xbf16>, vector<32x128xf32> -> vector<32x128xf32>
    %188 = arith.addf %183, %187 : vector<32x128xf32>
    %189 = arith.addf %24, %188 : vector<32x128xf32>
    %c0_58 = arith.constant 0 : index
    %c0_59 = arith.constant 0 : index
    %c0_60 = arith.constant 0 : index
    %190 = vector.load %arg8[%c0_58, %c0_59, %c0_60] : memref<2x1x128xf32, #tpu.memory_space<vmem>>, vector<1x1x128xf32>
    %191 = vector.shape_cast %190 : vector<1x1x128xf32> to vector<1x128xf32>
    %c0_61 = arith.constant 0 : index
    %c0_62 = arith.constant 0 : index
    %c0_63 = arith.constant 0 : index
    %192 = vector.load %arg9[%c0_61, %c0_62, %c0_63] : memref<2x1x128xf32, #tpu.memory_space<vmem>>, vector<1x1x128xf32>
    %193 = vector.shape_cast %192 : vector<1x1x128xf32> to vector<1x128xf32>
    %cst_64 = arith.constant dense<0.000000e+00> : vector<32xf32>
    %194 = vector.multi_reduction <add>, %189, %cst_64 [1] : vector<32x128xf32> to vector<32xf32>
    %195 = vector.shape_cast %194 : vector<32xf32> to vector<32x1xf32>
    %cst_65 = arith.constant 1.280000e+02 : f32
    %196 = vector.broadcast %cst_65 : f32 to vector<32x1xf32>
    %197 = arith.divf %195, %196 : vector<32x1xf32>
    %198 = vector.broadcast %197 : vector<32x1xf32> to vector<32x128xf32>
    %199 = arith.subf %189, %198 : vector<32x128xf32>
    %200 = arith.mulf %199, %199 : vector<32x128xf32>
    %cst_66 = arith.constant dense<0.000000e+00> : vector<32xf32>
    %201 = vector.multi_reduction <add>, %200, %cst_66 [1] : vector<32x128xf32> to vector<32xf32>
    %202 = vector.shape_cast %201 : vector<32xf32> to vector<32x1xf32>
    %cst_67 = arith.constant 1.280000e+02 : f32
    %203 = vector.broadcast %cst_67 : f32 to vector<32x1xf32>
    %204 = arith.divf %202, %203 : vector<32x1xf32>
    %205 = vector.broadcast %197 : vector<32x1xf32> to vector<32x128xf32>
    %206 = arith.subf %189, %205 : vector<32x128xf32>
    %cst_68 = arith.constant 9.99999996E-13 : f32
    %207 = vector.broadcast %cst_68 : f32 to vector<32x1xf32>
    %208 = arith.addf %204, %207 : vector<32x1xf32>
    %209 = math.rsqrt %208 : vector<32x1xf32>
    %210 = vector.broadcast %209 : vector<32x1xf32> to vector<32x128xf32>
    %211 = arith.mulf %206, %210 : vector<32x128xf32>
    %212 = vector.broadcast %191 : vector<1x128xf32> to vector<32x128xf32>
    %213 = arith.mulf %211, %212 : vector<32x128xf32>
    %214 = vector.broadcast %193 : vector<1x128xf32> to vector<32x128xf32>
    %215 = arith.addf %213, %214 : vector<32x128xf32>
    %216 = arith.truncf %215 : vector<32x128xf32> to vector<32x128xbf16>
    %c0_69 = arith.constant 0 : index
    %c0_70 = arith.constant 0 : index
    %c0_71 = arith.constant 0 : index
    %217 = vector.load %arg10[%c0_69, %c0_70, %c0_71] : memref<2x128x256xbf16, #tpu.memory_space<vmem>>, vector<1x128x256xbf16>
    %218 = vector.shape_cast %217 : vector<1x128x256xbf16> to vector<128x256xbf16>
    %cst_72 = arith.constant dense<0.000000e+00> : vector<32x256xf32>
    %219 = tpu.matmul %216, %218, %cst_72 {dimension_numbers = #tpu.dot_dimension_numbers<[1], [0], [0], [1], [0, 0, 1, 1], [], []>} : vector<32x128xbf16>, vector<128x256xbf16>, vector<32x256xf32> -> vector<32x256xf32>
    %c0_73 = arith.constant 0 : index
    %c0_74 = arith.constant 0 : index
    %c0_75 = arith.constant 0 : index
    %220 = vector.load %arg11[%c0_73, %c0_74, %c0_75] : memref<2x1x256xf32, #tpu.memory_space<vmem>>, vector<1x1x256xf32>
    %221 = vector.shape_cast %220 : vector<1x1x256xf32> to vector<1x256xf32>
    %222 = vector.broadcast %221 : vector<1x256xf32> to vector<32x256xf32>
    %223 = arith.addf %219, %222 : vector<32x256xf32>
    %cst_76 = arith.constant 5.000000e-01 : f32
    %224 = vector.broadcast %cst_76 : f32 to vector<32x256xf32>
    %225 = arith.mulf %224, %223 : vector<32x256xf32>
    %cst_77 = arith.constant 4.471500e-02 : f32
    %226 = vector.broadcast %cst_77 : f32 to vector<32x256xf32>
    %227 = arith.mulf %226, %223 : vector<32x256xf32>
    %228 = arith.mulf %227, %223 : vector<32x256xf32>
    %229 = arith.mulf %228, %223 : vector<32x256xf32>
    %230 = arith.addf %223, %229 : vector<32x256xf32>
    %cst_78 = arith.constant 0.797884583 : f32
    %231 = vector.broadcast %cst_78 : f32 to vector<32x256xf32>
    %232 = arith.mulf %231, %230 : vector<32x256xf32>
    %233 = math.tanh %232 : vector<32x256xf32>
    %cst_79 = arith.constant 1.000000e+00 : f32
    %234 = vector.broadcast %cst_79 : f32 to vector<32x256xf32>
    %235 = arith.addf %234, %233 : vector<32x256xf32>
    %236 = arith.mulf %225, %235 : vector<32x256xf32>
    %237 = arith.truncf %236 : vector<32x256xf32> to vector<32x256xbf16>
    %c0_80 = arith.constant 0 : index
    %c0_81 = arith.constant 0 : index
    %c0_82 = arith.constant 0 : index
    %238 = vector.load %arg12[%c0_80, %c0_81, %c0_82] : memref<2x256x128xbf16, #tpu.memory_space<vmem>>, vector<1x256x128xbf16>
    %239 = vector.shape_cast %238 : vector<1x256x128xbf16> to vector<256x128xbf16>
    %cst_83 = arith.constant dense<0.000000e+00> : vector<32x128xf32>
    %240 = tpu.matmul %237, %239, %cst_83 {dimension_numbers = #tpu.dot_dimension_numbers<[1], [0], [0], [1], [0, 0, 1, 1], [], []>} : vector<32x256xbf16>, vector<256x128xbf16>, vector<32x128xf32> -> vector<32x128xf32>
    %c0_84 = arith.constant 0 : index
    %c0_85 = arith.constant 0 : index
    %c0_86 = arith.constant 0 : index
    %241 = vector.load %arg13[%c0_84, %c0_85, %c0_86] : memref<2x1x128xf32, #tpu.memory_space<vmem>>, vector<1x1x128xf32>
    %242 = vector.shape_cast %241 : vector<1x1x128xf32> to vector<1x128xf32>
    %243 = vector.broadcast %242 : vector<1x128xf32> to vector<32x128xf32>
    %244 = arith.addf %240, %243 : vector<32x128xf32>
    %245 = arith.addf %215, %244 : vector<32x128xf32>
    %c0_87 = arith.constant 0 : index
    %c0_88 = arith.constant 0 : index
    %c0_89 = arith.constant 0 : index
    %246 = vector.load %arg14[%c0_87, %c0_88, %c0_89] : memref<2x1x128xf32, #tpu.memory_space<vmem>>, vector<1x1x128xf32>
    %247 = vector.shape_cast %246 : vector<1x1x128xf32> to vector<1x128xf32>
    %c0_90 = arith.constant 0 : index
    %c0_91 = arith.constant 0 : index
    %c0_92 = arith.constant 0 : index
    %248 = vector.load %arg15[%c0_90, %c0_91, %c0_92] : memref<2x1x128xf32, #tpu.memory_space<vmem>>, vector<1x1x128xf32>
    %249 = vector.shape_cast %248 : vector<1x1x128xf32> to vector<1x128xf32>
    %cst_93 = arith.constant dense<0.000000e+00> : vector<32xf32>
    %250 = vector.multi_reduction <add>, %245, %cst_93 [1] : vector<32x128xf32> to vector<32xf32>
    %251 = vector.shape_cast %250 : vector<32xf32> to vector<32x1xf32>
    %cst_94 = arith.constant 1.280000e+02 : f32
    %252 = vector.broadcast %cst_94 : f32 to vector<32x1xf32>
    %253 = arith.divf %251, %252 : vector<32x1xf32>
    %254 = vector.broadcast %253 : vector<32x1xf32> to vector<32x128xf32>
    %255 = arith.subf %245, %254 : vector<32x128xf32>
    %256 = arith.mulf %255, %255 : vector<32x128xf32>
    %cst_95 = arith.constant dense<0.000000e+00> : vector<32xf32>
    %257 = vector.multi_reduction <add>, %256, %cst_95 [1] : vector<32x128xf32> to vector<32xf32>
    %258 = vector.shape_cast %257 : vector<32xf32> to vector<32x1xf32>
    %cst_96 = arith.constant 1.280000e+02 : f32
    %259 = vector.broadcast %cst_96 : f32 to vector<32x1xf32>
    %260 = arith.divf %258, %259 : vector<32x1xf32>
    %261 = vector.broadcast %253 : vector<32x1xf32> to vector<32x128xf32>
    %262 = arith.subf %245, %261 : vector<32x128xf32>
    %cst_97 = arith.constant 9.99999996E-13 : f32
    %263 = vector.broadcast %cst_97 : f32 to vector<32x1xf32>
    %264 = arith.addf %260, %263 : vector<32x1xf32>
    %265 = math.rsqrt %264 : vector<32x1xf32>
    %266 = vector.broadcast %265 : vector<32x1xf32> to vector<32x128xf32>
    %267 = arith.mulf %262, %266 : vector<32x128xf32>
    %268 = vector.broadcast %247 : vector<1x128xf32> to vector<32x128xf32>
    %269 = arith.mulf %267, %268 : vector<32x128xf32>
    %270 = vector.broadcast %249 : vector<1x128xf32> to vector<32x128xf32>
    %271 = arith.addf %269, %270 : vector<32x128xf32>
    %272 = arith.truncf %271 : vector<32x128xf32> to vector<32x128xbf16>
    %c1 = arith.constant 1 : index
    %c0_98 = arith.constant 0 : index
    %c0_99 = arith.constant 0 : index
    %273 = vector.load %arg4[%c1, %c0_98, %c0_99] : memref<2x128x384xbf16, #tpu.memory_space<vmem>>, vector<1x128x384xbf16>
    %274 = vector.shape_cast %273 : vector<1x128x384xbf16> to vector<128x384xbf16>
    %cst_100 = arith.constant dense<0.000000e+00> : vector<32x384xf32>
    %275 = tpu.matmul %272, %274, %cst_100 {dimension_numbers = #tpu.dot_dimension_numbers<[1], [0], [0], [1], [0, 0, 1, 1], [], []>} : vector<32x128xbf16>, vector<128x384xbf16>, vector<32x384xf32> -> vector<32x384xf32>
    %c1_101 = arith.constant 1 : index
    %c0_102 = arith.constant 0 : index
    %c0_103 = arith.constant 0 : index
    %276 = vector.load %arg5[%c1_101, %c0_102, %c0_103] : memref<2x1x384xf32, #tpu.memory_space<vmem>>, vector<1x1x384xf32>
    %277 = vector.shape_cast %276 : vector<1x1x384xf32> to vector<1x384xf32>
    %278 = vector.broadcast %277 : vector<1x384xf32> to vector<32x384xf32>
    %279 = arith.addf %275, %278 : vector<32x384xf32>
    %280 = vector.extract_strided_slice %25 {offsets = [0, 0], sizes = [1, 8], strides = [1, 1]} : vector<4x8xf32> to vector<1x8xf32>
    %281 = vector.extract_strided_slice %279 {offsets = [0, 0], sizes = [8, 64], strides = [1, 1]} : vector<32x384xf32> to vector<8x64xf32>
    %282 = vector.extract_strided_slice %279 {offsets = [0, 128], sizes = [8, 64], strides = [1, 1]} : vector<32x384xf32> to vector<8x64xf32>
    %283 = vector.extract_strided_slice %279 {offsets = [0, 256], sizes = [8, 64], strides = [1, 1]} : vector<32x384xf32> to vector<8x64xf32>
    %cst_104 = arith.constant dense<0.000000e+00> : vector<8x8xf32>
    %284 = tpu.matmul %281, %282, %cst_104 {dimension_numbers = #tpu.dot_dimension_numbers<[1], [1], [0], [0], [0, 0, 1, 0], [], []>} : vector<8x64xf32>, vector<8x64xf32>, vector<8x8xf32> -> vector<8x8xf32>
    %285 = vector.broadcast %280 : vector<1x8xf32> to vector<8x8xf32>
    %286 = arith.addf %284, %285 : vector<8x8xf32>
    %cst_105 = arith.constant dense<0xFF800000> : vector<8xf32>
    %287 = vector.multi_reduction <maximumf>, %286, %cst_105 [1] : vector<8x8xf32> to vector<8xf32>
    %288 = vector.shape_cast %287 : vector<8xf32> to vector<8x1xf32>
    %289 = vector.broadcast %288 : vector<8x1xf32> to vector<8x8xf32>
    %290 = arith.subf %286, %289 : vector<8x8xf32>
    %291 = math.exp %290 : vector<8x8xf32>
    %cst_106 = arith.constant dense<0.000000e+00> : vector<8xf32>
    %292 = vector.multi_reduction <add>, %291, %cst_106 [1] : vector<8x8xf32> to vector<8xf32>
    %293 = vector.shape_cast %292 : vector<8xf32> to vector<8x1xf32>
    %294 = tpu.reciprocal %293 {approx = true} : vector<8x1xf32> -> vector<8x1xf32>
    %295 = vector.broadcast %294 : vector<8x1xf32> to vector<8x8xf32>
    %296 = arith.mulf %291, %295 : vector<8x8xf32>
    %cst_107 = arith.constant dense<0.000000e+00> : vector<8x64xf32>
    %297 = tpu.matmul %296, %283, %cst_107 {dimension_numbers = #tpu.dot_dimension_numbers<[1], [0], [0], [1], [0, 0, 1, 1], [], []>} : vector<8x8xf32>, vector<8x64xf32>, vector<8x64xf32> -> vector<8x64xf32>
    %298 = vector.extract_strided_slice %279 {offsets = [0, 64], sizes = [8, 64], strides = [1, 1]} : vector<32x384xf32> to vector<8x64xf32>
    %299 = vector.extract_strided_slice %279 {offsets = [0, 192], sizes = [8, 64], strides = [1, 1]} : vector<32x384xf32> to vector<8x64xf32>
    %300 = vector.extract_strided_slice %279 {offsets = [0, 320], sizes = [8, 64], strides = [1, 1]} : vector<32x384xf32> to vector<8x64xf32>
    %cst_108 = arith.constant dense<0.000000e+00> : vector<8x8xf32>
    %301 = tpu.matmul %298, %299, %cst_108 {dimension_numbers = #tpu.dot_dimension_numbers<[1], [1], [0], [0], [0, 0, 1, 0], [], []>} : vector<8x64xf32>, vector<8x64xf32>, vector<8x8xf32> -> vector<8x8xf32>
    %302 = vector.broadcast %280 : vector<1x8xf32> to vector<8x8xf32>
    %303 = arith.addf %301, %302 : vector<8x8xf32>
    %cst_109 = arith.constant dense<0xFF800000> : vector<8xf32>
    %304 = vector.multi_reduction <maximumf>, %303, %cst_109 [1] : vector<8x8xf32> to vector<8xf32>
    %305 = vector.shape_cast %304 : vector<8xf32> to vector<8x1xf32>
    %306 = vector.broadcast %305 : vector<8x1xf32> to vector<8x8xf32>
    %307 = arith.subf %303, %306 : vector<8x8xf32>
    %308 = math.exp %307 : vector<8x8xf32>
    %cst_110 = arith.constant dense<0.000000e+00> : vector<8xf32>
    %309 = vector.multi_reduction <add>, %308, %cst_110 [1] : vector<8x8xf32> to vector<8xf32>
    %310 = vector.shape_cast %309 : vector<8xf32> to vector<8x1xf32>
    %311 = tpu.reciprocal %310 {approx = true} : vector<8x1xf32> -> vector<8x1xf32>
    %312 = vector.broadcast %311 : vector<8x1xf32> to vector<8x8xf32>
    %313 = arith.mulf %308, %312 : vector<8x8xf32>
    %cst_111 = arith.constant dense<0.000000e+00> : vector<8x64xf32>
    %314 = tpu.matmul %313, %300, %cst_111 {dimension_numbers = #tpu.dot_dimension_numbers<[1], [0], [0], [1], [0, 0, 1, 1], [], []>} : vector<8x8xf32>, vector<8x64xf32>, vector<8x64xf32> -> vector<8x64xf32>
    %315 = vector.extract_strided_slice %25 {offsets = [1, 0], sizes = [1, 8], strides = [1, 1]} : vector<4x8xf32> to vector<1x8xf32>
    %316 = vector.extract_strided_slice %279 {offsets = [8, 0], sizes = [8, 64], strides = [1, 1]} : vector<32x384xf32> to vector<8x64xf32>
    %317 = vector.extract_strided_slice %279 {offsets = [8, 128], sizes = [8, 64], strides = [1, 1]} : vector<32x384xf32> to vector<8x64xf32>
    %318 = vector.extract_strided_slice %279 {offsets = [8, 256], sizes = [8, 64], strides = [1, 1]} : vector<32x384xf32> to vector<8x64xf32>
    %cst_112 = arith.constant dense<0.000000e+00> : vector<8x8xf32>
    %319 = tpu.matmul %316, %317, %cst_112 {dimension_numbers = #tpu.dot_dimension_numbers<[1], [1], [0], [0], [0, 0, 1, 0], [], []>} : vector<8x64xf32>, vector<8x64xf32>, vector<8x8xf32> -> vector<8x8xf32>
    %320 = vector.broadcast %315 : vector<1x8xf32> to vector<8x8xf32>
    %321 = arith.addf %319, %320 : vector<8x8xf32>
    %cst_113 = arith.constant dense<0xFF800000> : vector<8xf32>
    %322 = vector.multi_reduction <maximumf>, %321, %cst_113 [1] : vector<8x8xf32> to vector<8xf32>
    %323 = vector.shape_cast %322 : vector<8xf32> to vector<8x1xf32>
    %324 = vector.broadcast %323 : vector<8x1xf32> to vector<8x8xf32>
    %325 = arith.subf %321, %324 : vector<8x8xf32>
    %326 = math.exp %325 : vector<8x8xf32>
    %cst_114 = arith.constant dense<0.000000e+00> : vector<8xf32>
    %327 = vector.multi_reduction <add>, %326, %cst_114 [1] : vector<8x8xf32> to vector<8xf32>
    %328 = vector.shape_cast %327 : vector<8xf32> to vector<8x1xf32>
    %329 = tpu.reciprocal %328 {approx = true} : vector<8x1xf32> -> vector<8x1xf32>
    %330 = vector.broadcast %329 : vector<8x1xf32> to vector<8x8xf32>
    %331 = arith.mulf %326, %330 : vector<8x8xf32>
    %cst_115 = arith.constant dense<0.000000e+00> : vector<8x64xf32>
    %332 = tpu.matmul %331, %318, %cst_115 {dimension_numbers = #tpu.dot_dimension_numbers<[1], [0], [0], [1], [0, 0, 1, 1], [], []>} : vector<8x8xf32>, vector<8x64xf32>, vector<8x64xf32> -> vector<8x64xf32>
    %333 = vector.extract_strided_slice %279 {offsets = [8, 64], sizes = [8, 64], strides = [1, 1]} : vector<32x384xf32> to vector<8x64xf32>
    %334 = vector.extract_strided_slice %279 {offsets = [8, 192], sizes = [8, 64], strides = [1, 1]} : vector<32x384xf32> to vector<8x64xf32>
    %335 = vector.extract_strided_slice %279 {offsets = [8, 320], sizes = [8, 64], strides = [1, 1]} : vector<32x384xf32> to vector<8x64xf32>
    %cst_116 = arith.constant dense<0.000000e+00> : vector<8x8xf32>
    %336 = tpu.matmul %333, %334, %cst_116 {dimension_numbers = #tpu.dot_dimension_numbers<[1], [1], [0], [0], [0, 0, 1, 0], [], []>} : vector<8x64xf32>, vector<8x64xf32>, vector<8x8xf32> -> vector<8x8xf32>
    %337 = vector.broadcast %315 : vector<1x8xf32> to vector<8x8xf32>
    %338 = arith.addf %336, %337 : vector<8x8xf32>
    %cst_117 = arith.constant dense<0xFF800000> : vector<8xf32>
    %339 = vector.multi_reduction <maximumf>, %338, %cst_117 [1] : vector<8x8xf32> to vector<8xf32>
    %340 = vector.shape_cast %339 : vector<8xf32> to vector<8x1xf32>
    %341 = vector.broadcast %340 : vector<8x1xf32> to vector<8x8xf32>
    %342 = arith.subf %338, %341 : vector<8x8xf32>
    %343 = math.exp %342 : vector<8x8xf32>
    %cst_118 = arith.constant dense<0.000000e+00> : vector<8xf32>
    %344 = vector.multi_reduction <add>, %343, %cst_118 [1] : vector<8x8xf32> to vector<8xf32>
    %345 = vector.shape_cast %344 : vector<8xf32> to vector<8x1xf32>
    %346 = tpu.reciprocal %345 {approx = true} : vector<8x1xf32> -> vector<8x1xf32>
    %347 = vector.broadcast %346 : vector<8x1xf32> to vector<8x8xf32>
    %348 = arith.mulf %343, %347 : vector<8x8xf32>
    %cst_119 = arith.constant dense<0.000000e+00> : vector<8x64xf32>
    %349 = tpu.matmul %348, %335, %cst_119 {dimension_numbers = #tpu.dot_dimension_numbers<[1], [0], [0], [1], [0, 0, 1, 1], [], []>} : vector<8x8xf32>, vector<8x64xf32>, vector<8x64xf32> -> vector<8x64xf32>
    %350 = vector.extract_strided_slice %25 {offsets = [2, 0], sizes = [1, 8], strides = [1, 1]} : vector<4x8xf32> to vector<1x8xf32>
    %351 = vector.extract_strided_slice %279 {offsets = [16, 0], sizes = [8, 64], strides = [1, 1]} : vector<32x384xf32> to vector<8x64xf32>
    %352 = vector.extract_strided_slice %279 {offsets = [16, 128], sizes = [8, 64], strides = [1, 1]} : vector<32x384xf32> to vector<8x64xf32>
    %353 = vector.extract_strided_slice %279 {offsets = [16, 256], sizes = [8, 64], strides = [1, 1]} : vector<32x384xf32> to vector<8x64xf32>
    %cst_120 = arith.constant dense<0.000000e+00> : vector<8x8xf32>
    %354 = tpu.matmul %351, %352, %cst_120 {dimension_numbers = #tpu.dot_dimension_numbers<[1], [1], [0], [0], [0, 0, 1, 0], [], []>} : vector<8x64xf32>, vector<8x64xf32>, vector<8x8xf32> -> vector<8x8xf32>
    %355 = vector.broadcast %350 : vector<1x8xf32> to vector<8x8xf32>
    %356 = arith.addf %354, %355 : vector<8x8xf32>
    %cst_121 = arith.constant dense<0xFF800000> : vector<8xf32>
    %357 = vector.multi_reduction <maximumf>, %356, %cst_121 [1] : vector<8x8xf32> to vector<8xf32>
    %358 = vector.shape_cast %357 : vector<8xf32> to vector<8x1xf32>
    %359 = vector.broadcast %358 : vector<8x1xf32> to vector<8x8xf32>
    %360 = arith.subf %356, %359 : vector<8x8xf32>
    %361 = math.exp %360 : vector<8x8xf32>
    %cst_122 = arith.constant dense<0.000000e+00> : vector<8xf32>
    %362 = vector.multi_reduction <add>, %361, %cst_122 [1] : vector<8x8xf32> to vector<8xf32>
    %363 = vector.shape_cast %362 : vector<8xf32> to vector<8x1xf32>
    %364 = tpu.reciprocal %363 {approx = true} : vector<8x1xf32> -> vector<8x1xf32>
    %365 = vector.broadcast %364 : vector<8x1xf32> to vector<8x8xf32>
    %366 = arith.mulf %361, %365 : vector<8x8xf32>
    %cst_123 = arith.constant dense<0.000000e+00> : vector<8x64xf32>
    %367 = tpu.matmul %366, %353, %cst_123 {dimension_numbers = #tpu.dot_dimension_numbers<[1], [0], [0], [1], [0, 0, 1, 1], [], []>} : vector<8x8xf32>, vector<8x64xf32>, vector<8x64xf32> -> vector<8x64xf32>
    %368 = vector.extract_strided_slice %279 {offsets = [16, 64], sizes = [8, 64], strides = [1, 1]} : vector<32x384xf32> to vector<8x64xf32>
    %369 = vector.extract_strided_slice %279 {offsets = [16, 192], sizes = [8, 64], strides = [1, 1]} : vector<32x384xf32> to vector<8x64xf32>
    %370 = vector.extract_strided_slice %279 {offsets = [16, 320], sizes = [8, 64], strides = [1, 1]} : vector<32x384xf32> to vector<8x64xf32>
    %cst_124 = arith.constant dense<0.000000e+00> : vector<8x8xf32>
    %371 = tpu.matmul %368, %369, %cst_124 {dimension_numbers = #tpu.dot_dimension_numbers<[1], [1], [0], [0], [0, 0, 1, 0], [], []>} : vector<8x64xf32>, vector<8x64xf32>, vector<8x8xf32> -> vector<8x8xf32>
    %372 = vector.broadcast %350 : vector<1x8xf32> to vector<8x8xf32>
    %373 = arith.addf %371, %372 : vector<8x8xf32>
    %cst_125 = arith.constant dense<0xFF800000> : vector<8xf32>
    %374 = vector.multi_reduction <maximumf>, %373, %cst_125 [1] : vector<8x8xf32> to vector<8xf32>
    %375 = vector.shape_cast %374 : vector<8xf32> to vector<8x1xf32>
    %376 = vector.broadcast %375 : vector<8x1xf32> to vector<8x8xf32>
    %377 = arith.subf %373, %376 : vector<8x8xf32>
    %378 = math.exp %377 : vector<8x8xf32>
    %cst_126 = arith.constant dense<0.000000e+00> : vector<8xf32>
    %379 = vector.multi_reduction <add>, %378, %cst_126 [1] : vector<8x8xf32> to vector<8xf32>
    %380 = vector.shape_cast %379 : vector<8xf32> to vector<8x1xf32>
    %381 = tpu.reciprocal %380 {approx = true} : vector<8x1xf32> -> vector<8x1xf32>
    %382 = vector.broadcast %381 : vector<8x1xf32> to vector<8x8xf32>
    %383 = arith.mulf %378, %382 : vector<8x8xf32>
    %cst_127 = arith.constant dense<0.000000e+00> : vector<8x64xf32>
    %384 = tpu.matmul %383, %370, %cst_127 {dimension_numbers = #tpu.dot_dimension_numbers<[1], [0], [0], [1], [0, 0, 1, 1], [], []>} : vector<8x8xf32>, vector<8x64xf32>, vector<8x64xf32> -> vector<8x64xf32>
    %385 = vector.extract_strided_slice %25 {offsets = [3, 0], sizes = [1, 8], strides = [1, 1]} : vector<4x8xf32> to vector<1x8xf32>
    %386 = vector.extract_strided_slice %279 {offsets = [24, 0], sizes = [8, 64], strides = [1, 1]} : vector<32x384xf32> to vector<8x64xf32>
    %387 = vector.extract_strided_slice %279 {offsets = [24, 128], sizes = [8, 64], strides = [1, 1]} : vector<32x384xf32> to vector<8x64xf32>
    %388 = vector.extract_strided_slice %279 {offsets = [24, 256], sizes = [8, 64], strides = [1, 1]} : vector<32x384xf32> to vector<8x64xf32>
    %cst_128 = arith.constant dense<0.000000e+00> : vector<8x8xf32>
    %389 = tpu.matmul %386, %387, %cst_128 {dimension_numbers = #tpu.dot_dimension_numbers<[1], [1], [0], [0], [0, 0, 1, 0], [], []>} : vector<8x64xf32>, vector<8x64xf32>, vector<8x8xf32> -> vector<8x8xf32>
    %390 = vector.broadcast %385 : vector<1x8xf32> to vector<8x8xf32>
    %391 = arith.addf %389, %390 : vector<8x8xf32>
    %cst_129 = arith.constant dense<0xFF800000> : vector<8xf32>
    %392 = vector.multi_reduction <maximumf>, %391, %cst_129 [1] : vector<8x8xf32> to vector<8xf32>
    %393 = vector.shape_cast %392 : vector<8xf32> to vector<8x1xf32>
    %394 = vector.broadcast %393 : vector<8x1xf32> to vector<8x8xf32>
    %395 = arith.subf %391, %394 : vector<8x8xf32>
    %396 = math.exp %395 : vector<8x8xf32>
    %cst_130 = arith.constant dense<0.000000e+00> : vector<8xf32>
    %397 = vector.multi_reduction <add>, %396, %cst_130 [1] : vector<8x8xf32> to vector<8xf32>
    %398 = vector.shape_cast %397 : vector<8xf32> to vector<8x1xf32>
    %399 = tpu.reciprocal %398 {approx = true} : vector<8x1xf32> -> vector<8x1xf32>
    %400 = vector.broadcast %399 : vector<8x1xf32> to vector<8x8xf32>
    %401 = arith.mulf %396, %400 : vector<8x8xf32>
    %cst_131 = arith.constant dense<0.000000e+00> : vector<8x64xf32>
    %402 = tpu.matmul %401, %388, %cst_131 {dimension_numbers = #tpu.dot_dimension_numbers<[1], [0], [0], [1], [0, 0, 1, 1], [], []>} : vector<8x8xf32>, vector<8x64xf32>, vector<8x64xf32> -> vector<8x64xf32>
    %403 = vector.extract_strided_slice %279 {offsets = [24, 64], sizes = [8, 64], strides = [1, 1]} : vector<32x384xf32> to vector<8x64xf32>
    %404 = vector.extract_strided_slice %279 {offsets = [24, 192], sizes = [8, 64], strides = [1, 1]} : vector<32x384xf32> to vector<8x64xf32>
    %405 = vector.extract_strided_slice %279 {offsets = [24, 320], sizes = [8, 64], strides = [1, 1]} : vector<32x384xf32> to vector<8x64xf32>
    %cst_132 = arith.constant dense<0.000000e+00> : vector<8x8xf32>
    %406 = tpu.matmul %403, %404, %cst_132 {dimension_numbers = #tpu.dot_dimension_numbers<[1], [1], [0], [0], [0, 0, 1, 0], [], []>} : vector<8x64xf32>, vector<8x64xf32>, vector<8x8xf32> -> vector<8x8xf32>
    %407 = vector.broadcast %385 : vector<1x8xf32> to vector<8x8xf32>
    %408 = arith.addf %406, %407 : vector<8x8xf32>
    %cst_133 = arith.constant dense<0xFF800000> : vector<8xf32>
    %409 = vector.multi_reduction <maximumf>, %408, %cst_133 [1] : vector<8x8xf32> to vector<8xf32>
    %410 = vector.shape_cast %409 : vector<8xf32> to vector<8x1xf32>
    %411 = vector.broadcast %410 : vector<8x1xf32> to vector<8x8xf32>
    %412 = arith.subf %408, %411 : vector<8x8xf32>
    %413 = math.exp %412 : vector<8x8xf32>
    %cst_134 = arith.constant dense<0.000000e+00> : vector<8xf32>
    %414 = vector.multi_reduction <add>, %413, %cst_134 [1] : vector<8x8xf32> to vector<8xf32>
    %415 = vector.shape_cast %414 : vector<8xf32> to vector<8x1xf32>
    %416 = tpu.reciprocal %415 {approx = true} : vector<8x1xf32> -> vector<8x1xf32>
    %417 = vector.broadcast %416 : vector<8x1xf32> to vector<8x8xf32>
    %418 = arith.mulf %413, %417 : vector<8x8xf32>
    %cst_135 = arith.constant dense<0.000000e+00> : vector<8x64xf32>
    %419 = tpu.matmul %418, %405, %cst_135 {dimension_numbers = #tpu.dot_dimension_numbers<[1], [0], [0], [1], [0, 0, 1, 1], [], []>} : vector<8x8xf32>, vector<8x64xf32>, vector<8x64xf32> -> vector<8x64xf32>
    %c1_136 = arith.constant 1 : index
    %c0_137 = arith.constant 0 : index
    %c0_138 = arith.constant 0 : index
    %420 = vector.load %arg6[%c1_136, %c0_137, %c0_138] : memref<2x128x128xbf16, #tpu.memory_space<vmem>>, vector<1x128x128xbf16>
    %421 = vector.shape_cast %420 : vector<1x128x128xbf16> to vector<128x128xbf16>
    %c1_139 = arith.constant 1 : index
    %c0_140 = arith.constant 0 : index
    %c0_141 = arith.constant 0 : index
    %422 = vector.load %arg7[%c1_139, %c0_140, %c0_141] : memref<2x1x128xf32, #tpu.memory_space<vmem>>, vector<1x1x128xf32>
    %423 = vector.shape_cast %422 : vector<1x1x128xf32> to vector<1x128xf32>
    %424 = tpu.concatenate %297, %332, %367, %402 in 0 : vector<8x64xf32>, vector<8x64xf32>, vector<8x64xf32>, vector<8x64xf32> -> vector<32x64xf32>
    %425 = arith.truncf %424 : vector<32x64xf32> to vector<32x64xbf16>
    %426 = vector.extract_strided_slice %421 {offsets = [0, 0], sizes = [64, 128], strides = [1, 1]} : vector<128x128xbf16> to vector<64x128xbf16>
    %cst_142 = arith.constant dense<0.000000e+00> : vector<32x128xf32>
    %427 = tpu.matmul %425, %426, %cst_142 {dimension_numbers = #tpu.dot_dimension_numbers<[1], [0], [0], [1], [0, 0, 1, 1], [], []>} : vector<32x64xbf16>, vector<64x128xbf16>, vector<32x128xf32> -> vector<32x128xf32>
    %428 = vector.broadcast %423 : vector<1x128xf32> to vector<32x128xf32>
    %429 = arith.addf %428, %427 : vector<32x128xf32>
    %430 = tpu.concatenate %314, %349, %384, %419 in 0 : vector<8x64xf32>, vector<8x64xf32>, vector<8x64xf32>, vector<8x64xf32> -> vector<32x64xf32>
    %431 = arith.truncf %430 : vector<32x64xf32> to vector<32x64xbf16>
    %432 = vector.extract_strided_slice %421 {offsets = [64, 0], sizes = [64, 128], strides = [1, 1]} : vector<128x128xbf16> to vector<64x128xbf16>
    %cst_143 = arith.constant dense<0.000000e+00> : vector<32x128xf32>
    %433 = tpu.matmul %431, %432, %cst_143 {dimension_numbers = #tpu.dot_dimension_numbers<[1], [0], [0], [1], [0, 0, 1, 1], [], []>} : vector<32x64xbf16>, vector<64x128xbf16>, vector<32x128xf32> -> vector<32x128xf32>
    %434 = arith.addf %429, %433 : vector<32x128xf32>
    %435 = arith.addf %271, %434 : vector<32x128xf32>
    %c1_144 = arith.constant 1 : index
    %c0_145 = arith.constant 0 : index
    %c0_146 = arith.constant 0 : index
    %436 = vector.load %arg8[%c1_144, %c0_145, %c0_146] : memref<2x1x128xf32, #tpu.memory_space<vmem>>, vector<1x1x128xf32>
    %437 = vector.shape_cast %436 : vector<1x1x128xf32> to vector<1x128xf32>
    %c1_147 = arith.constant 1 : index
    %c0_148 = arith.constant 0 : index
    %c0_149 = arith.constant 0 : index
    %438 = vector.load %arg9[%c1_147, %c0_148, %c0_149] : memref<2x1x128xf32, #tpu.memory_space<vmem>>, vector<1x1x128xf32>
    %439 = vector.shape_cast %438 : vector<1x1x128xf32> to vector<1x128xf32>
    %cst_150 = arith.constant dense<0.000000e+00> : vector<32xf32>
    %440 = vector.multi_reduction <add>, %435, %cst_150 [1] : vector<32x128xf32> to vector<32xf32>
    %441 = vector.shape_cast %440 : vector<32xf32> to vector<32x1xf32>
    %cst_151 = arith.constant 1.280000e+02 : f32
    %442 = vector.broadcast %cst_151 : f32 to vector<32x1xf32>
    %443 = arith.divf %441, %442 : vector<32x1xf32>
    %444 = vector.broadcast %443 : vector<32x1xf32> to vector<32x128xf32>
    %445 = arith.subf %435, %444 : vector<32x128xf32>
    %446 = arith.mulf %445, %445 : vector<32x128xf32>
    %cst_152 = arith.constant dense<0.000000e+00> : vector<32xf32>
    %447 = vector.multi_reduction <add>, %446, %cst_152 [1] : vector<32x128xf32> to vector<32xf32>
    %448 = vector.shape_cast %447 : vector<32xf32> to vector<32x1xf32>
    %cst_153 = arith.constant 1.280000e+02 : f32
    %449 = vector.broadcast %cst_153 : f32 to vector<32x1xf32>
    %450 = arith.divf %448, %449 : vector<32x1xf32>
    %451 = vector.broadcast %443 : vector<32x1xf32> to vector<32x128xf32>
    %452 = arith.subf %435, %451 : vector<32x128xf32>
    %cst_154 = arith.constant 9.99999996E-13 : f32
    %453 = vector.broadcast %cst_154 : f32 to vector<32x1xf32>
    %454 = arith.addf %450, %453 : vector<32x1xf32>
    %455 = math.rsqrt %454 : vector<32x1xf32>
    %456 = vector.broadcast %455 : vector<32x1xf32> to vector<32x128xf32>
    %457 = arith.mulf %452, %456 : vector<32x128xf32>
    %458 = vector.broadcast %437 : vector<1x128xf32> to vector<32x128xf32>
    %459 = arith.mulf %457, %458 : vector<32x128xf32>
    %460 = vector.broadcast %439 : vector<1x128xf32> to vector<32x128xf32>
    %461 = arith.addf %459, %460 : vector<32x128xf32>
    %462 = arith.truncf %461 : vector<32x128xf32> to vector<32x128xbf16>
    %c1_155 = arith.constant 1 : index
    %c0_156 = arith.constant 0 : index
    %c0_157 = arith.constant 0 : index
    %463 = vector.load %arg10[%c1_155, %c0_156, %c0_157] : memref<2x128x256xbf16, #tpu.memory_space<vmem>>, vector<1x128x256xbf16>
    %464 = vector.shape_cast %463 : vector<1x128x256xbf16> to vector<128x256xbf16>
    %cst_158 = arith.constant dense<0.000000e+00> : vector<32x256xf32>
    %465 = tpu.matmul %462, %464, %cst_158 {dimension_numbers = #tpu.dot_dimension_numbers<[1], [0], [0], [1], [0, 0, 1, 1], [], []>} : vector<32x128xbf16>, vector<128x256xbf16>, vector<32x256xf32> -> vector<32x256xf32>
    %c1_159 = arith.constant 1 : index
    %c0_160 = arith.constant 0 : index
    %c0_161 = arith.constant 0 : index
    %466 = vector.load %arg11[%c1_159, %c0_160, %c0_161] : memref<2x1x256xf32, #tpu.memory_space<vmem>>, vector<1x1x256xf32>
    %467 = vector.shape_cast %466 : vector<1x1x256xf32> to vector<1x256xf32>
    %468 = vector.broadcast %467 : vector<1x256xf32> to vector<32x256xf32>
    %469 = arith.addf %465, %468 : vector<32x256xf32>
    %cst_162 = arith.constant 5.000000e-01 : f32
    %470 = vector.broadcast %cst_162 : f32 to vector<32x256xf32>
    %471 = arith.mulf %470, %469 : vector<32x256xf32>
    %cst_163 = arith.constant 4.471500e-02 : f32
    %472 = vector.broadcast %cst_163 : f32 to vector<32x256xf32>
    %473 = arith.mulf %472, %469 : vector<32x256xf32>
    %474 = arith.mulf %473, %469 : vector<32x256xf32>
    %475 = arith.mulf %474, %469 : vector<32x256xf32>
    %476 = arith.addf %469, %475 : vector<32x256xf32>
    %cst_164 = arith.constant 0.797884583 : f32
    %477 = vector.broadcast %cst_164 : f32 to vector<32x256xf32>
    %478 = arith.mulf %477, %476 : vector<32x256xf32>
    %479 = math.tanh %478 : vector<32x256xf32>
    %cst_165 = arith.constant 1.000000e+00 : f32
    %480 = vector.broadcast %cst_165 : f32 to vector<32x256xf32>
    %481 = arith.addf %480, %479 : vector<32x256xf32>
    %482 = arith.mulf %471, %481 : vector<32x256xf32>
    %483 = arith.truncf %482 : vector<32x256xf32> to vector<32x256xbf16>
    %c1_166 = arith.constant 1 : index
    %c0_167 = arith.constant 0 : index
    %c0_168 = arith.constant 0 : index
    %484 = vector.load %arg12[%c1_166, %c0_167, %c0_168] : memref<2x256x128xbf16, #tpu.memory_space<vmem>>, vector<1x256x128xbf16>
    %485 = vector.shape_cast %484 : vector<1x256x128xbf16> to vector<256x128xbf16>
    %cst_169 = arith.constant dense<0.000000e+00> : vector<32x128xf32>
    %486 = tpu.matmul %483, %485, %cst_169 {dimension_numbers = #tpu.dot_dimension_numbers<[1], [0], [0], [1], [0, 0, 1, 1], [], []>} : vector<32x256xbf16>, vector<256x128xbf16>, vector<32x128xf32> -> vector<32x128xf32>
    %c1_170 = arith.constant 1 : index
    %c0_171 = arith.constant 0 : index
    %c0_172 = arith.constant 0 : index
    %487 = vector.load %arg13[%c1_170, %c0_171, %c0_172] : memref<2x1x128xf32, #tpu.memory_space<vmem>>, vector<1x1x128xf32>
    %488 = vector.shape_cast %487 : vector<1x1x128xf32> to vector<1x128xf32>
    %489 = vector.broadcast %488 : vector<1x128xf32> to vector<32x128xf32>
    %490 = arith.addf %486, %489 : vector<32x128xf32>
    %491 = arith.addf %461, %490 : vector<32x128xf32>
    %c1_173 = arith.constant 1 : index
    %c0_174 = arith.constant 0 : index
    %c0_175 = arith.constant 0 : index
    %492 = vector.load %arg14[%c1_173, %c0_174, %c0_175] : memref<2x1x128xf32, #tpu.memory_space<vmem>>, vector<1x1x128xf32>
    %493 = vector.shape_cast %492 : vector<1x1x128xf32> to vector<1x128xf32>
    %c1_176 = arith.constant 1 : index
    %c0_177 = arith.constant 0 : index
    %c0_178 = arith.constant 0 : index
    %494 = vector.load %arg15[%c1_176, %c0_177, %c0_178] : memref<2x1x128xf32, #tpu.memory_space<vmem>>, vector<1x1x128xf32>
    %495 = vector.shape_cast %494 : vector<1x1x128xf32> to vector<1x128xf32>
    %cst_179 = arith.constant dense<0.000000e+00> : vector<32xf32>
    %496 = vector.multi_reduction <add>, %491, %cst_179 [1] : vector<32x128xf32> to vector<32xf32>
    %497 = vector.shape_cast %496 : vector<32xf32> to vector<32x1xf32>
    %cst_180 = arith.constant 1.280000e+02 : f32
    %498 = vector.broadcast %cst_180 : f32 to vector<32x1xf32>
    %499 = arith.divf %497, %498 : vector<32x1xf32>
    %500 = vector.broadcast %499 : vector<32x1xf32> to vector<32x128xf32>
    %501 = arith.subf %491, %500 : vector<32x128xf32>
    %502 = arith.mulf %501, %501 : vector<32x128xf32>
    %cst_181 = arith.constant dense<0.000000e+00> : vector<32xf32>
    %503 = vector.multi_reduction <add>, %502, %cst_181 [1] : vector<32x128xf32> to vector<32xf32>
    %504 = vector.shape_cast %503 : vector<32xf32> to vector<32x1xf32>
    %cst_182 = arith.constant 1.280000e+02 : f32
    %505 = vector.broadcast %cst_182 : f32 to vector<32x1xf32>
    %506 = arith.divf %504, %505 : vector<32x1xf32>
    %507 = vector.broadcast %499 : vector<32x1xf32> to vector<32x128xf32>
    %508 = arith.subf %491, %507 : vector<32x128xf32>
    %cst_183 = arith.constant 9.99999996E-13 : f32
    %509 = vector.broadcast %cst_183 : f32 to vector<32x1xf32>
    %510 = arith.addf %506, %509 : vector<32x1xf32>
    %511 = math.rsqrt %510 : vector<32x1xf32>
    %512 = vector.broadcast %511 : vector<32x1xf32> to vector<32x128xf32>
    %513 = arith.mulf %508, %512 : vector<32x128xf32>
    %514 = vector.broadcast %493 : vector<1x128xf32> to vector<32x128xf32>
    %515 = arith.mulf %513, %514 : vector<32x128xf32>
    %516 = vector.broadcast %495 : vector<1x128xf32> to vector<32x128xf32>
    %517 = arith.addf %515, %516 : vector<32x128xf32>
    %518 = vector.extract_strided_slice %517 {offsets = [0, 0], sizes = [1, 128], strides = [1, 1]} : vector<32x128xf32> to vector<1x128xf32>
    %519 = vector.extract_strided_slice %517 {offsets = [8, 0], sizes = [1, 128], strides = [1, 1]} : vector<32x128xf32> to vector<1x128xf32>
    %520 = vector.extract_strided_slice %517 {offsets = [16, 0], sizes = [1, 128], strides = [1, 1]} : vector<32x128xf32> to vector<1x128xf32>
    %521 = vector.extract_strided_slice %517 {offsets = [24, 0], sizes = [1, 128], strides = [1, 1]} : vector<32x128xf32> to vector<1x128xf32>
    %522 = tpu.concatenate %518, %519, %520, %521 in 0 : vector<1x128xf32>, vector<1x128xf32>, vector<1x128xf32>, vector<1x128xf32> -> vector<4x128xf32>
    %c0_184 = arith.constant 0 : index
    %c0_185 = arith.constant 0 : index
    %523 = vector.load %arg16[%c0_184, %c0_185] : memref<4x128xf32, #tpu.memory_space<vmem>>, vector<4x128xf32>
    %524 = arith.addf %522, %523 : vector<4x128xf32>
    %525 = arith.truncf %524 : vector<4x128xf32> to vector<4x128xbf16>
    %c0_186 = arith.constant 0 : index
    %c0_187 = arith.constant 0 : index
    %526 = vector.load %arg17[%c0_186, %c0_187] : memref<128x512xbf16, #tpu.memory_space<vmem>>, vector<128x512xbf16>
    %cst_188 = arith.constant dense<0.000000e+00> : vector<4x512xf32>
    %527 = tpu.matmul %525, %526, %cst_188 {dimension_numbers = #tpu.dot_dimension_numbers<[1], [0], [0], [1], [0, 0, 1, 1], [], []>} : vector<4x128xbf16>, vector<128x512xbf16>, vector<4x512xf32> -> vector<4x512xf32>
    %c0_189 = arith.constant 0 : index
    %c0_190 = arith.constant 0 : index
    %528 = vector.load %arg19[%c0_189, %c0_190] : memref<1x512xf32, #tpu.memory_space<vmem>>, vector<1x512xf32>
    %529 = vector.broadcast %528 : vector<1x512xf32> to vector<4x512xf32>
    %530 = arith.addf %527, %529 : vector<4x512xf32>
    %c0_191 = arith.constant 0 : index
    %c0_192 = arith.constant 0 : index
    %531 = vector.load %arg18[%c0_191, %c0_192] : memref<128x512xbf16, #tpu.memory_space<vmem>>, vector<128x512xbf16>
    %cst_193 = arith.constant 0.000000e+00 : f32
    %532 = vector.broadcast %cst_193 : f32 to vector<1x128xf32>
    %cst_194 = arith.constant 0.000000e+00 : f32
    %533 = vector.broadcast %cst_194 : f32 to vector<1x128xf32>
    %534 = vector.extract_strided_slice %530 {offsets = [0, 0], sizes = [1, 512], strides = [1, 1]} : vector<4x512xf32> to vector<1x512xf32>
    %535 = arith.truncf %532 : vector<1x128xf32> to vector<1x128xbf16>
    %cst_195 = arith.constant dense<0.000000e+00> : vector<1x512xf32>
    %536 = tpu.matmul %535, %531, %cst_195 {dimension_numbers = #tpu.dot_dimension_numbers<[1], [0], [0], [1], [0, 0, 1, 1], [], []>} : vector<1x128xbf16>, vector<128x512xbf16>, vector<1x512xf32> -> vector<1x512xf32>
    %537 = arith.addf %534, %536 : vector<1x512xf32>
    %538 = vector.extract_strided_slice %537 {offsets = [0, 0], sizes = [1, 128], strides = [1, 1]} : vector<1x512xf32> to vector<1x128xf32>
    %539 = arith.negf %538 : vector<1x128xf32>
    %540 = math.exp %539 : vector<1x128xf32>
    %cst_196 = arith.constant 1.000000e+00 : f32
    %541 = vector.broadcast %cst_196 : f32 to vector<1x128xf32>
    %542 = arith.addf %541, %540 : vector<1x128xf32>
    %543 = arith.divf %541, %542 : vector<1x128xf32>
    %544 = vector.extract_strided_slice %537 {offsets = [0, 128], sizes = [1, 128], strides = [1, 1]} : vector<1x512xf32> to vector<1x128xf32>
    %545 = arith.negf %544 : vector<1x128xf32>
    %546 = math.exp %545 : vector<1x128xf32>
    %cst_197 = arith.constant 1.000000e+00 : f32
    %547 = vector.broadcast %cst_197 : f32 to vector<1x128xf32>
    %548 = arith.addf %547, %546 : vector<1x128xf32>
    %549 = arith.divf %547, %548 : vector<1x128xf32>
    %550 = vector.extract_strided_slice %537 {offsets = [0, 256], sizes = [1, 128], strides = [1, 1]} : vector<1x512xf32> to vector<1x128xf32>
    %551 = math.tanh %550 : vector<1x128xf32>
    %552 = vector.extract_strided_slice %537 {offsets = [0, 384], sizes = [1, 128], strides = [1, 1]} : vector<1x512xf32> to vector<1x128xf32>
    %553 = arith.negf %552 : vector<1x128xf32>
    %554 = math.exp %553 : vector<1x128xf32>
    %cst_198 = arith.constant 1.000000e+00 : f32
    %555 = vector.broadcast %cst_198 : f32 to vector<1x128xf32>
    %556 = arith.addf %555, %554 : vector<1x128xf32>
    %557 = arith.divf %555, %556 : vector<1x128xf32>
    %558 = arith.mulf %549, %533 : vector<1x128xf32>
    %559 = arith.mulf %543, %551 : vector<1x128xf32>
    %560 = arith.addf %558, %559 : vector<1x128xf32>
    %561 = math.tanh %560 : vector<1x128xf32>
    %562 = arith.mulf %557, %561 : vector<1x128xf32>
    %563 = vector.extract_strided_slice %530 {offsets = [1, 0], sizes = [1, 512], strides = [1, 1]} : vector<4x512xf32> to vector<1x512xf32>
    %564 = arith.truncf %562 : vector<1x128xf32> to vector<1x128xbf16>
    %cst_199 = arith.constant dense<0.000000e+00> : vector<1x512xf32>
    %565 = tpu.matmul %564, %531, %cst_199 {dimension_numbers = #tpu.dot_dimension_numbers<[1], [0], [0], [1], [0, 0, 1, 1], [], []>} : vector<1x128xbf16>, vector<128x512xbf16>, vector<1x512xf32> -> vector<1x512xf32>
    %566 = arith.addf %563, %565 : vector<1x512xf32>
    %567 = vector.extract_strided_slice %566 {offsets = [0, 0], sizes = [1, 128], strides = [1, 1]} : vector<1x512xf32> to vector<1x128xf32>
    %568 = arith.negf %567 : vector<1x128xf32>
    %569 = math.exp %568 : vector<1x128xf32>
    %cst_200 = arith.constant 1.000000e+00 : f32
    %570 = vector.broadcast %cst_200 : f32 to vector<1x128xf32>
    %571 = arith.addf %570, %569 : vector<1x128xf32>
    %572 = arith.divf %570, %571 : vector<1x128xf32>
    %573 = vector.extract_strided_slice %566 {offsets = [0, 128], sizes = [1, 128], strides = [1, 1]} : vector<1x512xf32> to vector<1x128xf32>
    %574 = arith.negf %573 : vector<1x128xf32>
    %575 = math.exp %574 : vector<1x128xf32>
    %cst_201 = arith.constant 1.000000e+00 : f32
    %576 = vector.broadcast %cst_201 : f32 to vector<1x128xf32>
    %577 = arith.addf %576, %575 : vector<1x128xf32>
    %578 = arith.divf %576, %577 : vector<1x128xf32>
    %579 = vector.extract_strided_slice %566 {offsets = [0, 256], sizes = [1, 128], strides = [1, 1]} : vector<1x512xf32> to vector<1x128xf32>
    %580 = math.tanh %579 : vector<1x128xf32>
    %581 = vector.extract_strided_slice %566 {offsets = [0, 384], sizes = [1, 128], strides = [1, 1]} : vector<1x512xf32> to vector<1x128xf32>
    %582 = arith.negf %581 : vector<1x128xf32>
    %583 = math.exp %582 : vector<1x128xf32>
    %cst_202 = arith.constant 1.000000e+00 : f32
    %584 = vector.broadcast %cst_202 : f32 to vector<1x128xf32>
    %585 = arith.addf %584, %583 : vector<1x128xf32>
    %586 = arith.divf %584, %585 : vector<1x128xf32>
    %587 = arith.mulf %578, %560 : vector<1x128xf32>
    %588 = arith.mulf %572, %580 : vector<1x128xf32>
    %589 = arith.addf %587, %588 : vector<1x128xf32>
    %590 = math.tanh %589 : vector<1x128xf32>
    %591 = arith.mulf %586, %590 : vector<1x128xf32>
    %592 = vector.extract_strided_slice %530 {offsets = [2, 0], sizes = [1, 512], strides = [1, 1]} : vector<4x512xf32> to vector<1x512xf32>
    %593 = arith.truncf %591 : vector<1x128xf32> to vector<1x128xbf16>
    %cst_203 = arith.constant dense<0.000000e+00> : vector<1x512xf32>
    %594 = tpu.matmul %593, %531, %cst_203 {dimension_numbers = #tpu.dot_dimension_numbers<[1], [0], [0], [1], [0, 0, 1, 1], [], []>} : vector<1x128xbf16>, vector<128x512xbf16>, vector<1x512xf32> -> vector<1x512xf32>
    %595 = arith.addf %592, %594 : vector<1x512xf32>
    %596 = vector.extract_strided_slice %595 {offsets = [0, 0], sizes = [1, 128], strides = [1, 1]} : vector<1x512xf32> to vector<1x128xf32>
    %597 = arith.negf %596 : vector<1x128xf32>
    %598 = math.exp %597 : vector<1x128xf32>
    %cst_204 = arith.constant 1.000000e+00 : f32
    %599 = vector.broadcast %cst_204 : f32 to vector<1x128xf32>
    %600 = arith.addf %599, %598 : vector<1x128xf32>
    %601 = arith.divf %599, %600 : vector<1x128xf32>
    %602 = vector.extract_strided_slice %595 {offsets = [0, 128], sizes = [1, 128], strides = [1, 1]} : vector<1x512xf32> to vector<1x128xf32>
    %603 = arith.negf %602 : vector<1x128xf32>
    %604 = math.exp %603 : vector<1x128xf32>
    %cst_205 = arith.constant 1.000000e+00 : f32
    %605 = vector.broadcast %cst_205 : f32 to vector<1x128xf32>
    %606 = arith.addf %605, %604 : vector<1x128xf32>
    %607 = arith.divf %605, %606 : vector<1x128xf32>
    %608 = vector.extract_strided_slice %595 {offsets = [0, 256], sizes = [1, 128], strides = [1, 1]} : vector<1x512xf32> to vector<1x128xf32>
    %609 = math.tanh %608 : vector<1x128xf32>
    %610 = vector.extract_strided_slice %595 {offsets = [0, 384], sizes = [1, 128], strides = [1, 1]} : vector<1x512xf32> to vector<1x128xf32>
    %611 = arith.negf %610 : vector<1x128xf32>
    %612 = math.exp %611 : vector<1x128xf32>
    %cst_206 = arith.constant 1.000000e+00 : f32
    %613 = vector.broadcast %cst_206 : f32 to vector<1x128xf32>
    %614 = arith.addf %613, %612 : vector<1x128xf32>
    %615 = arith.divf %613, %614 : vector<1x128xf32>
    %616 = arith.mulf %607, %589 : vector<1x128xf32>
    %617 = arith.mulf %601, %609 : vector<1x128xf32>
    %618 = arith.addf %616, %617 : vector<1x128xf32>
    %619 = math.tanh %618 : vector<1x128xf32>
    %620 = arith.mulf %615, %619 : vector<1x128xf32>
    %621 = vector.extract_strided_slice %530 {offsets = [3, 0], sizes = [1, 512], strides = [1, 1]} : vector<4x512xf32> to vector<1x512xf32>
    %622 = arith.truncf %620 : vector<1x128xf32> to vector<1x128xbf16>
    %cst_207 = arith.constant dense<0.000000e+00> : vector<1x512xf32>
    %623 = tpu.matmul %622, %531, %cst_207 {dimension_numbers = #tpu.dot_dimension_numbers<[1], [0], [0], [1], [0, 0, 1, 1], [], []>} : vector<1x128xbf16>, vector<128x512xbf16>, vector<1x512xf32> -> vector<1x512xf32>
    %624 = arith.addf %621, %623 : vector<1x512xf32>
    %625 = vector.extract_strided_slice %624 {offsets = [0, 0], sizes = [1, 128], strides = [1, 1]} : vector<1x512xf32> to vector<1x128xf32>
    %626 = arith.negf %625 : vector<1x128xf32>
    %627 = math.exp %626 : vector<1x128xf32>
    %cst_208 = arith.constant 1.000000e+00 : f32
    %628 = vector.broadcast %cst_208 : f32 to vector<1x128xf32>
    %629 = arith.addf %628, %627 : vector<1x128xf32>
    %630 = arith.divf %628, %629 : vector<1x128xf32>
    %631 = vector.extract_strided_slice %624 {offsets = [0, 128], sizes = [1, 128], strides = [1, 1]} : vector<1x512xf32> to vector<1x128xf32>
    %632 = arith.negf %631 : vector<1x128xf32>
    %633 = math.exp %632 : vector<1x128xf32>
    %cst_209 = arith.constant 1.000000e+00 : f32
    %634 = vector.broadcast %cst_209 : f32 to vector<1x128xf32>
    %635 = arith.addf %634, %633 : vector<1x128xf32>
    %636 = arith.divf %634, %635 : vector<1x128xf32>
    %637 = vector.extract_strided_slice %624 {offsets = [0, 256], sizes = [1, 128], strides = [1, 1]} : vector<1x512xf32> to vector<1x128xf32>
    %638 = math.tanh %637 : vector<1x128xf32>
    %639 = vector.extract_strided_slice %624 {offsets = [0, 384], sizes = [1, 128], strides = [1, 1]} : vector<1x512xf32> to vector<1x128xf32>
    %640 = arith.negf %639 : vector<1x128xf32>
    %641 = math.exp %640 : vector<1x128xf32>
    %cst_210 = arith.constant 1.000000e+00 : f32
    %642 = vector.broadcast %cst_210 : f32 to vector<1x128xf32>
    %643 = arith.addf %642, %641 : vector<1x128xf32>
    %644 = arith.divf %642, %643 : vector<1x128xf32>
    %645 = arith.mulf %636, %618 : vector<1x128xf32>
    %646 = arith.mulf %630, %638 : vector<1x128xf32>
    %647 = arith.addf %645, %646 : vector<1x128xf32>
    %648 = math.tanh %647 : vector<1x128xf32>
    %649 = arith.mulf %644, %648 : vector<1x128xf32>
    %650 = tpu.concatenate %562, %591, %620, %649 in 0 : vector<1x128xf32>, vector<1x128xf32>, vector<1x128xf32>, vector<1x128xf32> -> vector<4x128xf32>
    %651 = arith.truncf %650 : vector<4x128xf32> to vector<4x128xbf16>
    %c0_211 = arith.constant 0 : index
    %c0_212 = arith.constant 0 : index
    %652 = vector.load %arg20[%c0_211, %c0_212] : memref<128x128xbf16, #tpu.memory_space<vmem>>, vector<128x128xbf16>
    %cst_213 = arith.constant dense<0.000000e+00> : vector<4x128xf32>
    %653 = tpu.matmul %651, %652, %cst_213 {dimension_numbers = #tpu.dot_dimension_numbers<[1], [0], [0], [1], [0, 0, 1, 1], [], []>} : vector<4x128xbf16>, vector<128x128xbf16>, vector<4x128xf32> -> vector<4x128xf32>
    %c0_214 = arith.constant 0 : index
    %c0_215 = arith.constant 0 : index
    %654 = vector.load %arg21[%c0_214, %c0_215] : memref<1x128xf32, #tpu.memory_space<vmem>>, vector<1x128xf32>
    %655 = vector.broadcast %654 : vector<1x128xf32> to vector<4x128xf32>
    %656 = arith.addf %653, %655 : vector<4x128xf32>
    %c0_216 = arith.constant 0 : index
    %c0_217 = arith.constant 0 : index
    %657 = vector.load %arg22[%c0_216, %c0_217] : memref<4x128xf32, #tpu.memory_space<vmem>>, vector<4x128xf32>
    tpu.vector_store %arg22[%c0_216, %c0_217], %656 {strides = array<i32>} : memref<4x128xf32, #tpu.memory_space<vmem>>, vector<4x128xf32>,
    return
  }
}

</mosaic_0001>

<llo_original>
// kernel: bert_qpp_forward.1
$region0: #{bert_qpp_forward.1}
  #allocation0 [shape = 'u32[]', space=smem, size = 0x4, offset = 0x4, fixed_abs, tag = 'smem constant byte address 0x4 - core index']
  #allocation1 [shape = 'u32[72,128]{1,0:T(1,128)}', space=vmem, size = 0x9000, scoped, tag = 'internal scratch']
  %s0 = inlined_call_operand.vmem [shape: f32[32,128], index: 0, kind: input, shape index: {}]
  %s1 = inlined_call_operand.vmem [shape: f32[4,8], index: 1, kind: input, shape index: {}]
  %s2 = inlined_call_operand.vmem [shape: f32[1,128], index: 2, kind: input, shape index: {}]
  %s3 = inlined_call_operand.vmem [shape: f32[1,128], index: 3, kind: input, shape index: {}]
  %s4 = inlined_call_operand.vmem [shape: bf16[2,128,384], index: 4, kind: input, shape index: {}]
  %s5 = inlined_call_operand.vmem [shape: f32[2,1,384], index: 5, kind: input, shape index: {}]
  %s6 = inlined_call_operand.hbm [shape: bf16[2,128,128], index: 6, kind: input, shape index: {}]
  %s7 = inlined_call_operand.vmem [shape: f32[2,1,128], index: 7, kind: input, shape index: {}]
  %s8 = inlined_call_operand.vmem [shape: f32[2,1,128], index: 8, kind: input, shape index: {}]
  %s9 = inlined_call_operand.vmem [shape: f32[2,1,128], index: 9, kind: input, shape index: {}]
  %s10 = inlined_call_operand.vmem [shape: bf16[2,128,256], index: 10, kind: input, shape index: {}]
  %s11 = inlined_call_operand.vmem [shape: f32[2,1,256], index: 11, kind: input, shape index: {}]
  %s12 = inlined_call_operand.hbm [shape: bf16[2,256,128], index: 12, kind: input, shape index: {}]
  %s13 = inlined_call_operand.vmem [shape: f32[2,1,128], index: 13, kind: input, shape index: {}]
  %s14 = inlined_call_operand.vmem [shape: f32[2,1,128], index: 14, kind: input, shape index: {}]
  %s15 = inlined_call_operand.vmem [shape: f32[2,1,128], index: 15, kind: input, shape index: {}]
  %s16 = inlined_call_operand.vmem [shape: f32[4,128], index: 16, kind: input, shape index: {}]
  %s17 = inlined_call_operand.hbm [shape: bf16[128,512], index: 17, kind: input, shape index: {}]
  %s18 = inlined_call_operand.hbm [shape: bf16[128,512], index: 18, kind: input, shape index: {}]
  %s19 = inlined_call_operand.vmem [shape: f32[1,512], index: 19, kind: input, shape index: {}]
  %s20 = inlined_call_operand.vmem [shape: bf16[128,128], index: 20, kind: input, shape index: {}]
  %s21 = inlined_call_operand.vmem [shape: f32[1,128], index: 21, kind: input, shape index: {}]
  %s22 = inlined_call_operand.hbm [shape: f32[4,128], index: 22, kind: output, shape index: {}]
  %s23 = sld [smem:[#allocation0]]
  $region114: #{bert_qpp_forward.1} parent=0
    _
  %s25 = ssub.s32 1, %s23
  %s26 = scalar_select 0, %s25, %s23
  $region1: #{bert_qpp_forward.1} parent=0
    #allocation2 [shape = 'u8[65536]{0}', space=vmem, size = 0x10000, scoped, tag = 'input window, operand 6, single buffered']
    #allocation3 [shape = 's32[1]{0}', space=sflag, size = 0x4, scoped, tag = 'scoped memory for bert_qpp_forward.1']
    #allocation4 [shape = 's32[1]{0}', space=sflag, size = 0x4, scoped, tag = 'scoped memory for bert_qpp_forward.1']
    #allocation5 [shape = 'u8[131072]{0}', space=vmem, size = 0x20000, scoped, tag = 'input window, operand 12, single buffered']
    #allocation6 [shape = 's32[1]{0}', space=sflag, size = 0x4, scoped, tag = 'scoped memory for bert_qpp_forward.1']
    #allocation7 [shape = 'u8[131072]{0}', space=vmem, size = 0x20000, scoped, tag = 'input window, operand 17, single buffered']
    #allocation8 [shape = 'u8[131072]{0}', space=vmem, size = 0x20000, scoped, tag = 'input window, operand 18, single buffered']
    #allocation9 [shape = 's32[1]{0}', space=sflag, size = 0x4, scoped, tag = 'scoped memory for bert_qpp_forward.1']
    #allocation10 [shape = 'u8[2048]{0}', space=vmem, size = 0x800, scoped, tag = 'output window, operand 0, single buffered']
    %27 = vsyncpa [#allocation3], 0
    %28 = vsyncpa [#allocation6], 0
    %29 = vsyncpa [#allocation9], 0
    %30 = vsyncpa [#allocation4], 0
    // Predicated region
    $region2: #{bert_qpp_forward.1} parent=1 // pred_check
      _
    $region3: #{bert_qpp_forward.1} parent=1 // pred_check_branch
      %32 = sbr.rel (0) target = $region5
    $region4: #{bert_qpp_forward.1} parent=1 // pred_region
      _
    $region5: #{bert_qpp_forward.1} parent=1 // pred_fallthru
      _
    // Predicated region
    $region6: #{bert_qpp_forward.1} parent=1 // pred_check
      _
    $region7: #{bert_qpp_forward.1} parent=1 // pred_check_branch
      %34 = sbr.rel (0) target = $region9
    $region8: #{bert_qpp_forward.1} parent=1 // pred_region
      _
    $region9: #{bert_qpp_forward.1} parent=1 // pred_fallthru
      _
    // Predicated region
    $region10: #{bert_qpp_forward.1} parent=1 // pred_check
      _
    $region11: #{bert_qpp_forward.1} parent=1 // pred_check_branch
      %36 = sbr.rel (0) target = $region13
    $region12: #{bert_qpp_forward.1} parent=1 // pred_region
      _
    $region13: #{bert_qpp_forward.1} parent=1 // pred_fallthru
      _
    // Predicated region
    $region14: #{bert_qpp_forward.1} parent=1 // pred_check
      _
    $region15: #{bert_qpp_forward.1} parent=1 // pred_check_branch
      %38 = sbr.rel (0) target = $region17
    $region16: #{bert_qpp_forward.1} parent=1 // pred_region
      _
    $region17: #{bert_qpp_forward.1} parent=1 // pred_fallthru
      _
    // Predicated region
    $region18: #{bert_qpp_forward.1} parent=1 // pred_check
      _
    $region19: #{bert_qpp_forward.1} parent=1 // pred_check_branch
      %40 = sbr.rel (0) target = $region21
    $region20: #{bert_qpp_forward.1} parent=1 // pred_region
      _
    $region21: #{bert_qpp_forward.1} parent=1 // pred_fallthru
      _
    // Predicated region
    $region22: #{bert_qpp_forward.1} parent=1 // pred_check
      _
    $region23: #{bert_qpp_forward.1} parent=1 // pred_check_branch
      %42 = sbr.rel (0) target = $region25
    $region24: #{bert_qpp_forward.1} parent=1 // pred_region
      _
    $region25: #{bert_qpp_forward.1} parent=1 // pred_fallthru
      _
    // Predicated region
    $region26: #{bert_qpp_forward.1} parent=1 // pred_check
      _
    $region27: #{bert_qpp_forward.1} parent=1 // pred_check_branch
      %44 = sbr.rel (0) target = $region29
    $region28: #{bert_qpp_forward.1} parent=1 // pred_region
      %46 = vsyncadd [#allocation3], 0
      %s47 = sshll.u32 %s6, 4
      %s48 = int_to_ptr.hbm [resolvable:$true] %s47
      %s49 = sshll.u32 [#allocation2], 4
      %s50 = int_to_ptr.vmem [resolvable:$true] %s49
      %55 = dma.hbm_to_vmem [thread:$0]  %s48, 2048, %s50, [#allocation3], 64, 64, 4
    $region29: #{bert_qpp_forward.1} parent=1 // pred_fallthru
      _
    // Predicated region
    $region30: #{bert_qpp_forward.1} parent=1 // pred_check
      _
    $region31: #{bert_qpp_forward.1} parent=1 // pred_check_branch
      %57 = sbr.rel (0) target = $region33
    $region32: #{bert_qpp_forward.1} parent=1 // pred_region
      _
    $region33: #{bert_qpp_forward.1} parent=1 // pred_fallthru
      _
    // Predicated region
    $region34: #{bert_qpp_forward.1} parent=1 // pred_check
      _
    $region35: #{bert_qpp_forward.1} parent=1 // pred_check_branch
      %59 = sbr.rel (0) target = $region37
    $region36: #{bert_qpp_forward.1} parent=1 // pred_region
      _
    $region37: #{bert_qpp_forward.1} parent=1 // pred_fallthru
      _
    // Predicated region
    $region38: #{bert_qpp_forward.1} parent=1 // pred_check
      _
    $region39: #{bert_qpp_forward.1} parent=1 // pred_check_branch
      %61 = sbr.rel (0) target = $region41
    $region40: #{bert_qpp_forward.1} parent=1 // pred_region
      _
    $region41: #{bert_qpp_forward.1} parent=1 // pred_fallthru
      _
    // Predicated region
    $region42: #{bert_qpp_forward.1} parent=1 // pred_check
      _
    $region43: #{bert_qpp_forward.1} parent=1 // pred_check_branch
      %63 = sbr.rel (0) target = $region45
    $region44: #{bert_qpp_forward.1} parent=1 // pred_region
      _
    $region45: #{bert_qpp_forward.1} parent=1 // pred_fallthru
      _
    // Predicated region
    $region46: #{bert_qpp_forward.1} parent=1 // pred_check
      _
    $region47: #{bert_qpp_forward.1} parent=1 // pred_check_branch
      %65 = sbr.rel (0) target = $region49
    $region48: #{bert_qpp_forward.1} parent=1 // pred_region
      _
    $region49: #{bert_qpp_forward.1} parent=1 // pred_fallthru
      _
    // Predicated region
    $region50: #{bert_qpp_forward.1} parent=1 // pred_check
      _
    $region51: #{bert_qpp_forward.1} parent=1 // pred_check_branch
      %67 = sbr.rel (0) target = $region53
    $region52: #{bert_qpp_forward.1} parent=1 // pred_region
      %69 = vsyncadd [#allocation6], 0
      %s70 = sshll.u32 %s12, 4
      %s71 = int_to_ptr.hbm [resolvable:$true] %s70
      %s72 = sshll.u32 [#allocation5], 4
      %s73 = int_to_ptr.vmem [resolvable:$true] %s72
      %78 = dma.hbm_to_vmem [thread:$0]  %s71, 4096, %s73, [#allocation6], 64, 64, 4
    $region53: #{bert_qpp_forward.1} parent=1 // pred_fallthru
      _
    // Predicated region
    $region54: #{bert_qpp_forward.1} parent=1 // pred_check
      _
    $region55: #{bert_qpp_forward.1} parent=1 // pred_check_branch
      %80 = sbr.rel (0) target = $region57
    $region56: #{bert_qpp_forward.1} parent=1 // pred_region
      _
    $region57: #{bert_qpp_forward.1} parent=1 // pred_fallthru
      _
    // Predicated region
    $region58: #{bert_qpp_forward.1} parent=1 // pred_check
      _
    $region59: #{bert_qpp_forward.1} parent=1 // pred_check_branch
      %82 = sbr.rel (0) target = $region61
    $region60: #{bert_qpp_forward.1} parent=1 // pred_region
      _
    $region61: #{bert_qpp_forward.1} parent=1 // pred_fallthru
      _
    // Predicated region
    $region62: #{bert_qpp_forward.1} parent=1 // pred_check
      _
    $region63: #{bert_qpp_forward.1} parent=1 // pred_check_branch
      %84 = sbr.rel (0) target = $region65
    $region64: #{bert_qpp_forward.1} parent=1 // pred_region
      _
    $region65: #{bert_qpp_forward.1} parent=1 // pred_fallthru
      _
    // Predicated region
    $region66: #{bert_qpp_forward.1} parent=1 // pred_check
      _
    $region67: #{bert_qpp_forward.1} parent=1 // pred_check_branch
      %86 = sbr.rel (0) target = $region69
    $region68: #{bert_qpp_forward.1} parent=1 // pred_region
      _
    $region69: #{bert_qpp_forward.1} parent=1 // pred_fallthru
      _
    // Predicated region
    $region70: #{bert_qpp_forward.1} parent=1 // pred_check
      _
    $region71: #{bert_qpp_forward.1} parent=1 // pred_check_branch
      %88 = sbr.rel (0) target = $region73
    $region72: #{bert_qpp_forward.1} parent=1 // pred_region
      %90 = vsyncadd [#allocation6], 0
      %s91 = sshll.u32 %s17, 4
      %s92 = int_to_ptr.hbm [resolvable:$true] %s91
      %s93 = sshll.u32 [#allocation7], 4
      %s94 = int_to_ptr.vmem [resolvable:$true] %s93
      %99 = dma.hbm_to_vmem [thread:$0]  %s92, 4096, %s94, [#allocation6], 256, 256, 16
    $region73: #{bert_qpp_forward.1} parent=1 // pred_fallthru
      _
    // Predicated region
    $region74: #{bert_qpp_forward.1} parent=1 // pred_check
      _
    $region75: #{bert_qpp_forward.1} parent=1 // pred_check_branch
      %101 = sbr.rel (0) target = $region77
    $region76: #{bert_qpp_forward.1} parent=1 // pred_region
      %103 = vsyncadd [#allocation9], 0
      %s104 = sshll.u32 %s18, 4
      %s105 = int_to_ptr.hbm [resolvable:$true] %s104
      %s106 = sshll.u32 [#allocation8], 4
      %s107 = int_to_ptr.vmem [resolvable:$true] %s106
      %112 = dma.hbm_to_vmem [thread:$0]  %s105, 4096, %s107, [#allocation9], 256, 256, 16
    $region77: #{bert_qpp_forward.1} parent=1 // pred_fallthru
      _
    // Predicated region
    $region78: #{bert_qpp_forward.1} parent=1 // pred_check
      _
    $region79: #{bert_qpp_forward.1} parent=1 // pred_check_branch
      %114 = sbr.rel (0) target = $region81
    $region80: #{bert_qpp_forward.1} parent=1 // pred_region
      _
    $region81: #{bert_qpp_forward.1} parent=1 // pred_fallthru
      _
    // Predicated region
    $region82: #{bert_qpp_forward.1} parent=1 // pred_check
      _
    $region83: #{bert_qpp_forward.1} parent=1 // pred_check_branch
      %116 = sbr.rel (0) target = $region85
    $region84: #{bert_qpp_forward.1} parent=1 // pred_region
      _
    $region85: #{bert_qpp_forward.1} parent=1 // pred_fallthru
      _
    // Predicated region
    $region86: #{bert_qpp_forward.1} parent=1 // pred_check
      _
    $region87: #{bert_qpp_forward.1} parent=1 // pred_check_branch
      %118 = sbr.rel (0) target = $region89
    $region88: #{bert_qpp_forward.1} parent=1 // pred_region
      _
    $region89: #{bert_qpp_forward.1} parent=1 // pred_fallthru
      _
    // Predicated region
    $region90: #{bert_qpp_forward.1} parent=1 // pred_check
      _
    $region91: #{bert_qpp_forward.1} parent=1 // pred_check_branch
      %120 = sbr.rel (0) target = $region93
    $region92: #{bert_qpp_forward.1} parent=1 // pred_region
      %122 = dma.done [#allocation3], 2048
    $region93: #{bert_qpp_forward.1} parent=1 // pred_fallthru
      _
    // Predicated region
    $region94: #{bert_qpp_forward.1} parent=1 // pred_check
      _
    $region95: #{bert_qpp_forward.1} parent=1 // pred_check_branch
      %124 = sbr.rel (0) target = $region97
    $region96: #{bert_qpp_forward.1} parent=1 // pred_region
      %126 = dma.done [#allocation6], 4096
    $region97: #{bert_qpp_forward.1} parent=1 // pred_fallthru
      _
    // Predicated region
    $region98: #{bert_qpp_forward.1} parent=1 // pred_check
      _
    $region99: #{bert_qpp_forward.1} parent=1 // pred_check_branch
      %128 = sbr.rel (0) target = $region101
    $region100: #{bert_qpp_forward.1} parent=1 // pred_region
      %130 = dma.done [#allocation6], 4096
    $region101: #{bert_qpp_forward.1} parent=1 // pred_fallthru
      _
    // Predicated region
    $region102: #{bert_qpp_forward.1} parent=1 // pred_check
      _
    $region103: #{bert_qpp_forward.1} parent=1 // pred_check_branch
      %132 = sbr.rel (0) target = $region105
    $region104: #{bert_qpp_forward.1} parent=1 // pred_region
      %134 = dma.done [#allocation9], 4096
    $region105: #{bert_qpp_forward.1} parent=1 // pred_fallthru
      _
    %v136 = vld [vmem:[%s0] sm:$0xff]
    %v137 = vld [vmem:[%s0 + $0x8] sm:$0xff]
    %v138 = vld [vmem:[%s0 + $0x10] sm:$0xff]
    %v139 = vld [vmem:[%s0 + $0x18] sm:$0xff]
    %v140 = vld [vmem:[%s2] sm:$0x1]
    %v141 = vld [vmem:[%s3] sm:$0x1]
    %142 = vadd.xlane.f32.xlu0 %v136
    %v143 = vpop.xlane.xlu0 %142
    %144 = vadd.xlane.f32.xlu0 %v137
    %v145 = vpop.xlane.xlu0 %144
    %146 = vadd.xlane.f32.xlu0 %v138
    %v147 = vpop.xlane.xlu0 %146
    %148 = vadd.xlane.f32.xlu0 %v139
    %v149 = vpop.xlane.xlu0 %148
    %v150 = vrcp.pop 128.0
    %v151 = vmul.f32 128.0, %v150
    %v152 = vsub.f32 1.0, %v151
    %v153 = vmul.f32 %v150, %v152
    %v154 = vadd.f32 %v150, %v153
    %vm155 = vweird.f32 %v150
    %v156 = vsel %vm155, %v150, %v154
    %v157 = vmul.f32 %v143, %v156
    %v158 = vmul.f32 %v145, %v156
    %v159 = vmul.f32 %v147, %v156
    %v160 = vmul.f32 %v149, %v156
    %v161 = vsub.f32 %v136, %v157
    %v162 = vsub.f32 %v137, %v158
    %v163 = vsub.f32 %v138, %v159
    %v164 = vsub.f32 %v139, %v160
    %v165 = vmul.f32 %v161, %v161
    %v166 = vmul.f32 %v162, %v162
    %v167 = vmul.f32 %v163, %v163
    %v168 = vmul.f32 %v164, %v164
    %169 = vadd.xlane.f32.xlu0 %v165
    %v170 = vpop.xlane.xlu0 %169
    %171 = vadd.xlane.f32.xlu0 %v166
    %v172 = vpop.xlane.xlu0 %171
    %173 = vadd.xlane.f32.xlu0 %v167
    %v174 = vpop.xlane.xlu0 %173
    %175 = vadd.xlane.f32.xlu0 %v168
    %v176 = vpop.xlane.xlu0 %175
    %v177 = vmul.f32 %v170, %v156
    %v178 = vmul.f32 %v172, %v156
    %v179 = vmul.f32 %v174, %v156
    %v180 = vmul.f32 %v176, %v156
    %v181 = vadd.f32 %v177, 1e-12
    %v182 = vadd.f32 %v178, 1e-12
    %v183 = vadd.f32 %v179, 1e-12
    %v184 = vadd.f32 %v180, 1e-12
    %v185 = vrsqrt.pop %v181
    %v186 = vmul.f32 %v185, %v181
    %v187 = vmul.f32 %v186, %v185
    %v188 = vmul.f32 0.5, %v187
    %v189 = vsub.f32 1.5, %v188
    %v190 = vmul.f32 %v185, %v189
    %vm191 = vweird.f32 %v181
    %vm192 = vweird.f32 %v185
    %vm193 = vmor %vm191, %vm192
    %v194 = vsel %vm193, %v185, %v190
    %v195 = vrsqrt.pop %v182
    %v196 = vmul.f32 %v195, %v182
    %v197 = vmul.f32 %v196, %v195
    %v198 = vmul.f32 0.5, %v197
    %v199 = vsub.f32 1.5, %v198
    %v200 = vmul.f32 %v195, %v199
    %vm201 = vweird.f32 %v182
    %vm202 = vweird.f32 %v195
    %vm203 = vmor %vm201, %vm202
    %v204 = vsel %vm203, %v195, %v200
    %v205 = vrsqrt.pop %v183
    %v206 = vmul.f32 %v205, %v183
    %v207 = vmul.f32 %v206, %v205
    %v208 = vmul.f32 0.5, %v207
    %v209 = vsub.f32 1.5, %v208
    %v210 = vmul.f32 %v205, %v209
    %vm211 = vweird.f32 %v183
    %vm212 = vweird.f32 %v205
    %vm213 = vmor %vm211, %vm212
    %v214 = vsel %vm213, %v205, %v210
    %v215 = vrsqrt.pop %v184
    %v216 = vmul.f32 %v215, %v184
    %v217 = vmul.f32 %v216, %v215
    %v218 = vmul.f32 0.5, %v217
    %v219 = vsub.f32 1.5, %v218
    %v220 = vmul.f32 %v215, %v219
    %vm221 = vweird.f32 %v184
    %vm222 = vweird.f32 %v215
    %vm223 = vmor %vm221, %vm222
    %v224 = vsel %vm223, %v215, %v220
    %v225 = vmul.f32 %v161, %v194
    %v226 = vmul.f32 %v162, %v204
    %v227 = vmul.f32 %v163, %v214
    %v228 = vmul.f32 %v164, %v224
    %v230 = vperm.slane %v140, 0
    %v232 = vmul.f32 %v225, %v230
    %v233 = vmul.f32 %v226, %v230
    %v234 = vmul.f32 %v227, %v230
    %v235 = vmul.f32 %v228, %v230
    %v237 = vperm.slane %v141, 0
    %v239 = vadd.f32 %v232, %v237
    %v240 = vadd.f32 %v233, %v237
    %v241 = vadd.f32 %v234, %v237
    %v242 = vadd.f32 %v235, %v237
    %v243 = vld [vmem:[%s1] sm:$0xf]
    %v244 = vpack.c.bf16 %v240, %v239
    %v245 = vpack.c.bf16 %v242, %v241
    %v246 = vld [vmem:[%s4] sm:$0xff]
    %v247 = vld [vmem:[%s4 + $0x8] sm:$0xf]
    %v248 = vld [vmem:[%s4 + $0xc] sm:$0xff]
    %v249 = vld [vmem:[%s4 + $0x14] sm:$0xf]
    %v250 = vld [vmem:[%s4 + $0x18] sm:$0xff]
    %v251 = vld [vmem:[%s4 + $0x20] sm:$0xf]
    %v252 = vld [vmem:[%s4 + $0x24] sm:$0xff]
    %v253 = vld [vmem:[%s4 + $0x2c] sm:$0xf]
    %v254 = vld [vmem:[%s4 + $0x30] sm:$0xff]
    %v255 = vld [vmem:[%s4 + $0x38] sm:$0xf]
    %v256 = vld [vmem:[%s4 + $0x3c] sm:$0xff]
    %v257 = vld [vmem:[%s4 + $0x44] sm:$0xf]
    %v258 = vld [vmem:[%s4 + $0x48] sm:$0xff]
    %v259 = vld [vmem:[%s4 + $0x50] sm:$0xf]
    %v260 = vld [vmem:[%s4 + $0x54] sm:$0xff]
    %v261 = vld [vmem:[%s4 + $0x5c] sm:$0xf]
    %v262 = vld [vmem:[%s4 + $0x60] sm:$0xff]
    %v263 = vld [vmem:[%s4 + $0x68] sm:$0xf]
    %v264 = vld [vmem:[%s4 + $0x6c] sm:$0xff]
    %v265 = vld [vmem:[%s4 + $0x74] sm:$0xf]
    %v266 = vld [vmem:[%s4 + $0x78] sm:$0xff]
    %v267 = vld [vmem:[%s4 + $0x80] sm:$0xf]
    %v268 = vld [vmem:[%s4 + $0x84] sm:$0xff]
    %v269 = vld [vmem:[%s4 + $0x8c] sm:$0xf]
    %v270 = vld [vmem:[%s4 + $0x90] sm:$0xff]
    %v271 = vld [vmem:[%s4 + $0x98] sm:$0xf]
    %v272 = vld [vmem:[%s4 + $0x9c] sm:$0xff]
    %v273 = vld [vmem:[%s4 + $0xa4] sm:$0xf]
    %v274 = vld [vmem:[%s4 + $0xa8] sm:$0xff]
    %v275 = vld [vmem:[%s4 + $0xb0] sm:$0xf]
    %v276 = vld [vmem:[%s4 + $0xb4] sm:$0xff]
    %v277 = vld [vmem:[%s4 + $0xbc] sm:$0xf]
    %v278 = vld [vmem:[%s5] sm:$0x7]
    %v280 = vperm.slane %v278, 0
    %v281 = vperm.slane %v278, 1
    %v282 = vperm.slane %v278, 2
    %v318 = vunpack.c.l.b16 %v246
    %v319 = vunpack.c.h.b16 %v246
    %v320 = vunpack.c.l.b16 %v247
    %v321 = vunpack.c.l.b16 %v248
    %v322 = vunpack.c.h.b16 %v248
    %v323 = vunpack.c.l.b16 %v249
    %v324 = vunpack.c.l.b16 %v250
    %v325 = vunpack.c.h.b16 %v250
    %v326 = vunpack.c.l.b16 %v251
    %v327 = vunpack.c.l.b16 %v252
    %v328 = vunpack.c.h.b16 %v252
    %v329 = vunpack.c.l.b16 %v253
    %v330 = vunpack.c.l.b16 %v254
    %v331 = vunpack.c.h.b16 %v254
    %v332 = vunpack.c.l.b16 %v255
    %v333 = vunpack.c.l.b16 %v256
    %v334 = vunpack.c.h.b16 %v256
    %v335 = vunpack.c.l.b16 %v257
    %v336 = vunpack.c.l.b16 %v258
    %v337 = vunpack.c.h.b16 %v258
    %v338 = vunpack.c.l.b16 %v259
    %v339 = vunpack.c.l.b16 %v260
    %v340 = vunpack.c.h.b16 %v260
    %v341 = vunpack.c.l.b16 %v261
    %v342 = vunpack.c.l.b16 %v262
    %v343 = vunpack.c.h.b16 %v262
    %v344 = vunpack.c.l.b16 %v263
    %v345 = vunpack.c.l.b16 %v264
    %v346 = vunpack.c.h.b16 %v264
    %v347 = vunpack.c.l.b16 %v265
    %v348 = vunpack.c.l.b16 %v266
    %v349 = vunpack.c.h.b16 %v266
    %v350 = vunpack.c.l.b16 %v267
    %v351 = vunpack.c.l.b16 %v268
    %v352 = vunpack.c.h.b16 %v268
    %v353 = vunpack.c.l.b16 %v269
    %v354 = vunpack.c.l.b16 %v270
    %v355 = vunpack.c.h.b16 %v270
    %v356 = vunpack.c.l.b16 %v271
    %v357 = vunpack.c.l.b16 %v272
    %v358 = vunpack.c.h.b16 %v272
    %v359 = vunpack.c.l.b16 %v273
    %v360 = vunpack.c.l.b16 %v274
    %v361 = vunpack.c.h.b16 %v274
    %v362 = vunpack.c.l.b16 %v275
    %v363 = vunpack.c.l.b16 %v276
    %v364 = vunpack.c.h.b16 %v276
    %v365 = vunpack.c.l.b16 %v277
    %v366 = vpack.c.b16 %v321, %v318
    %v367 = vpack.c.b16 %v322, %v319
    %v368 = vpack.c.b16 %v323, %v320
    %v369 = vpack.c.b16 %v327, %v324
    %v370 = vpack.c.b16 %v328, %v325
    %v371 = vpack.c.b16 %v329, %v326
    %v372 = vpack.c.b16 %v333, %v330
    %v373 = vpack.c.b16 %v334, %v331
    %v374 = vpack.c.b16 %v335, %v332
    %v375 = vpack.c.b16 %v339, %v336
    %v376 = vpack.c.b16 %v340, %v337
    %v377 = vpack.c.b16 %v341, %v338
    %v378 = vpack.c.b16 %v345, %v342
    %v379 = vpack.c.b16 %v346, %v343
    %v380 = vpack.c.b16 %v347, %v344
    %v381 = vpack.c.b16 %v351, %v348
    %v382 = vpack.c.b16 %v352, %v349
    %v383 = vpack.c.b16 %v353, %v350
    %v384 = vpack.c.b16 %v357, %v354
    %v385 = vpack.c.b16 %v358, %v355
    %v386 = vpack.c.b16 %v359, %v356
    %v387 = vpack.c.b16 %v363, %v360
    %v388 = vpack.c.b16 %v364, %v361
    %v389 = vpack.c.b16 %v365, %v362
    %414 = vmatpush.bf16.msra.mxu0 %v387
    %415 = vmatpush.bf16.msra.mxu0 %v384
    %416 = vmatpush.bf16.msra.mxu0 %v381
    %417 = vmatpush.bf16.msra.mxu0 %v378
    %418 = vmatpush.bf16.msra.mxu0 %v375
    %419 = vmatpush.bf16.msra.mxu0 %v372
    %420 = vmatpush.bf16.msra.mxu0 %v369
    %421 = vmatpush.bf16.msra.mxu0 %v366
    %422 = vmatmul.bf16.gmra.mxu0 %v244
    %v423 = vpop.f32.mrf.mxu0
    %v424 = vadd.f32 %v280, %v423
    %v425 = vpop.f32.mrf.mxu0
    %v426 = vadd.f32 %v280, %v425
    %427 = vmatmul.bf16.gmra.mxu0 %v245
    %v428 = vpop.f32.mrf.mxu0
    %v429 = vadd.f32 %v280, %v428
    %v430 = vpop.f32.mrf.mxu0
    %v431 = vadd.f32 %v280, %v430
    %432 = vdwg.mxu0
    %433 = vmatpush.bf16.msra.mxu0 %v388
    %434 = vmatpush.bf16.msra.mxu0 %v385
    %435 = vmatpush.bf16.msra.mxu0 %v382
    %436 = vmatpush.bf16.msra.mxu0 %v379
    %437 = vmatpush.bf16.msra.mxu0 %v376
    %438 = vmatpush.bf16.msra.mxu0 %v373
    %439 = vmatpush.bf16.msra.mxu0 %v370
    %440 = vmatpush.bf16.msra.mxu0 %v367
    %441 = vmatmul.bf16.gmra.mxu0 %v244
    %v442 = vpop.f32.mrf.mxu0
    %v443 = vadd.f32 %v281, %v442
    %v444 = vpop.f32.mrf.mxu0
    %v445 = vadd.f32 %v281, %v444
    %446 = vmatmul.bf16.gmra.mxu0 %v245
    %v447 = vpop.f32.mrf.mxu0
    %v448 = vadd.f32 %v281, %v447
    %v449 = vpop.f32.mrf.mxu0
    %v450 = vadd.f32 %v281, %v449
    %451 = vdwg.mxu0
    %452 = vmatpush.bf16.msra.mxu0 %v389
    %453 = vmatpush.bf16.msra.mxu0 %v386
    %454 = vmatpush.bf16.msra.mxu0 %v383
    %455 = vmatpush.bf16.msra.mxu0 %v380
    %456 = vmatpush.bf16.msra.mxu0 %v377
    %457 = vmatpush.bf16.msra.mxu0 %v374
    %458 = vmatpush.bf16.msra.mxu0 %v371
    %459 = vmatpush.bf16.msra.mxu0 %v368
    %460 = vmatmul.bf16.gmra.mxu0 %v244
    %v461 = vpop.f32.mrf.mxu0
    %v462 = vadd.f32 %v282, %v461
    %v463 = vpop.f32.mrf.mxu0
    %v464 = vadd.f32 %v282, %v463
    %465 = vmatmul.bf16.gmra.mxu0 %v245
    %v466 = vpop.f32.mrf.mxu0
    %v467 = vadd.f32 %v282, %v466
    %v468 = vpop.f32.mrf.mxu0
    %v469 = vadd.f32 %v282, %v468
    %470 = vdwg.mxu0
    %v471 = vperm.slane %v243, 0
    %vm472 = vcmask 523264
    %v474 = vsel %vm472, %v424, 0
    %v477 = vsel %vm472, %v443, 0
    %479 = vmatpush.xpose.msra.mxu0 0.0
    %480 = vmatpush.xpose.msra.mxu0 0.0
    %481 = vmatpush.xpose.msra.mxu0 0.0
    %482 = vmatpush.xpose.msra.mxu0 0.0
    %483 = vmatpush.xpose.msra.mxu0 0.0
    %484 = vmatpush.xpose.msra.mxu0 0.0
    %485 = vmatpush.xpose.msra.mxu0 0.0
    %486 = vmatpush.xpose.msra.mxu0 0.0
    %487 = vmatpush.xpose.msra.mxu0 0.0
    %488 = vmatpush.xpose.msra.mxu0 0.0
    %489 = vmatpush.xpose.msra.mxu0 0.0
    %490 = vmatpush.xpose.msra.mxu0 0.0
    %491 = vmatpush.xpose.msra.mxu0 0.0
    %492 = vmatpush.xpose.msra.mxu0 0.0
    %493 = vmatpush.xpose.msra.mxu0 0.0
    %494 = vmatpush.xpose.msra.mxu0 %v477
    %495 = vmatmul.f32.gmra.mxu0 %v474
    %v496 = vpop.f32.mrf.mxu0
    %v497 = vadd.f32 %v471, %v496
    %498 = vdwg.mxu0
    %vm499 = vcmask 64512
    %v500 = vsel %vm499, %v497, -inf
    %501 = vmax.xlane.f32.xlu0 %v500
    %v502 = vpop.xlane.xlu0 %501
    %v503 = vsub.f32 %v497, %v502
    %v504 = vmul.f32 %v503, 1.442695
    %v505 = vpow.pop %v504
    %v506 = vsel %vm499, %v505, 0.0
    %507 = vadd.xlane.f32.xlu0 %v506
    %v508 = vpop.xlane.xlu0 %507
    %v509 = vrcp.pop %v508
    %v510 = vmul.f32 %v505, %v509
    %v512 = vsel %vm499, %v510, 0
    %514 = vmatpush.msra.mxu0 0.0
    %515 = vmatpush.msra.mxu0 0.0
    %516 = vmatpush.msra.mxu0 0.0
    %517 = vmatpush.msra.mxu0 0.0
    %518 = vmatpush.msra.mxu0 0.0
    %519 = vmatpush.msra.mxu0 0.0
    %520 = vmatpush.msra.mxu0 0.0
    %521 = vmatpush.msra.mxu0 0.0
    %522 = vmatpush.msra.mxu0 0.0
    %523 = vmatpush.msra.mxu0 0.0
    %524 = vmatpush.msra.mxu0 0.0
    %525 = vmatpush.msra.mxu0 0.0
    %526 = vmatpush.msra.mxu0 0.0
    %527 = vmatpush.msra.mxu0 0.0
    %528 = vmatpush.msra.mxu0 0.0
    %529 = vmatpush.msra.mxu0 %v462
    %530 = vmatmul.f32.gmra.mxu0 %v512
    %v531 = vpop.f32.mrf.mxu0
    %v532 = vadd.f32 0.0, %v531
    %533 = vdwg.mxu0
    %534 = vrot.lane.b32.xlu0 %v424, 64
    %v535 = vpop.permute.xlu0 %534
    %536 = vrot.lane.b32.xlu0 %v443, 64
    %v537 = vpop.permute.xlu0 %536
    %v538 = vsel %vm472, %v535, 0
    %v540 = vsel %vm472, %v537, 0
    %542 = vmatpush.xpose.msra.mxu0 0.0
    %543 = vmatpush.xpose.msra.mxu0 0.0
    %544 = vmatpush.xpose.msra.mxu0 0.0
    %545 = vmatpush.xpose.msra.mxu0 0.0
    %546 = vmatpush.xpose.msra.mxu0 0.0
    %547 = vmatpush.xpose.msra.mxu0 0.0
    %548 = vmatpush.xpose.msra.mxu0 0.0
    %549 = vmatpush.xpose.msra.mxu0 0.0
    %550 = vmatpush.xpose.msra.mxu0 0.0
    %551 = vmatpush.xpose.msra.mxu0 0.0
    %552 = vmatpush.xpose.msra.mxu0 0.0
    %553 = vmatpush.xpose.msra.mxu0 0.0
    %554 = vmatpush.xpose.msra.mxu0 0.0
    %555 = vmatpush.xpose.msra.mxu0 0.0
    %556 = vmatpush.xpose.msra.mxu0 0.0
    %557 = vmatpush.xpose.msra.mxu0 %v540
    %558 = vmatmul.f32.gmra.mxu0 %v538
    %v559 = vpop.f32.mrf.mxu0
    %v560 = vadd.f32 %v471, %v559
    %561 = vdwg.mxu0
    %v562 = vsel %vm499, %v560, -inf
    %563 = vmax.xlane.f32.xlu0 %v562
    %v564 = vpop.xlane.xlu0 %563
    %v565 = vsub.f32 %v560, %v564
    %v566 = vmul.f32 %v565, 1.442695
    %v567 = vpow.pop %v566
    %v568 = vsel %vm499, %v567, 0.0
    %569 = vadd.xlane.f32.xlu0 %v568
    %v570 = vpop.xlane.xlu0 %569
    %v571 = vrcp.pop %v570
    %v572 = vmul.f32 %v567, %v571
    %574 = vrot.lane.b32.xlu0 %v462, 64
    %v575 = vpop.permute.xlu0 %574
    %v578 = vsel %vm499, %v572, 0
    %580 = vmatpush.msra.mxu0 0.0
    %581 = vmatpush.msra.mxu0 0.0
    %582 = vmatpush.msra.mxu0 0.0
    %583 = vmatpush.msra.mxu0 0.0
    %584 = vmatpush.msra.mxu0 0.0
    %585 = vmatpush.msra.mxu0 0.0
    %586 = vmatpush.msra.mxu0 0.0
    %587 = vmatpush.msra.mxu0 0.0
    %588 = vmatpush.msra.mxu0 0.0
    %589 = vmatpush.msra.mxu0 0.0
    %590 = vmatpush.msra.mxu0 0.0
    %591 = vmatpush.msra.mxu0 0.0
    %592 = vmatpush.msra.mxu0 0.0
    %593 = vmatpush.msra.mxu0 0.0
    %594 = vmatpush.msra.mxu0 0.0
    %595 = vmatpush.msra.mxu0 %v575
    %596 = vmatmul.f32.gmra.mxu0 %v578
    %v597 = vpop.f32.mrf.mxu0
    %v598 = vadd.f32 0.0, %v597
    %599 = vdwg.mxu0
    %v600 = vperm.slane %v243, 1
    %v602 = vsel %vm472, %v426, 0
    %v605 = vsel %vm472, %v445, 0
    %607 = vmatpush.xpose.msra.mxu0 0.0
    %608 = vmatpush.xpose.msra.mxu0 0.0
    %609 = vmatpush.xpose.msra.mxu0 0.0
    %610 = vmatpush.xpose.msra.mxu0 0.0
    %611 = vmatpush.xpose.msra.mxu0 0.0
    %612 = vmatpush.xpose.msra.mxu0 0.0
    %613 = vmatpush.xpose.msra.mxu0 0.0
    %614 = vmatpush.xpose.msra.mxu0 0.0
    %615 = vmatpush.xpose.msra.mxu0 0.0
    %616 = vmatpush.xpose.msra.mxu0 0.0
    %617 = vmatpush.xpose.msra.mxu0 0.0
    %618 = vmatpush.xpose.msra.mxu0 0.0
    %619 = vmatpush.xpose.msra.mxu0 0.0
    %620 = vmatpush.xpose.msra.mxu0 0.0
    %621 = vmatpush.xpose.msra.mxu0 0.0
    %622 = vmatpush.xpose.msra.mxu0 %v605
    %623 = vmatmul.f32.gmra.mxu0 %v602
    %v624 = vpop.f32.mrf.mxu0
    %v625 = vadd.f32 %v600, %v624
    %626 = vdwg.mxu0
    %v627 = vsel %vm499, %v625, -inf
    %628 = vmax.xlane.f32.xlu0 %v627
    %v629 = vpop.xlane.xlu0 %628
    %v630 = vsub.f32 %v625, %v629
    %v631 = vmul.f32 %v630, 1.442695
    %v632 = vpow.pop %v631
    %v633 = vsel %vm499, %v632, 0.0
    %634 = vadd.xlane.f32.xlu0 %v633
    %v635 = vpop.xlane.xlu0 %634
    %v636 = vrcp.pop %v635
    %v637 = vmul.f32 %v632, %v636
    %v639 = vsel %vm499, %v637, 0
    %641 = vmatpush.msra.mxu0 0.0
    %642 = vmatpush.msra.mxu0 0.0
    %643 = vmatpush.msra.mxu0 0.0
    %644 = vmatpush.msra.mxu0 0.0
    %645 = vmatpush.msra.mxu0 0.0
    %646 = vmatpush.msra.mxu0 0.0
    %647 = vmatpush.msra.mxu0 0.0
    %648 = vmatpush.msra.mxu0 0.0
    %649 = vmatpush.msra.mxu0 0.0
    %650 = vmatpush.msra.mxu0 0.0
    %651 = vmatpush.msra.mxu0 0.0
    %652 = vmatpush.msra.mxu0 0.0
    %653 = vmatpush.msra.mxu0 0.0
    %654 = vmatpush.msra.mxu0 0.0
    %655 = vmatpush.msra.mxu0 0.0
    %656 = vmatpush.msra.mxu0 %v464
    %657 = vmatmul.f32.gmra.mxu0 %v639
    %v658 = vpop.f32.mrf.mxu0
    %v659 = vadd.f32 0.0, %v658
    %660 = vdwg.mxu0
    %661 = vrot.lane.b32.xlu0 %v426, 64
    %v662 = vpop.permute.xlu0 %661
    %663 = vrot.lane.b32.xlu0 %v445, 64
    %v664 = vpop.permute.xlu0 %663
    %v665 = vsel %vm472, %v662, 0
    %v667 = vsel %vm472, %v664, 0
    %669 = vmatpush.xpose.msra.mxu0 0.0
    %670 = vmatpush.xpose.msra.mxu0 0.0
    %671 = vmatpush.xpose.msra.mxu0 0.0
    %672 = vmatpush.xpose.msra.mxu0 0.0
    %673 = vmatpush.xpose.msra.mxu0 0.0
    %674 = vmatpush.xpose.msra.mxu0 0.0
    %675 = vmatpush.xpose.msra.mxu0 0.0
    %676 = vmatpush.xpose.msra.mxu0 0.0
    %677 = vmatpush.xpose.msra.mxu0 0.0
    %678 = vmatpush.xpose.msra.mxu0 0.0
    %679 = vmatpush.xpose.msra.mxu0 0.0
    %680 = vmatpush.xpose.msra.mxu0 0.0
    %681 = vmatpush.xpose.msra.mxu0 0.0
    %682 = vmatpush.xpose.msra.mxu0 0.0
    %683 = vmatpush.xpose.msra.mxu0 0.0
    %684 = vmatpush.xpose.msra.mxu0 %v667
    %685 = vmatmul.f32.gmra.mxu0 %v665
    %v686 = vpop.f32.mrf.mxu0
    %v687 = vadd.f32 %v600, %v686
    %688 = vdwg.mxu0
    %v689 = vsel %vm499, %v687, -inf
    %690 = vmax.xlane.f32.xlu0 %v689
    %v691 = vpop.xlane.xlu0 %690
    %v692 = vsub.f32 %v687, %v691
    %v693 = vmul.f32 %v692, 1.442695
    %v694 = vpow.pop %v693
    %v695 = vsel %vm499, %v694, 0.0
    %696 = vadd.xlane.f32.xlu0 %v695
    %v697 = vpop.xlane.xlu0 %696
    %v698 = vrcp.pop %v697
    %v699 = vmul.f32 %v694, %v698
    %701 = vrot.lane.b32.xlu0 %v464, 64
    %v702 = vpop.permute.xlu0 %701
    %v705 = vsel %vm499, %v699, 0
    %707 = vmatpush.msra.mxu0 0.0
    %708 = vmatpush.msra.mxu0 0.0
    %709 = vmatpush.msra.mxu0 0.0
    %710 = vmatpush.msra.mxu0 0.0
    %711 = vmatpush.msra.mxu0 0.0
    %712 = vmatpush.msra.mxu0 0.0
    %713 = vmatpush.msra.mxu0 0.0
    %714 = vmatpush.msra.mxu0 0.0
    %715 = vmatpush.msra.mxu0 0.0
    %716 = vmatpush.msra.mxu0 0.0
    %717 = vmatpush.msra.mxu0 0.0
    %718 = vmatpush.msra.mxu0 0.0
    %719 = vmatpush.msra.mxu0 0.0
    %720 = vmatpush.msra.mxu0 0.0
    %721 = vmatpush.msra.mxu0 0.0
    %722 = vmatpush.msra.mxu0 %v702
    %723 = vmatmul.f32.gmra.mxu0 %v705
    %v724 = vpop.f32.mrf.mxu0
    %v725 = vadd.f32 0.0, %v724
    %726 = vdwg.mxu0
    %v727 = vperm.slane %v243, 2
    %v729 = vsel %vm472, %v429, 0
    %v732 = vsel %vm472, %v448, 0
    %734 = vmatpush.xpose.msra.mxu0 0.0
    %735 = vmatpush.xpose.msra.mxu0 0.0
    %736 = vmatpush.xpose.msra.mxu0 0.0
    %737 = vmatpush.xpose.msra.mxu0 0.0
    %738 = vmatpush.xpose.msra.mxu0 0.0
    %739 = vmatpush.xpose.msra.mxu0 0.0
    %740 = vmatpush.xpose.msra.mxu0 0.0
    %741 = vmatpush.xpose.msra.mxu0 0.0
    %742 = vmatpush.xpose.msra.mxu0 0.0
    %743 = vmatpush.xpose.msra.mxu0 0.0
    %744 = vmatpush.xpose.msra.mxu0 0.0
    %745 = vmatpush.xpose.msra.mxu0 0.0
    %746 = vmatpush.xpose.msra.mxu0 0.0
    %747 = vmatpush.xpose.msra.mxu0 0.0
    %748 = vmatpush.xpose.msra.mxu0 0.0
    %749 = vmatpush.xpose.msra.mxu0 %v732
    %750 = vmatmul.f32.gmra.mxu0 %v729
    %v751 = vpop.f32.mrf.mxu0
    %v752 = vadd.f32 %v727, %v751
    %753 = vdwg.mxu0
    %v754 = vsel %vm499, %v752, -inf
    %755 = vmax.xlane.f32.xlu0 %v754
    %v756 = vpop.xlane.xlu0 %755
    %v757 = vsub.f32 %v752, %v756
    %v758 = vmul.f32 %v757, 1.442695
    %v759 = vpow.pop %v758
    %v760 = vsel %vm499, %v759, 0.0
    %761 = vadd.xlane.f32.xlu0 %v760
    %v762 = vpop.xlane.xlu0 %761
    %v763 = vrcp.pop %v762
    %v764 = vmul.f32 %v759, %v763
    %v766 = vsel %vm499, %v764, 0
    %768 = vmatpush.msra.mxu0 0.0
    %769 = vmatpush.msra.mxu0 0.0
    %770 = vmatpush.msra.mxu0 0.0
    %771 = vmatpush.msra.mxu0 0.0
    %772 = vmatpush.msra.mxu0 0.0
    %773 = vmatpush.msra.mxu0 0.0
    %774 = vmatpush.msra.mxu0 0.0
    %775 = vmatpush.msra.mxu0 0.0
    %776 = vmatpush.msra.mxu0 0.0
    %777 = vmatpush.msra.mxu0 0.0
    %778 = vmatpush.msra.mxu0 0.0
    %779 = vmatpush.msra.mxu0 0.0
    %780 = vmatpush.msra.mxu0 0.0
    %781 = vmatpush.msra.mxu0 0.0
    %782 = vmatpush.msra.mxu0 0.0
    %783 = vmatpush.msra.mxu0 %v467
    %784 = vmatmul.f32.gmra.mxu0 %v766
    %v785 = vpop.f32.mrf.mxu0
    %v786 = vadd.f32 0.0, %v785
    %787 = vdwg.mxu0
    %788 = vrot.lane.b32.xlu0 %v429, 64
    %v789 = vpop.permute.xlu0 %788
    %790 = vrot.lane.b32.xlu0 %v448, 64
    %v791 = vpop.permute.xlu0 %790
    %v792 = vsel %vm472, %v789, 0
    %v794 = vsel %vm472, %v791, 0
    %796 = vmatpush.xpose.msra.mxu0 0.0
    %797 = vmatpush.xpose.msra.mxu0 0.0
    %798 = vmatpush.xpose.msra.mxu0 0.0
    %799 = vmatpush.xpose.msra.mxu0 0.0
    %800 = vmatpush.xpose.msra.mxu0 0.0
    %801 = vmatpush.xpose.msra.mxu0 0.0
    %802 = vmatpush.xpose.msra.mxu0 0.0
    %803 = vmatpush.xpose.msra.mxu0 0.0
    %804 = vmatpush.xpose.msra.mxu0 0.0
    %805 = vmatpush.xpose.msra.mxu0 0.0
    %806 = vmatpush.xpose.msra.mxu0 0.0
    %807 = vmatpush.xpose.msra.mxu0 0.0
    %808 = vmatpush.xpose.msra.mxu0 0.0
    %809 = vmatpush.xpose.msra.mxu0 0.0
    %810 = vmatpush.xpose.msra.mxu0 0.0
    %811 = vmatpush.xpose.msra.mxu0 %v794
    %812 = vmatmul.f32.gmra.mxu0 %v792
    %v813 = vpop.f32.mrf.mxu0
    %v814 = vadd.f32 %v727, %v813
    %815 = vdwg.mxu0
    %v816 = vsel %vm499, %v814, -inf
    %817 = vmax.xlane.f32.xlu0 %v816
    %v818 = vpop.xlane.xlu0 %817
    %v819 = vsub.f32 %v814, %v818
    %v820 = vmul.f32 %v819, 1.442695
    %v821 = vpow.pop %v820
    %v822 = vsel %vm499, %v821, 0.0
    %823 = vadd.xlane.f32.xlu0 %v822
    %v824 = vpop.xlane.xlu0 %823
    %v825 = vrcp.pop %v824
    %v826 = vmul.f32 %v821, %v825
    %828 = vrot.lane.b32.xlu0 %v467, 64
    %v829 = vpop.permute.xlu0 %828
    %v832 = vsel %vm499, %v826, 0
    %834 = vmatpush.msra.mxu0 0.0
    %835 = vmatpush.msra.mxu0 0.0
    %836 = vmatpush.msra.mxu0 0.0
    %837 = vmatpush.msra.mxu0 0.0
    %838 = vmatpush.msra.mxu0 0.0
    %839 = vmatpush.msra.mxu0 0.0
    %840 = vmatpush.msra.mxu0 0.0
    %841 = vmatpush.msra.mxu0 0.0
    %842 = vmatpush.msra.mxu0 0.0
    %843 = vmatpush.msra.mxu0 0.0
    %844 = vmatpush.msra.mxu0 0.0
    %845 = vmatpush.msra.mxu0 0.0
    %846 = vmatpush.msra.mxu0 0.0
    %847 = vmatpush.msra.mxu0 0.0
    %848 = vmatpush.msra.mxu0 0.0
    %849 = vmatpush.msra.mxu0 %v829
    %850 = vmatmul.f32.gmra.mxu0 %v832
    %v851 = vpop.f32.mrf.mxu0
    %v852 = vadd.f32 0.0, %v851
    %853 = vdwg.mxu0
    %v854 = vperm.slane %v243, 3
    %v856 = vsel %vm472, %v431, 0
    %v859 = vsel %vm472, %v450, 0
    %861 = vmatpush.xpose.msra.mxu0 0.0
    %862 = vmatpush.xpose.msra.mxu0 0.0
    %863 = vmatpush.xpose.msra.mxu0 0.0
    %864 = vmatpush.xpose.msra.mxu0 0.0
    %865 = vmatpush.xpose.msra.mxu0 0.0
    %866 = vmatpush.xpose.msra.mxu0 0.0
    %867 = vmatpush.xpose.msra.mxu0 0.0
    %868 = vmatpush.xpose.msra.mxu0 0.0
    %869 = vmatpush.xpose.msra.mxu0 0.0
    %870 = vmatpush.xpose.msra.mxu0 0.0
    %871 = vmatpush.xpose.msra.mxu0 0.0
    %872 = vmatpush.xpose.msra.mxu0 0.0
    %873 = vmatpush.xpose.msra.mxu0 0.0
    %874 = vmatpush.xpose.msra.mxu0 0.0
    %875 = vmatpush.xpose.msra.mxu0 0.0
    %876 = vmatpush.xpose.msra.mxu0 %v859
    %877 = vmatmul.f32.gmra.mxu0 %v856
    %v878 = vpop.f32.mrf.mxu0
    %v879 = vadd.f32 %v854, %v878
    %880 = vdwg.mxu0
    %v881 = vsel %vm499, %v879, -inf
    %882 = vmax.xlane.f32.xlu0 %v881
    %v883 = vpop.xlane.xlu0 %882
    %v884 = vsub.f32 %v879, %v883
    %v885 = vmul.f32 %v884, 1.442695
    %v886 = vpow.pop %v885
    %v887 = vsel %vm499, %v886, 0.0
    %888 = vadd.xlane.f32.xlu0 %v887
    %v889 = vpop.xlane.xlu0 %888
    %v890 = vrcp.pop %v889
    %v891 = vmul.f32 %v886, %v890
    %v893 = vsel %vm499, %v891, 0
    %895 = vmatpush.msra.mxu0 0.0
    %896 = vmatpush.msra.mxu0 0.0
    %897 = vmatpush.msra.mxu0 0.0
    %898 = vmatpush.msra.mxu0 0.0
    %899 = vmatpush.msra.mxu0 0.0
    %900 = vmatpush.msra.mxu0 0.0
    %901 = vmatpush.msra.mxu0 0.0
    %902 = vmatpush.msra.mxu0 0.0
    %903 = vmatpush.msra.mxu0 0.0
    %904 = vmatpush.msra.mxu0 0.0
    %905 = vmatpush.msra.mxu0 0.0
    %906 = vmatpush.msra.mxu0 0.0
    %907 = vmatpush.msra.mxu0 0.0
    %908 = vmatpush.msra.mxu0 0.0
    %909 = vmatpush.msra.mxu0 0.0
    %910 = vmatpush.msra.mxu0 %v469
    %911 = vmatmul.f32.gmra.mxu0 %v893
    %v912 = vpop.f32.mrf.mxu0
    %v913 = vadd.f32 0.0, %v912
    %914 = vdwg.mxu0
    %915 = vrot.lane.b32.xlu0 %v431, 64
    %v916 = vpop.permute.xlu0 %915
    %917 = vrot.lane.b32.xlu0 %v450, 64
    %v918 = vpop.permute.xlu0 %917
    %v919 = vsel %vm472, %v916, 0
    %v921 = vsel %vm472, %v918, 0
    %923 = vmatpush.xpose.msra.mxu0 0.0
    %924 = vmatpush.xpose.msra.mxu0 0.0
    %925 = vmatpush.xpose.msra.mxu0 0.0
    %926 = vmatpush.xpose.msra.mxu0 0.0
    %927 = vmatpush.xpose.msra.mxu0 0.0
    %928 = vmatpush.xpose.msra.mxu0 0.0
    %929 = vmatpush.xpose.msra.mxu0 0.0
    %930 = vmatpush.xpose.msra.mxu0 0.0
    %931 = vmatpush.xpose.msra.mxu0 0.0
    %932 = vmatpush.xpose.msra.mxu0 0.0
    %933 = vmatpush.xpose.msra.mxu0 0.0
    %934 = vmatpush.xpose.msra.mxu0 0.0
    %935 = vmatpush.xpose.msra.mxu0 0.0
    %936 = vmatpush.xpose.msra.mxu0 0.0
    %937 = vmatpush.xpose.msra.mxu0 0.0
    %938 = vmatpush.xpose.msra.mxu0 %v921
    %939 = vmatmul.f32.gmra.mxu0 %v919
    %v940 = vpop.f32.mrf.mxu0
    %v941 = vadd.f32 %v854, %v940
    %942 = vdwg.mxu0
    %v943 = vsel %vm499, %v941, -inf
    %944 = vmax.xlane.f32.xlu0 %v943
    %v945 = vpop.xlane.xlu0 %944
    %v946 = vsub.f32 %v941, %v945
    %v947 = vmul.f32 %v946, 1.442695
    %v948 = vpow.pop %v947
    %v949 = vsel %vm499, %v948, 0.0
    %950 = vadd.xlane.f32.xlu0 %v949
    %v951 = vpop.xlane.xlu0 %950
    %v952 = vrcp.pop %v951
    %v953 = vmul.f32 %v948, %v952
    %955 = vrot.lane.b32.xlu0 %v469, 64
    %v956 = vpop.permute.xlu0 %955
    %v959 = vsel %vm499, %v953, 0
    %961 = vmatpush.msra.mxu0 0.0
    %962 = vmatpush.msra.mxu0 0.0
    %963 = vmatpush.msra.mxu0 0.0
    %964 = vmatpush.msra.mxu0 0.0
    %965 = vmatpush.msra.mxu0 0.0
    %966 = vmatpush.msra.mxu0 0.0
    %967 = vmatpush.msra.mxu0 0.0
    %968 = vmatpush.msra.mxu0 0.0
    %969 = vmatpush.msra.mxu0 0.0
    %970 = vmatpush.msra.mxu0 0.0
    %971 = vmatpush.msra.mxu0 0.0
    %972 = vmatpush.msra.mxu0 0.0
    %973 = vmatpush.msra.mxu0 0.0
    %974 = vmatpush.msra.mxu0 0.0
    %975 = vmatpush.msra.mxu0 0.0
    %976 = vmatpush.msra.mxu0 %v956
    %977 = vmatmul.f32.gmra.mxu0 %v959
    %v978 = vpop.f32.mrf.mxu0
    %v979 = vadd.f32 0.0, %v978
    %980 = vdwg.mxu0
    %v981 = vld [vmem:[#allocation2] sm:$0xf]
    %v982 = vld [vmem:[#allocation2 + $0x4] sm:$0xf]
    %v983 = vld [vmem:[#allocation2 + $0x8] sm:$0xf]
    %v984 = vld [vmem:[#allocation2 + $0xc] sm:$0xf]
    %v985 = vld [vmem:[#allocation2 + $0x10] sm:$0xf]
    %v986 = vld [vmem:[#allocation2 + $0x14] sm:$0xf]
    %v987 = vld [vmem:[#allocation2 + $0x18] sm:$0xf]
    %v988 = vld [vmem:[#allocation2 + $0x1c] sm:$0xf]
    %v989 = vld [vmem:[#allocation2 + $0x20] sm:$0xf]
    %v990 = vld [vmem:[#allocation2 + $0x24] sm:$0xf]
    %v991 = vld [vmem:[#allocation2 + $0x28] sm:$0xf]
    %v992 = vld [vmem:[#allocation2 + $0x2c] sm:$0xf]
    %v993 = vld [vmem:[#allocation2 + $0x30] sm:$0xf]
    %v994 = vld [vmem:[#allocation2 + $0x34] sm:$0xf]
    %v995 = vld [vmem:[#allocation2 + $0x38] sm:$0xf]
    %v996 = vld [vmem:[#allocation2 + $0x3c] sm:$0xf]
    %v997 = vld [vmem:[%s7] sm:$0x1]
    %v998 = vpack.c.bf16 %v659, %v532
    %v999 = vpack.c.bf16 %v913, %v786
    %v1008 = vunpack.c.l.b16 %v981
    %v1009 = vunpack.c.l.b16 %v982
    %v1010 = vunpack.c.l.b16 %v983
    %v1011 = vunpack.c.l.b16 %v984
    %v1012 = vunpack.c.l.b16 %v985
    %v1013 = vunpack.c.l.b16 %v986
    %v1014 = vunpack.c.l.b16 %v987
    %v1015 = vunpack.c.l.b16 %v988
    %v1016 = vpack.c.b16 %v1009, %v1008
    %v1017 = vpack.c.b16 %v1011, %v1010
    %v1018 = vpack.c.b16 %v1013, %v1012
    %v1019 = vpack.c.b16 %v1015, %v1014
    %v1025 = vsel %vm472, %v998, 0
    %v1028 = vsel %vm472, %v999, 0
    %1030 = vmatpush.bf16.msra.mxu0 0
    %1031 = vmatpush.bf16.msra.mxu0 0
    %1032 = vmatpush.bf16.msra.mxu0 0
    %1033 = vmatpush.bf16.msra.mxu0 0
    %1034 = vmatpush.bf16.msra.mxu0 %v1019
    %1035 = vmatpush.bf16.msra.mxu0 %v1018
    %1036 = vmatpush.bf16.msra.mxu0 %v1017
    %1037 = vmatpush.bf16.msra.mxu0 %v1016
    %1038 = vmatmul.bf16.gmra.mxu0 %v1025
    %v1039 = vpop.f32.mrf.mxu0
    %v1040 = vadd.f32 0.0, %v1039
    %v1041 = vpop.f32.mrf.mxu0
    %v1042 = vadd.f32 0.0, %v1041
    %1043 = vmatmul.bf16.gmra.mxu0 %v1028
    %v1044 = vpop.f32.mrf.mxu0
    %v1045 = vadd.f32 0.0, %v1044
    %v1046 = vpop.f32.mrf.mxu0
    %v1047 = vadd.f32 0.0, %v1046
    %1048 = vdwg.mxu0
    %v1050 = vperm.slane %v997, 0
    %v1052 = vadd.f32 %v1050, %v1040
    %v1053 = vadd.f32 %v1050, %v1042
    %v1054 = vadd.f32 %v1050, %v1045
    %v1055 = vadd.f32 %v1050, %v1047
    %v1056 = vpack.c.bf16 %v725, %v598
    %v1057 = vpack.c.bf16 %v979, %v852
    %v1066 = vunpack.c.l.b16 %v989
    %v1067 = vunpack.c.l.b16 %v990
    %v1068 = vunpack.c.l.b16 %v991
    %v1069 = vunpack.c.l.b16 %v992
    %v1070 = vunpack.c.l.b16 %v993
    %v1071 = vunpack.c.l.b16 %v994
    %v1072 = vunpack.c.l.b16 %v995
    %v1073 = vunpack.c.l.b16 %v996
    %v1074 = vpack.c.b16 %v1067, %v1066
    %v1075 = vpack.c.b16 %v1069, %v1068
    %v1076 = vpack.c.b16 %v1071, %v1070
    %v1077 = vpack.c.b16 %v1073, %v1072
    %v1083 = vsel %vm472, %v1056, 0
    %v1086 = vsel %vm472, %v1057, 0
    %1088 = vmatpush.bf16.msra.mxu0 0
    %1089 = vmatpush.bf16.msra.mxu0 0
    %1090 = vmatpush.bf16.msra.mxu0 0
    %1091 = vmatpush.bf16.msra.mxu0 0
    %1092 = vmatpush.bf16.msra.mxu0 %v1077
    %1093 = vmatpush.bf16.msra.mxu0 %v1076
    %1094 = vmatpush.bf16.msra.mxu0 %v1075
    %1095 = vmatpush.bf16.msra.mxu0 %v1074
    %1096 = vmatmul.bf16.gmra.mxu0 %v1083
    %v1097 = vpop.f32.mrf.mxu0
    %v1098 = vadd.f32 0.0, %v1097
    %v1099 = vpop.f32.mrf.mxu0
    %v1100 = vadd.f32 0.0, %v1099
    %1101 = vmatmul.bf16.gmra.mxu0 %v1086
    %v1102 = vpop.f32.mrf.mxu0
    %v1103 = vadd.f32 0.0, %v1102
    %v1104 = vpop.f32.mrf.mxu0
    %v1105 = vadd.f32 0.0, %v1104
    %1106 = vdwg.mxu0
    %v1107 = vadd.f32 %v1052, %v1098
    %v1108 = vadd.f32 %v1053, %v1100
    %v1109 = vadd.f32 %v1054, %v1103
    %v1110 = vadd.f32 %v1055, %v1105
    %v1111 = vadd.f32 %v239, %v1107
    %v1112 = vadd.f32 %v240, %v1108
    %v1113 = vadd.f32 %v241, %v1109
    %v1114 = vadd.f32 %v242, %v1110
    %v1115 = vld [vmem:[%s8] sm:$0x1]
    %v1116 = vld [vmem:[%s9] sm:$0x1]
    %1117 = vadd.xlane.f32.xlu0 %v1111
    %v1118 = vpop.xlane.xlu0 %1117
    %1119 = vadd.xlane.f32.xlu0 %v1112
    %v1120 = vpop.xlane.xlu0 %1119
    %1121 = vadd.xlane.f32.xlu0 %v1113
    %v1122 = vpop.xlane.xlu0 %1121
    %1123 = vadd.xlane.f32.xlu0 %v1114
    %v1124 = vpop.xlane.xlu0 %1123
    %v1125 = vmul.f32 %v1118, %v156
    %v1126 = vmul.f32 %v1120, %v156
    %v1127 = vmul.f32 %v1122, %v156
    %v1128 = vmul.f32 %v1124, %v156
    %v1129 = vsub.f32 %v1111, %v1125
    %v1130 = vsub.f32 %v1112, %v1126
    %v1131 = vsub.f32 %v1113, %v1127
    %v1132 = vsub.f32 %v1114, %v1128
    %v1133 = vmul.f32 %v1129, %v1129
    %v1134 = vmul.f32 %v1130, %v1130
    %v1135 = vmul.f32 %v1131, %v1131
    %v1136 = vmul.f32 %v1132, %v1132
    %1137 = vadd.xlane.f32.xlu0 %v1133
    %v1138 = vpop.xlane.xlu0 %1137
    %1139 = vadd.xlane.f32.xlu0 %v1134
    %v1140 = vpop.xlane.xlu0 %1139
    %1141 = vadd.xlane.f32.xlu0 %v1135
    %v1142 = vpop.xlane.xlu0 %1141
    %1143 = vadd.xlane.f32.xlu0 %v1136
    %v1144 = vpop.xlane.xlu0 %1143
    %v1145 = vmul.f32 %v1138, %v156
    %v1146 = vmul.f32 %v1140, %v156
    %v1147 = vmul.f32 %v1142, %v156
    %v1148 = vmul.f32 %v1144, %v156
    %v1149 = vadd.f32 %v1145, 1e-12
    %v1150 = vadd.f32 %v1146, 1e-12
    %v1151 = vadd.f32 %v1147, 1e-12
    %v1152 = vadd.f32 %v1148, 1e-12
    %v1153 = vrsqrt.pop %v1149
    %v1154 = vmul.f32 %v1153, %v1149
    %v1155 = vmul.f32 %v1154, %v1153
    %v1156 = vmul.f32 0.5, %v1155
    %v1157 = vsub.f32 1.5, %v1156
    %v1158 = vmul.f32 %v1153, %v1157
    %vm1159 = vweird.f32 %v1149
    %vm1160 = vweird.f32 %v1153
    %vm1161 = vmor %vm1159, %vm1160
    %v1162 = vsel %vm1161, %v1153, %v1158
    %v1163 = vrsqrt.pop %v1150
    %v1164 = vmul.f32 %v1163, %v1150
    %v1165 = vmul.f32 %v1164, %v1163
    %v1166 = vmul.f32 0.5, %v1165
    %v1167 = vsub.f32 1.5, %v1166
    %v1168 = vmul.f32 %v1163, %v1167
    %vm1169 = vweird.f32 %v1150
    %vm1170 = vweird.f32 %v1163
    %vm1171 = vmor %vm1169, %vm1170
    %v1172 = vsel %vm1171, %v1163, %v1168
    %v1173 = vrsqrt.pop %v1151
    %v1174 = vmul.f32 %v1173, %v1151
    %v1175 = vmul.f32 %v1174, %v1173
    %v1176 = vmul.f32 0.5, %v1175
    %v1177 = vsub.f32 1.5, %v1176
    %v1178 = vmul.f32 %v1173, %v1177
    %vm1179 = vweird.f32 %v1151
    %vm1180 = vweird.f32 %v1173
    %vm1181 = vmor %vm1179, %vm1180
    %v1182 = vsel %vm1181, %v1173, %v1178
    %v1183 = vrsqrt.pop %v1152
    %v1184 = vmul.f32 %v1183, %v1152
    %v1185 = vmul.f32 %v1184, %v1183
    %v1186 = vmul.f32 0.5, %v1185
    %v1187 = vsub.f32 1.5, %v1186
    %v1188 = vmul.f32 %v1183, %v1187
    %vm1189 = vweird.f32 %v1152
    %vm1190 = vweird.f32 %v1183
    %vm1191 = vmor %vm1189, %vm1190
    %v1192 = vsel %vm1191, %v1183, %v1188
    %v1193 = vmul.f32 %v1129, %v1162
    %v1194 = vmul.f32 %v1130, %v1172
    %v1195 = vmul.f32 %v1131, %v1182
    %v1196 = vmul.f32 %v1132, %v1192
    %v1198 = vperm.slane %v1115, 0
    %v1200 = vmul.f32 %v1193, %v1198
    %v1201 = vmul.f32 %v1194, %v1198
    %v1202 = vmul.f32 %v1195, %v1198
    %v1203 = vmul.f32 %v1196, %v1198
    %v1205 = vperm.slane %v1116, 0
    %v1207 = vadd.f32 %v1200, %v1205
    %v1208 = vadd.f32 %v1201, %v1205
    %v1209 = vadd.f32 %v1202, %v1205
    %v1210 = vadd.f32 %v1203, %v1205
    %v1211 = vpack.c.bf16 %v1208, %v1207
    %v1212 = vpack.c.bf16 %v1210, %v1209
    %v1213 = vld [vmem:[%s10] sm:$0xff]
    %v1214 = vld [vmem:[%s10 + $0x8] sm:$0xff]
    %v1215 = vld [vmem:[%s10 + $0x10] sm:$0xff]
    %v1216 = vld [vmem:[%s10 + $0x18] sm:$0xff]
    %v1217 = vld [vmem:[%s10 + $0x20] sm:$0xff]
    %v1218 = vld [vmem:[%s10 + $0x28] sm:$0xff]
    %v1219 = vld [vmem:[%s10 + $0x30] sm:$0xff]
    %v1220 = vld [vmem:[%s10 + $0x38] sm:$0xff]
    %v1221 = vld [vmem:[%s10 + $0x40] sm:$0xff]
    %v1222 = vld [vmem:[%s10 + $0x48] sm:$0xff]
    %v1223 = vld [vmem:[%s10 + $0x50] sm:$0xff]
    %v1224 = vld [vmem:[%s10 + $0x58] sm:$0xff]
    %v1225 = vld [vmem:[%s10 + $0x60] sm:$0xff]
    %v1226 = vld [vmem:[%s10 + $0x68] sm:$0xff]
    %v1227 = vld [vmem:[%s10 + $0x70] sm:$0xff]
    %v1228 = vld [vmem:[%s10 + $0x78] sm:$0xff]
    %v1229 = vld [vmem:[%s11] sm:$0x3]
    %v1231 = vperm.slane %v1229, 0
    %v1232 = vperm.slane %v1229, 1
    %v1251 = vunpack.c.l.b16 %v1213
    %v1252 = vunpack.c.h.b16 %v1213
    %v1253 = vunpack.c.l.b16 %v1214
    %v1254 = vunpack.c.h.b16 %v1214
    %v1255 = vunpack.c.l.b16 %v1215
    %v1256 = vunpack.c.h.b16 %v1215
    %v1257 = vunpack.c.l.b16 %v1216
    %v1258 = vunpack.c.h.b16 %v1216
    %v1259 = vunpack.c.l.b16 %v1217
    %v1260 = vunpack.c.h.b16 %v1217
    %v1261 = vunpack.c.l.b16 %v1218
    %v1262 = vunpack.c.h.b16 %v1218
    %v1263 = vunpack.c.l.b16 %v1219
    %v1264 = vunpack.c.h.b16 %v1219
    %v1265 = vunpack.c.l.b16 %v1220
    %v1266 = vunpack.c.h.b16 %v1220
    %v1267 = vunpack.c.l.b16 %v1221
    %v1268 = vunpack.c.h.b16 %v1221
    %v1269 = vunpack.c.l.b16 %v1222
    %v1270 = vunpack.c.h.b16 %v1222
    %v1271 = vunpack.c.l.b16 %v1223
    %v1272 = vunpack.c.h.b16 %v1223
    %v1273 = vunpack.c.l.b16 %v1224
    %v1274 = vunpack.c.h.b16 %v1224
    %v1275 = vunpack.c.l.b16 %v1225
    %v1276 = vunpack.c.h.b16 %v1225
    %v1277 = vunpack.c.l.b16 %v1226
    %v1278 = vunpack.c.h.b16 %v1226
    %v1279 = vunpack.c.l.b16 %v1227
    %v1280 = vunpack.c.h.b16 %v1227
    %v1281 = vunpack.c.l.b16 %v1228
    %v1282 = vunpack.c.h.b16 %v1228
    %v1283 = vpack.c.b16 %v1253, %v1251
    %v1284 = vpack.c.b16 %v1254, %v1252
    %v1285 = vpack.c.b16 %v1257, %v1255
    %v1286 = vpack.c.b16 %v1258, %v1256
    %v1287 = vpack.c.b16 %v1261, %v1259
    %v1288 = vpack.c.b16 %v1262, %v1260
    %v1289 = vpack.c.b16 %v1265, %v1263
    %v1290 = vpack.c.b16 %v1266, %v1264
    %v1291 = vpack.c.b16 %v1269, %v1267
    %v1292 = vpack.c.b16 %v1270, %v1268
    %v1293 = vpack.c.b16 %v1273, %v1271
    %v1294 = vpack.c.b16 %v1274, %v1272
    %v1295 = vpack.c.b16 %v1277, %v1275
    %v1296 = vpack.c.b16 %v1278, %v1276
    %v1297 = vpack.c.b16 %v1281, %v1279
    %v1298 = vpack.c.b16 %v1282, %v1280
    %1315 = vmatpush.bf16.msra.mxu0 %v1297
    %1316 = vmatpush.bf16.msra.mxu0 %v1295
    %1317 = vmatpush.bf16.msra.mxu0 %v1293
    %1318 = vmatpush.bf16.msra.mxu0 %v1291
    %1319 = vmatpush.bf16.msra.mxu0 %v1289
    %1320 = vmatpush.bf16.msra.mxu0 %v1287
    %1321 = vmatpush.bf16.msra.mxu0 %v1285
    %1322 = vmatpush.bf16.msra.mxu0 %v1283
    %1323 = vmatmul.bf16.gmra.mxu0 %v1211
    %v1324 = vpop.f32.mrf.mxu0
    %v1325 = vadd.f32 %v1231, %v1324
    %v1326 = vpop.f32.mrf.mxu0
    %v1327 = vadd.f32 %v1231, %v1326
    %1328 = vmatmul.bf16.gmra.mxu0 %v1212
    %v1329 = vpop.f32.mrf.mxu0
    %v1330 = vadd.f32 %v1231, %v1329
    %v1331 = vpop.f32.mrf.mxu0
    %v1332 = vadd.f32 %v1231, %v1331
    %1333 = vdwg.mxu0
    %1334 = vmatpush.bf16.msra.mxu0 %v1298
    %1335 = vmatpush.bf16.msra.mxu0 %v1296
    %1336 = vmatpush.bf16.msra.mxu0 %v1294
    %1337 = vmatpush.bf16.msra.mxu0 %v1292
    %1338 = vmatpush.bf16.msra.mxu0 %v1290
    %1339 = vmatpush.bf16.msra.mxu0 %v1288
    %1340 = vmatpush.bf16.msra.mxu0 %v1286
    %1341 = vmatpush.bf16.msra.mxu0 %v1284
    %1342 = vmatmul.bf16.gmra.mxu0 %v1211
    %v1343 = vpop.f32.mrf.mxu0
    %v1344 = vadd.f32 %v1232, %v1343
    %v1345 = vpop.f32.mrf.mxu0
    %v1346 = vadd.f32 %v1232, %v1345
    %1347 = vmatmul.bf16.gmra.mxu0 %v1212
    %v1348 = vpop.f32.mrf.mxu0
    %v1349 = vadd.f32 %v1232, %v1348
    %v1350 = vpop.f32.mrf.mxu0
    %v1351 = vadd.f32 %v1232, %v1350
    %1352 = vdwg.mxu0
    %v1353 = vmul.f32 %v1325, 0.5
    %v1354 = vmul.f32 %v1344, 0.5
    %v1355 = vmul.f32 %v1327, 0.5
    %v1356 = vmul.f32 %v1346, 0.5
    %v1357 = vmul.f32 %v1330, 0.5
    %v1358 = vmul.f32 %v1349, 0.5
    %v1359 = vmul.f32 %v1332, 0.5
    %v1360 = vmul.f32 %v1351, 0.5
    %v1361 = vmul.f32 %v1325, 0.044715
    %v1362 = vmul.f32 %v1344, 0.044715
    %v1363 = vmul.f32 %v1327, 0.044715
    %v1364 = vmul.f32 %v1346, 0.044715
    %v1365 = vmul.f32 %v1330, 0.044715
    %v1366 = vmul.f32 %v1349, 0.044715
    %v1367 = vmul.f32 %v1332, 0.044715
    %v1368 = vmul.f32 %v1351, 0.044715
    %v1369 = vmul.f32 %v1361, %v1325
    %v1370 = vmul.f32 %v1362, %v1344
    %v1371 = vmul.f32 %v1363, %v1327
    %v1372 = vmul.f32 %v1364, %v1346
    %v1373 = vmul.f32 %v1365, %v1330
    %v1374 = vmul.f32 %v1366, %v1349
    %v1375 = vmul.f32 %v1367, %v1332
    %v1376 = vmul.f32 %v1368, %v1351
    %v1377 = vmul.f32 %v1369, %v1325
    %v1378 = vmul.f32 %v1370, %v1344
    %v1379 = vmul.f32 %v1371, %v1327
    %v1380 = vmul.f32 %v1372, %v1346
    %v1381 = vmul.f32 %v1373, %v1330
    %v1382 = vmul.f32 %v1374, %v1349
    %v1383 = vmul.f32 %v1375, %v1332
    %v1384 = vmul.f32 %v1376, %v1351
    %v1385 = vadd.f32 %v1325, %v1377
    %v1386 = vadd.f32 %v1344, %v1378
    %v1387 = vadd.f32 %v1327, %v1379
    %v1388 = vadd.f32 %v1346, %v1380
    %v1389 = vadd.f32 %v1330, %v1381
    %v1390 = vadd.f32 %v1349, %v1382
    %v1391 = vadd.f32 %v1332, %v1383
    %v1392 = vadd.f32 %v1351, %v1384
    %v1393 = vmul.f32 %v1385, 0.7978846
    %v1394 = vmul.f32 %v1386, 0.7978846
    %v1395 = vmul.f32 %v1387, 0.7978846
    %v1396 = vmul.f32 %v1388, 0.7978846
    %v1397 = vmul.f32 %v1389, 0.7978846
    %v1398 = vmul.f32 %v1390, 0.7978846
    %v1399 = vmul.f32 %v1391, 0.7978846
    %v1400 = vmul.f32 %v1392, 0.7978846
    %v1401 = vtanh.pop %v1393
    %v1402 = vtanh.pop %v1394
    %v1403 = vtanh.pop %v1395
    %v1404 = vtanh.pop %v1396
    %v1405 = vtanh.pop %v1397
    %v1406 = vtanh.pop %v1398
    %v1407 = vtanh.pop %v1399
    %v1408 = vtanh.pop %v1400
    %v1409 = vadd.f32 %v1401, 1.0
    %v1410 = vadd.f32 %v1402, 1.0
    %v1411 = vadd.f32 %v1403, 1.0
    %v1412 = vadd.f32 %v1404, 1.0
    %v1413 = vadd.f32 %v1405, 1.0
    %v1414 = vadd.f32 %v1406, 1.0
    %v1415 = vadd.f32 %v1407, 1.0
    %v1416 = vadd.f32 %v1408, 1.0
    %v1417 = vmul.f32 %v1353, %v1409
    %v1418 = vmul.f32 %v1354, %v1410
    %v1419 = vmul.f32 %v1355, %v1411
    %v1420 = vmul.f32 %v1356, %v1412
    %v1421 = vmul.f32 %v1357, %v1413
    %v1422 = vmul.f32 %v1358, %v1414
    %v1423 = vmul.f32 %v1359, %v1415
    %v1424 = vmul.f32 %v1360, %v1416
    %v1425 = vpack.c.bf16 %v1419, %v1417
    %v1426 = vpack.c.bf16 %v1420, %v1418
    %v1427 = vpack.c.bf16 %v1423, %v1421
    %v1428 = vpack.c.bf16 %v1424, %v1422
    %v1429 = vld [vmem:[#allocation5] sm:$0xf]
    %v1430 = vld [vmem:[#allocation5 + $0x4] sm:$0xf]
    %v1431 = vld [vmem:[#allocation5 + $0x8] sm:$0xf]
    %v1432 = vld [vmem:[#allocation5 + $0xc] sm:$0xf]
    %v1433 = vld [vmem:[#allocation5 + $0x10] sm:$0xf]
    %v1434 = vld [vmem:[#allocation5 + $0x14] sm:$0xf]
    %v1435 = vld [vmem:[#allocation5 + $0x18] sm:$0xf]
    %v1436 = vld [vmem:[#allocation5 + $0x1c] sm:$0xf]
    %v1437 = vld [vmem:[#allocation5 + $0x20] sm:$0xf]
    %v1438 = vld [vmem:[#allocation5 + $0x24] sm:$0xf]
    %v1439 = vld [vmem:[#allocation5 + $0x28] sm:$0xf]
    %v1440 = vld [vmem:[#allocation5 + $0x2c] sm:$0xf]
    %v1441 = vld [vmem:[#allocation5 + $0x30] sm:$0xf]
    %v1442 = vld [vmem:[#allocation5 + $0x34] sm:$0xf]
    %v1443 = vld [vmem:[#allocation5 + $0x38] sm:$0xf]
    %v1444 = vld [vmem:[#allocation5 + $0x3c] sm:$0xf]
    %v1445 = vld [vmem:[#allocation5 + $0x40] sm:$0xf]
    %v1446 = vld [vmem:[#allocation5 + $0x44] sm:$0xf]
    %v1447 = vld [vmem:[#allocation5 + $0x48] sm:$0xf]
    %v1448 = vld [vmem:[#allocation5 + $0x4c] sm:$0xf]
    %v1449 = vld [vmem:[#allocation5 + $0x50] sm:$0xf]
    %v1450 = vld [vmem:[#allocation5 + $0x54] sm:$0xf]
    %v1451 = vld [vmem:[#allocation5 + $0x58] sm:$0xf]
    %v1452 = vld [vmem:[#allocation5 + $0x5c] sm:$0xf]
    %v1453 = vld [vmem:[#allocation5 + $0x60] sm:$0xf]
    %v1454 = vld [vmem:[#allocation5 + $0x64] sm:$0xf]
    %v1455 = vld [vmem:[#allocation5 + $0x68] sm:$0xf]
    %v1456 = vld [vmem:[#allocation5 + $0x6c] sm:$0xf]
    %v1457 = vld [vmem:[#allocation5 + $0x70] sm:$0xf]
    %v1458 = vld [vmem:[#allocation5 + $0x74] sm:$0xf]
    %v1459 = vld [vmem:[#allocation5 + $0x78] sm:$0xf]
    %v1460 = vld [vmem:[#allocation5 + $0x7c] sm:$0xf]
    %v1461 = vld [vmem:[%s13] sm:$0x1]
    %v1463 = vperm.slane %v1461, 0
    %v1497 = vunpack.c.l.b16 %v1429
    %v1498 = vunpack.c.l.b16 %v1430
    %v1499 = vunpack.c.l.b16 %v1431
    %v1500 = vunpack.c.l.b16 %v1432
    %v1501 = vunpack.c.l.b16 %v1433
    %v1502 = vunpack.c.l.b16 %v1434
    %v1503 = vunpack.c.l.b16 %v1435
    %v1504 = vunpack.c.l.b16 %v1436
    %v1505 = vunpack.c.l.b16 %v1437
    %v1506 = vunpack.c.l.b16 %v1438
    %v1507 = vunpack.c.l.b16 %v1439
    %v1508 = vunpack.c.l.b16 %v1440
    %v1509 = vunpack.c.l.b16 %v1441
    %v1510 = vunpack.c.l.b16 %v1442
    %v1511 = vunpack.c.l.b16 %v1443
    %v1512 = vunpack.c.l.b16 %v1444
    %v1513 = vunpack.c.l.b16 %v1445
    %v1514 = vunpack.c.l.b16 %v1446
    %v1515 = vunpack.c.l.b16 %v1447
    %v1516 = vunpack.c.l.b16 %v1448
    %v1517 = vunpack.c.l.b16 %v1449
    %v1518 = vunpack.c.l.b16 %v1450
    %v1519 = vunpack.c.l.b16 %v1451
    %v1520 = vunpack.c.l.b16 %v1452
    %v1521 = vunpack.c.l.b16 %v1453
    %v1522 = vunpack.c.l.b16 %v1454
    %v1523 = vunpack.c.l.b16 %v1455
    %v1524 = vunpack.c.l.b16 %v1456
    %v1525 = vunpack.c.l.b16 %v1457
    %v1526 = vunpack.c.l.b16 %v1458
    %v1527 = vunpack.c.l.b16 %v1459
    %v1528 = vunpack.c.l.b16 %v1460
    %v1529 = vpack.c.b16 %v1498, %v1497
    %v1530 = vpack.c.b16 %v1500, %v1499
    %v1531 = vpack.c.b16 %v1502, %v1501
    %v1532 = vpack.c.b16 %v1504, %v1503
    %v1533 = vpack.c.b16 %v1506, %v1505
    %v1534 = vpack.c.b16 %v1508, %v1507
    %v1535 = vpack.c.b16 %v1510, %v1509
    %v1536 = vpack.c.b16 %v1512, %v1511
    %v1537 = vpack.c.b16 %v1514, %v1513
    %v1538 = vpack.c.b16 %v1516, %v1515
    %v1539 = vpack.c.b16 %v1518, %v1517
    %v1540 = vpack.c.b16 %v1520, %v1519
    %v1541 = vpack.c.b16 %v1522, %v1521
    %v1542 = vpack.c.b16 %v1524, %v1523
    %v1543 = vpack.c.b16 %v1526, %v1525
    %v1544 = vpack.c.b16 %v1528, %v1527
    %1561 = vmatpush.bf16.msra.mxu0 %v1536
    %1562 = vmatpush.bf16.msra.mxu0 %v1535
    %1563 = vmatpush.bf16.msra.mxu0 %v1534
    %1564 = vmatpush.bf16.msra.mxu0 %v1533
    %1565 = vmatpush.bf16.msra.mxu0 %v1532
    %1566 = vmatpush.bf16.msra.mxu0 %v1531
    %1567 = vmatpush.bf16.msra.mxu0 %v1530
    %1568 = vmatpush.bf16.msra.mxu0 %v1529
    %1569 = vmatmul.bf16.gmra.mxu0 %v1425
    %v1570 = vpop.f32.mrf.mxu0
    %v1571 = vadd.f32 %v1463, %v1570
    %v1572 = vpop.f32.mrf.mxu0
    %v1573 = vadd.f32 %v1463, %v1572
    %1574 = vmatmul.bf16.gmra.mxu0 %v1427
    %v1575 = vpop.f32.mrf.mxu0
    %v1576 = vadd.f32 %v1463, %v1575
    %v1577 = vpop.f32.mrf.mxu0
    %v1578 = vadd.f32 %v1463, %v1577
    %1579 = vdwg.mxu0
    %1580 = vmatpush.bf16.msra.mxu0 %v1544
    %1581 = vmatpush.bf16.msra.mxu0 %v1543
    %1582 = vmatpush.bf16.msra.mxu0 %v1542
    %1583 = vmatpush.bf16.msra.mxu0 %v1541
    %1584 = vmatpush.bf16.msra.mxu0 %v1540
    %1585 = vmatpush.bf16.msra.mxu0 %v1539
    %1586 = vmatpush.bf16.msra.mxu0 %v1538
    %1587 = vmatpush.bf16.msra.mxu0 %v1537
    %1588 = vmatmul.bf16.gmra.mxu0 %v1426
    %v1589 = vpop.f32.mrf.mxu0
    %v1590 = vadd.f32 %v1571, %v1589
    %v1591 = vpop.f32.mrf.mxu0
    %v1592 = vadd.f32 %v1573, %v1591
    %1593 = vmatmul.bf16.gmra.mxu0 %v1428
    %v1594 = vpop.f32.mrf.mxu0
    %v1595 = vadd.f32 %v1576, %v1594
    %v1596 = vpop.f32.mrf.mxu0
    %v1597 = vadd.f32 %v1578, %v1596
    %1598 = vdwg.mxu0
    %v1599 = vadd.f32 %v1207, %v1590
    %v1600 = vadd.f32 %v1208, %v1592
    %v1601 = vadd.f32 %v1209, %v1595
    %v1602 = vadd.f32 %v1210, %v1597
    %v1603 = vld [vmem:[%s14] sm:$0x1]
    %v1604 = vld [vmem:[%s15] sm:$0x1]
    %1605 = vadd.xlane.f32.xlu0 %v1599
    %v1606 = vpop.xlane.xlu0 %1605
    %1607 = vadd.xlane.f32.xlu0 %v1600
    %v1608 = vpop.xlane.xlu0 %1607
    %1609 = vadd.xlane.f32.xlu0 %v1601
    %v1610 = vpop.xlane.xlu0 %1609
    %1611 = vadd.xlane.f32.xlu0 %v1602
    %v1612 = vpop.xlane.xlu0 %1611
    %v1613 = vmul.f32 %v1606, %v156
    %v1614 = vmul.f32 %v1608, %v156
    %v1615 = vmul.f32 %v1610, %v156
    %v1616 = vmul.f32 %v1612, %v156
    %v1617 = vsub.f32 %v1599, %v1613
    %v1618 = vsub.f32 %v1600, %v1614
    %v1619 = vsub.f32 %v1601, %v1615
    %v1620 = vsub.f32 %v1602, %v1616
    %v1621 = vmul.f32 %v1617, %v1617
    %v1622 = vmul.f32 %v1618, %v1618
    %v1623 = vmul.f32 %v1619, %v1619
    %v1624 = vmul.f32 %v1620, %v1620
    %1625 = vadd.xlane.f32.xlu0 %v1621
    %v1626 = vpop.xlane.xlu0 %1625
    %1627 = vadd.xlane.f32.xlu0 %v1622
    %v1628 = vpop.xlane.xlu0 %1627
    %1629 = vadd.xlane.f32.xlu0 %v1623
    %v1630 = vpop.xlane.xlu0 %1629
    %1631 = vadd.xlane.f32.xlu0 %v1624
    %v1632 = vpop.xlane.xlu0 %1631
    %v1633 = vmul.f32 %v1626, %v156
    %v1634 = vmul.f32 %v1628, %v156
    %v1635 = vmul.f32 %v1630, %v156
    %v1636 = vmul.f32 %v1632, %v156
    %v1637 = vadd.f32 %v1633, 1e-12
    %v1638 = vadd.f32 %v1634, 1e-12
    %v1639 = vadd.f32 %v1635, 1e-12
    %v1640 = vadd.f32 %v1636, 1e-12
    %v1641 = vrsqrt.pop %v1637
    %v1642 = vmul.f32 %v1641, %v1637
    %v1643 = vmul.f32 %v1642, %v1641
    %v1644 = vmul.f32 0.5, %v1643
    %v1645 = vsub.f32 1.5, %v1644
    %v1646 = vmul.f32 %v1641, %v1645
    %vm1647 = vweird.f32 %v1637
    %vm1648 = vweird.f32 %v1641
    %vm1649 = vmor %vm1647, %vm1648
    %v1650 = vsel %vm1649, %v1641, %v1646
    %v1651 = vrsqrt.pop %v1638
    %v1652 = vmul.f32 %v1651, %v1638
    %v1653 = vmul.f32 %v1652, %v1651
    %v1654 = vmul.f32 0.5, %v1653
    %v1655 = vsub.f32 1.5, %v1654
    %v1656 = vmul.f32 %v1651, %v1655
    %vm1657 = vweird.f32 %v1638
    %vm1658 = vweird.f32 %v1651
    %vm1659 = vmor %vm1657, %vm1658
    %v1660 = vsel %vm1659, %v1651, %v1656
    %v1661 = vrsqrt.pop %v1639
    %v1662 = vmul.f32 %v1661, %v1639
    %v1663 = vmul.f32 %v1662, %v1661
    %v1664 = vmul.f32 0.5, %v1663
    %v1665 = vsub.f32 1.5, %v1664
    %v1666 = vmul.f32 %v1661, %v1665
    %vm1667 = vweird.f32 %v1639
    %vm1668 = vweird.f32 %v1661
    %vm1669 = vmor %vm1667, %vm1668
    %v1670 = vsel %vm1669, %v1661, %v1666
    %v1671 = vrsqrt.pop %v1640
    %v1672 = vmul.f32 %v1671, %v1640
    %v1673 = vmul.f32 %v1672, %v1671
    %v1674 = vmul.f32 0.5, %v1673
    %v1675 = vsub.f32 1.5, %v1674
    %v1676 = vmul.f32 %v1671, %v1675
    %vm1677 = vweird.f32 %v1640
    %vm1678 = vweird.f32 %v1671
    %vm1679 = vmor %vm1677, %vm1678
    %v1680 = vsel %vm1679, %v1671, %v1676
    %v1681 = vmul.f32 %v1617, %v1650
    %v1682 = vmul.f32 %v1618, %v1660
    %v1683 = vmul.f32 %v1619, %v1670
    %v1684 = vmul.f32 %v1620, %v1680
    %v1686 = vperm.slane %v1603, 0
    %v1688 = vmul.f32 %v1681, %v1686
    %v1689 = vmul.f32 %v1682, %v1686
    %v1690 = vmul.f32 %v1683, %v1686
    %v1691 = vmul.f32 %v1684, %v1686
    %v1693 = vperm.slane %v1604, 0
    %v1695 = vadd.f32 %v1688, %v1693
    %v1696 = vadd.f32 %v1689, %v1693
    %v1697 = vadd.f32 %v1690, %v1693
    %v1698 = vadd.f32 %v1691, %v1693
    %v1699 = vpack.c.bf16 %v1696, %v1695
    %v1700 = vpack.c.bf16 %v1698, %v1697
    %s1701 = scalar_lea.vmem %s4, 192
    %v1702 = vld [vmem:[%s1701] sm:$0xff]
    %v1703 = vld [vmem:[%s1701 + $0x8] sm:$0xf]
    %v1704 = vld [vmem:[%s1701 + $0xc] sm:$0xff]
    %v1705 = vld [vmem:[%s1701 + $0x14] sm:$0xf]
    %v1706 = vld [vmem:[%s1701 + $0x18] sm:$0xff]
    %v1707 = vld [vmem:[%s1701 + $0x20] sm:$0xf]
    %v1708 = vld [vmem:[%s1701 + $0x24] sm:$0xff]
    %v1709 = vld [vmem:[%s1701 + $0x2c] sm:$0xf]
    %v1710 = vld [vmem:[%s1701 + $0x30] sm:$0xff]
    %v1711 = vld [vmem:[%s1701 + $0x38] sm:$0xf]
    %v1712 = vld [vmem:[%s1701 + $0x3c] sm:$0xff]
    %v1713 = vld [vmem:[%s1701 + $0x44] sm:$0xf]
    %v1714 = vld [vmem:[%s1701 + $0x48] sm:$0xff]
    %v1715 = vld [vmem:[%s1701 + $0x50] sm:$0xf]
    %v1716 = vld [vmem:[%s1701 + $0x54] sm:$0xff]
    %v1717 = vld [vmem:[%s1701 + $0x5c] sm:$0xf]
    %v1718 = vld [vmem:[%s1701 + $0x60] sm:$0xff]
    %v1719 = vld [vmem:[%s1701 + $0x68] sm:$0xf]
    %v1720 = vld [vmem:[%s1701 + $0x6c] sm:$0xff]
    %v1721 = vld [vmem:[%s1701 + $0x74] sm:$0xf]
    %v1722 = vld [vmem:[%s1701 + $0x78] sm:$0xff]
    %v1723 = vld [vmem:[%s1701 + $0x80] sm:$0xf]
    %v1724 = vld [vmem:[%s1701 + $0x84] sm:$0xff]
    %v1725 = vld [vmem:[%s1701 + $0x8c] sm:$0xf]
    %v1726 = vld [vmem:[%s1701 + $0x90] sm:$0xff]
    %v1727 = vld [vmem:[%s1701 + $0x98] sm:$0xf]
    %v1728 = vld [vmem:[%s1701 + $0x9c] sm:$0xff]
    %v1729 = vld [vmem:[%s1701 + $0xa4] sm:$0xf]
    %v1730 = vld [vmem:[%s1701 + $0xa8] sm:$0xff]
    %v1731 = vld [vmem:[%s1701 + $0xb0] sm:$0xf]
    %v1732 = vld [vmem:[%s1701 + $0xb4] sm:$0xff]
    %v1733 = vld [vmem:[%s1701 + $0xbc] sm:$0xf]
    %s1734 = scalar_lea.vmem %s5, 3
    %v1735 = vld [vmem:[%s1734] sm:$0x7]
    %v1737 = vperm.slane %v1735, 0
    %v1738 = vperm.slane %v1735, 1
    %v1739 = vperm.slane %v1735, 2
    %v1775 = vunpack.c.l.b16 %v1702
    %v1776 = vunpack.c.h.b16 %v1702
    %v1777 = vunpack.c.l.b16 %v1703
    %v1778 = vunpack.c.l.b16 %v1704
    %v1779 = vunpack.c.h.b16 %v1704
    %v1780 = vunpack.c.l.b16 %v1705
    %v1781 = vunpack.c.l.b16 %v1706
    %v1782 = vunpack.c.h.b16 %v1706
    %v1783 = vunpack.c.l.b16 %v1707
    %v1784 = vunpack.c.l.b16 %v1708
    %v1785 = vunpack.c.h.b16 %v1708
    %v1786 = vunpack.c.l.b16 %v1709
    %v1787 = vunpack.c.l.b16 %v1710
    %v1788 = vunpack.c.h.b16 %v1710
    %v1789 = vunpack.c.l.b16 %v1711
    %v1790 = vunpack.c.l.b16 %v1712
    %v1791 = vunpack.c.h.b16 %v1712
    %v1792 = vunpack.c.l.b16 %v1713
    %v1793 = vunpack.c.l.b16 %v1714
    %v1794 = vunpack.c.h.b16 %v1714
    %v1795 = vunpack.c.l.b16 %v1715
    %v1796 = vunpack.c.l.b16 %v1716
    %v1797 = vunpack.c.h.b16 %v1716
    %v1798 = vunpack.c.l.b16 %v1717
    %v1799 = vunpack.c.l.b16 %v1718
    %v1800 = vunpack.c.h.b16 %v1718
    %v1801 = vunpack.c.l.b16 %v1719
    %v1802 = vunpack.c.l.b16 %v1720
    %v1803 = vunpack.c.h.b16 %v1720
    %v1804 = vunpack.c.l.b16 %v1721
    %v1805 = vunpack.c.l.b16 %v1722
    %v1806 = vunpack.c.h.b16 %v1722
    %v1807 = vunpack.c.l.b16 %v1723
    %v1808 = vunpack.c.l.b16 %v1724
    %v1809 = vunpack.c.h.b16 %v1724
    %v1810 = vunpack.c.l.b16 %v1725
    %v1811 = vunpack.c.l.b16 %v1726
    %v1812 = vunpack.c.h.b16 %v1726
    %v1813 = vunpack.c.l.b16 %v1727
    %v1814 = vunpack.c.l.b16 %v1728
    %v1815 = vunpack.c.h.b16 %v1728
    %v1816 = vunpack.c.l.b16 %v1729
    %v1817 = vunpack.c.l.b16 %v1730
    %v1818 = vunpack.c.h.b16 %v1730
    %v1819 = vunpack.c.l.b16 %v1731
    %v1820 = vunpack.c.l.b16 %v1732
    %v1821 = vunpack.c.h.b16 %v1732
    %v1822 = vunpack.c.l.b16 %v1733
    %v1823 = vpack.c.b16 %v1778, %v1775
    %v1824 = vpack.c.b16 %v1779, %v1776
    %v1825 = vpack.c.b16 %v1780, %v1777
    %v1826 = vpack.c.b16 %v1784, %v1781
    %v1827 = vpack.c.b16 %v1785, %v1782
    %v1828 = vpack.c.b16 %v1786, %v1783
    %v1829 = vpack.c.b16 %v1790, %v1787
    %v1830 = vpack.c.b16 %v1791, %v1788
    %v1831 = vpack.c.b16 %v1792, %v1789
    %v1832 = vpack.c.b16 %v1796, %v1793
    %v1833 = vpack.c.b16 %v1797, %v1794
    %v1834 = vpack.c.b16 %v1798, %v1795
    %v1835 = vpack.c.b16 %v1802, %v1799
    %v1836 = vpack.c.b16 %v1803, %v1800
    %v1837 = vpack.c.b16 %v1804, %v1801
    %v1838 = vpack.c.b16 %v1808, %v1805
    %v1839 = vpack.c.b16 %v1809, %v1806
    %v1840 = vpack.c.b16 %v1810, %v1807
    %v1841 = vpack.c.b16 %v1814, %v1811
    %v1842 = vpack.c.b16 %v1815, %v1812
    %v1843 = vpack.c.b16 %v1816, %v1813
    %v1844 = vpack.c.b16 %v1820, %v1817
    %v1845 = vpack.c.b16 %v1821, %v1818
    %v1846 = vpack.c.b16 %v1822, %v1819
    %1871 = vmatpush.bf16.msra.mxu0 %v1844
    %1872 = vmatpush.bf16.msra.mxu0 %v1841
    %1873 = vmatpush.bf16.msra.mxu0 %v1838
    %1874 = vmatpush.bf16.msra.mxu0 %v1835
    %1875 = vmatpush.bf16.msra.mxu0 %v1832
    %1876 = vmatpush.bf16.msra.mxu0 %v1829
    %1877 = vmatpush.bf16.msra.mxu0 %v1826
    %1878 = vmatpush.bf16.msra.mxu0 %v1823
    %1879 = vmatmul.bf16.gmra.mxu0 %v1699
    %v1880 = vpop.f32.mrf.mxu0
    %v1881 = vadd.f32 %v1737, %v1880
    %v1882 = vpop.f32.mrf.mxu0
    %v1883 = vadd.f32 %v1737, %v1882
    %1884 = vmatmul.bf16.gmra.mxu0 %v1700
    %v1885 = vpop.f32.mrf.mxu0
    %v1886 = vadd.f32 %v1737, %v1885
    %v1887 = vpop.f32.mrf.mxu0
    %v1888 = vadd.f32 %v1737, %v1887
    %1889 = vdwg.mxu0
    %1890 = vmatpush.bf16.msra.mxu0 %v1845
    %1891 = vmatpush.bf16.msra.mxu0 %v1842
    %1892 = vmatpush.bf16.msra.mxu0 %v1839
    %1893 = vmatpush.bf16.msra.mxu0 %v1836
    %1894 = vmatpush.bf16.msra.mxu0 %v1833
    %1895 = vmatpush.bf16.msra.mxu0 %v1830
    %1896 = vmatpush.bf16.msra.mxu0 %v1827
    %1897 = vmatpush.bf16.msra.mxu0 %v1824
    %1898 = vmatmul.bf16.gmra.mxu0 %v1699
    %v1899 = vpop.f32.mrf.mxu0
    %v1900 = vadd.f32 %v1738, %v1899
    %v1901 = vpop.f32.mrf.mxu0
    %v1902 = vadd.f32 %v1738, %v1901
    %1903 = vmatmul.bf16.gmra.mxu0 %v1700
    %v1904 = vpop.f32.mrf.mxu0
    %v1905 = vadd.f32 %v1738, %v1904
    %v1906 = vpop.f32.mrf.mxu0
    %v1907 = vadd.f32 %v1738, %v1906
    %1908 = vdwg.mxu0
    %1909 = vmatpush.bf16.msra.mxu0 %v1846
    %1910 = vmatpush.bf16.msra.mxu0 %v1843
    %1911 = vmatpush.bf16.msra.mxu0 %v1840
    %1912 = vmatpush.bf16.msra.mxu0 %v1837
    %1913 = vmatpush.bf16.msra.mxu0 %v1834
    %1914 = vmatpush.bf16.msra.mxu0 %v1831
    %1915 = vmatpush.bf16.msra.mxu0 %v1828
    %1916 = vmatpush.bf16.msra.mxu0 %v1825
    %1917 = vmatmul.bf16.gmra.mxu0 %v1699
    %v1918 = vpop.f32.mrf.mxu0
    %v1919 = vadd.f32 %v1739, %v1918
    %v1920 = vpop.f32.mrf.mxu0
    %v1921 = vadd.f32 %v1739, %v1920
    %1922 = vmatmul.bf16.gmra.mxu0 %v1700
    %v1923 = vpop.f32.mrf.mxu0
    %v1924 = vadd.f32 %v1739, %v1923
    %v1925 = vpop.f32.mrf.mxu0
    %v1926 = vadd.f32 %v1739, %v1925
    %1927 = vdwg.mxu0
    %v1929 = vsel %vm472, %v1881, 0
    %v1932 = vsel %vm472, %v1900, 0
    %1934 = vmatpush.xpose.msra.mxu0 0.0
    %1935 = vmatpush.xpose.msra.mxu0 0.0
    %1936 = vmatpush.xpose.msra.mxu0 0.0
    %1937 = vmatpush.xpose.msra.mxu0 0.0
    %1938 = vmatpush.xpose.msra.mxu0 0.0
    %1939 = vmatpush.xpose.msra.mxu0 0.0
    %1940 = vmatpush.xpose.msra.mxu0 0.0
    %1941 = vmatpush.xpose.msra.mxu0 0.0
    %1942 = vmatpush.xpose.msra.mxu0 0.0
    %1943 = vmatpush.xpose.msra.mxu0 0.0
    %1944 = vmatpush.xpose.msra.mxu0 0.0
    %1945 = vmatpush.xpose.msra.mxu0 0.0
    %1946 = vmatpush.xpose.msra.mxu0 0.0
    %1947 = vmatpush.xpose.msra.mxu0 0.0
    %1948 = vmatpush.xpose.msra.mxu0 0.0
    %1949 = vmatpush.xpose.msra.mxu0 %v1932
    %1950 = vmatmul.f32.gmra.mxu0 %v1929
    %v1951 = vpop.f32.mrf.mxu0
    %v1952 = vadd.f32 %v471, %v1951
    %1953 = vdwg.mxu0
    %v1954 = vsel %vm499, %v1952, -inf
    %1955 = vmax.xlane.f32.xlu0 %v1954
    %v1956 = vpop.xlane.xlu0 %1955
    %v1957 = vsub.f32 %v1952, %v1956
    %v1958 = vmul.f32 %v1957, 1.442695
    %v1959 = vpow.pop %v1958
    %v1960 = vsel %vm499, %v1959, 0.0
    %1961 = vadd.xlane.f32.xlu0 %v1960
    %v1962 = vpop.xlane.xlu0 %1961
    %v1963 = vrcp.pop %v1962
    %v1964 = vmul.f32 %v1959, %v1963
    %v1966 = vsel %vm499, %v1964, 0
    %1968 = vmatpush.msra.mxu0 0.0
    %1969 = vmatpush.msra.mxu0 0.0
    %1970 = vmatpush.msra.mxu0 0.0
    %1971 = vmatpush.msra.mxu0 0.0
    %1972 = vmatpush.msra.mxu0 0.0
    %1973 = vmatpush.msra.mxu0 0.0
    %1974 = vmatpush.msra.mxu0 0.0
    %1975 = vmatpush.msra.mxu0 0.0
    %1976 = vmatpush.msra.mxu0 0.0
    %1977 = vmatpush.msra.mxu0 0.0
    %1978 = vmatpush.msra.mxu0 0.0
    %1979 = vmatpush.msra.mxu0 0.0
    %1980 = vmatpush.msra.mxu0 0.0
    %1981 = vmatpush.msra.mxu0 0.0
    %1982 = vmatpush.msra.mxu0 0.0
    %1983 = vmatpush.msra.mxu0 %v1919
    %1984 = vmatmul.f32.gmra.mxu0 %v1966
    %v1985 = vpop.f32.mrf.mxu0
    %v1986 = vadd.f32 0.0, %v1985
    %1987 = vdwg.mxu0
    %1988 = vrot.lane.b32.xlu0 %v1881, 64
    %v1989 = vpop.permute.xlu0 %1988
    %1990 = vrot.lane.b32.xlu0 %v1900, 64
    %v1991 = vpop.permute.xlu0 %1990
    %v1992 = vsel %vm472, %v1989, 0
    %v1994 = vsel %vm472, %v1991, 0
    %1996 = vmatpush.xpose.msra.mxu0 0.0
    %1997 = vmatpush.xpose.msra.mxu0 0.0
    %1998 = vmatpush.xpose.msra.mxu0 0.0
    %1999 = vmatpush.xpose.msra.mxu0 0.0
    %2000 = vmatpush.xpose.msra.mxu0 0.0
    %2001 = vmatpush.xpose.msra.mxu0 0.0
    %2002 = vmatpush.xpose.msra.mxu0 0.0
    %2003 = vmatpush.xpose.msra.mxu0 0.0
    %2004 = vmatpush.xpose.msra.mxu0 0.0
    %2005 = vmatpush.xpose.msra.mxu0 0.0
    %2006 = vmatpush.xpose.msra.mxu0 0.0
    %2007 = vmatpush.xpose.msra.mxu0 0.0
    %2008 = vmatpush.xpose.msra.mxu0 0.0
    %2009 = vmatpush.xpose.msra.mxu0 0.0
    %2010 = vmatpush.xpose.msra.mxu0 0.0
    %2011 = vmatpush.xpose.msra.mxu0 %v1994
    %2012 = vmatmul.f32.gmra.mxu0 %v1992
    %v2013 = vpop.f32.mrf.mxu0
    %v2014 = vadd.f32 %v471, %v2013
    %2015 = vdwg.mxu0
    %v2016 = vsel %vm499, %v2014, -inf
    %2017 = vmax.xlane.f32.xlu0 %v2016
    %v2018 = vpop.xlane.xlu0 %2017
    %v2019 = vsub.f32 %v2014, %v2018
    %v2020 = vmul.f32 %v2019, 1.442695
    %v2021 = vpow.pop %v2020
    %v2022 = vsel %vm499, %v2021, 0.0
    %2023 = vadd.xlane.f32.xlu0 %v2022
    %v2024 = vpop.xlane.xlu0 %2023
    %v2025 = vrcp.pop %v2024
    %v2026 = vmul.f32 %v2021, %v2025
    %2028 = vrot.lane.b32.xlu0 %v1919, 64
    %v2029 = vpop.permute.xlu0 %2028
    %v2032 = vsel %vm499, %v2026, 0
    %2034 = vmatpush.msra.mxu0 0.0
    %2035 = vmatpush.msra.mxu0 0.0
    %2036 = vmatpush.msra.mxu0 0.0
    %2037 = vmatpush.msra.mxu0 0.0
    %2038 = vmatpush.msra.mxu0 0.0
    %2039 = vmatpush.msra.mxu0 0.0
    %2040 = vmatpush.msra.mxu0 0.0
    %2041 = vmatpush.msra.mxu0 0.0
    %2042 = vmatpush.msra.mxu0 0.0
    %2043 = vmatpush.msra.mxu0 0.0
    %2044 = vmatpush.msra.mxu0 0.0
    %2045 = vmatpush.msra.mxu0 0.0
    %2046 = vmatpush.msra.mxu0 0.0
    %2047 = vmatpush.msra.mxu0 0.0
    %2048 = vmatpush.msra.mxu0 0.0
    %2049 = vmatpush.msra.mxu0 %v2029
    %2050 = vmatmul.f32.gmra.mxu0 %v2032
    %v2051 = vpop.f32.mrf.mxu0
    %v2052 = vadd.f32 0.0, %v2051
    %2053 = vdwg.mxu0
    %v2055 = vsel %vm472, %v1883, 0
    %v2058 = vsel %vm472, %v1902, 0
    %2060 = vmatpush.xpose.msra.mxu0 0.0
    %2061 = vmatpush.xpose.msra.mxu0 0.0
    %2062 = vmatpush.xpose.msra.mxu0 0.0
    %2063 = vmatpush.xpose.msra.mxu0 0.0
    %2064 = vmatpush.xpose.msra.mxu0 0.0
    %2065 = vmatpush.xpose.msra.mxu0 0.0
    %2066 = vmatpush.xpose.msra.mxu0 0.0
    %2067 = vmatpush.xpose.msra.mxu0 0.0
    %2068 = vmatpush.xpose.msra.mxu0 0.0
    %2069 = vmatpush.xpose.msra.mxu0 0.0
    %2070 = vmatpush.xpose.msra.mxu0 0.0
    %2071 = vmatpush.xpose.msra.mxu0 0.0
    %2072 = vmatpush.xpose.msra.mxu0 0.0
    %2073 = vmatpush.xpose.msra.mxu0 0.0
    %2074 = vmatpush.xpose.msra.mxu0 0.0
    %2075 = vmatpush.xpose.msra.mxu0 %v2058
    %2076 = vmatmul.f32.gmra.mxu0 %v2055
    %v2077 = vpop.f32.mrf.mxu0
    %v2078 = vadd.f32 %v600, %v2077
    %2079 = vdwg.mxu0
    %v2080 = vsel %vm499, %v2078, -inf
    %2081 = vmax.xlane.f32.xlu0 %v2080
    %v2082 = vpop.xlane.xlu0 %2081
    %v2083 = vsub.f32 %v2078, %v2082
    %v2084 = vmul.f32 %v2083, 1.442695
    %v2085 = vpow.pop %v2084
    %v2086 = vsel %vm499, %v2085, 0.0
    %2087 = vadd.xlane.f32.xlu0 %v2086
    %v2088 = vpop.xlane.xlu0 %2087
    %v2089 = vrcp.pop %v2088
    %v2090 = vmul.f32 %v2085, %v2089
    %v2092 = vsel %vm499, %v2090, 0
    %2094 = vmatpush.msra.mxu0 0.0
    %2095 = vmatpush.msra.mxu0 0.0
    %2096 = vmatpush.msra.mxu0 0.0
    %2097 = vmatpush.msra.mxu0 0.0
    %2098 = vmatpush.msra.mxu0 0.0
    %2099 = vmatpush.msra.mxu0 0.0
    %2100 = vmatpush.msra.mxu0 0.0
    %2101 = vmatpush.msra.mxu0 0.0
    %2102 = vmatpush.msra.mxu0 0.0
    %2103 = vmatpush.msra.mxu0 0.0
    %2104 = vmatpush.msra.mxu0 0.0
    %2105 = vmatpush.msra.mxu0 0.0
    %2106 = vmatpush.msra.mxu0 0.0
    %2107 = vmatpush.msra.mxu0 0.0
    %2108 = vmatpush.msra.mxu0 0.0
    %2109 = vmatpush.msra.mxu0 %v1921
    %2110 = vmatmul.f32.gmra.mxu0 %v2092
    %v2111 = vpop.f32.mrf.mxu0
    %v2112 = vadd.f32 0.0, %v2111
    %2113 = vdwg.mxu0
    %2114 = vrot.lane.b32.xlu0 %v1883, 64
    %v2115 = vpop.permute.xlu0 %2114
    %2116 = vrot.lane.b32.xlu0 %v1902, 64
    %v2117 = vpop.permute.xlu0 %2116
    %v2118 = vsel %vm472, %v2115, 0
    %v2120 = vsel %vm472, %v2117, 0
    %2122 = vmatpush.xpose.msra.mxu0 0.0
    %2123 = vmatpush.xpose.msra.mxu0 0.0
    %2124 = vmatpush.xpose.msra.mxu0 0.0
    %2125 = vmatpush.xpose.msra.mxu0 0.0
    %2126 = vmatpush.xpose.msra.mxu0 0.0
    %2127 = vmatpush.xpose.msra.mxu0 0.0
    %2128 = vmatpush.xpose.msra.mxu0 0.0
    %2129 = vmatpush.xpose.msra.mxu0 0.0
    %2130 = vmatpush.xpose.msra.mxu0 0.0
    %2131 = vmatpush.xpose.msra.mxu0 0.0
    %2132 = vmatpush.xpose.msra.mxu0 0.0
    %2133 = vmatpush.xpose.msra.mxu0 0.0
    %2134 = vmatpush.xpose.msra.mxu0 0.0
    %2135 = vmatpush.xpose.msra.mxu0 0.0
    %2136 = vmatpush.xpose.msra.mxu0 0.0
    %2137 = vmatpush.xpose.msra.mxu0 %v2120
    %2138 = vmatmul.f32.gmra.mxu0 %v2118
    %v2139 = vpop.f32.mrf.mxu0
    %v2140 = vadd.f32 %v600, %v2139
    %2141 = vdwg.mxu0
    %v2142 = vsel %vm499, %v2140, -inf
    %2143 = vmax.xlane.f32.xlu0 %v2142
    %v2144 = vpop.xlane.xlu0 %2143
    %v2145 = vsub.f32 %v2140, %v2144
    %v2146 = vmul.f32 %v2145, 1.442695
    %v2147 = vpow.pop %v2146
    %v2148 = vsel %vm499, %v2147, 0.0
    %2149 = vadd.xlane.f32.xlu0 %v2148
    %v2150 = vpop.xlane.xlu0 %2149
    %v2151 = vrcp.pop %v2150
    %v2152 = vmul.f32 %v2147, %v2151
    %2154 = vrot.lane.b32.xlu0 %v1921, 64
    %v2155 = vpop.permute.xlu0 %2154
    %v2158 = vsel %vm499, %v2152, 0
    %2160 = vmatpush.msra.mxu0 0.0
    %2161 = vmatpush.msra.mxu0 0.0
    %2162 = vmatpush.msra.mxu0 0.0
    %2163 = vmatpush.msra.mxu0 0.0
    %2164 = vmatpush.msra.mxu0 0.0
    %2165 = vmatpush.msra.mxu0 0.0
    %2166 = vmatpush.msra.mxu0 0.0
    %2167 = vmatpush.msra.mxu0 0.0
    %2168 = vmatpush.msra.mxu0 0.0
    %2169 = vmatpush.msra.mxu0 0.0
    %2170 = vmatpush.msra.mxu0 0.0
    %2171 = vmatpush.msra.mxu0 0.0
    %2172 = vmatpush.msra.mxu0 0.0
    %2173 = vmatpush.msra.mxu0 0.0
    %2174 = vmatpush.msra.mxu0 0.0
    %2175 = vmatpush.msra.mxu0 %v2155
    %2176 = vmatmul.f32.gmra.mxu0 %v2158
    %v2177 = vpop.f32.mrf.mxu0
    %v2178 = vadd.f32 0.0, %v2177
    %2179 = vdwg.mxu0
    %v2181 = vsel %vm472, %v1886, 0
    %v2184 = vsel %vm472, %v1905, 0
    %2186 = vmatpush.xpose.msra.mxu0 0.0
    %2187 = vmatpush.xpose.msra.mxu0 0.0
    %2188 = vmatpush.xpose.msra.mxu0 0.0
    %2189 = vmatpush.xpose.msra.mxu0 0.0
    %2190 = vmatpush.xpose.msra.mxu0 0.0
    %2191 = vmatpush.xpose.msra.mxu0 0.0
    %2192 = vmatpush.xpose.msra.mxu0 0.0
    %2193 = vmatpush.xpose.msra.mxu0 0.0
    %2194 = vmatpush.xpose.msra.mxu0 0.0
    %2195 = vmatpush.xpose.msra.mxu0 0.0
    %2196 = vmatpush.xpose.msra.mxu0 0.0
    %2197 = vmatpush.xpose.msra.mxu0 0.0
    %2198 = vmatpush.xpose.msra.mxu0 0.0
    %2199 = vmatpush.xpose.msra.mxu0 0.0
    %2200 = vmatpush.xpose.msra.mxu0 0.0
    %2201 = vmatpush.xpose.msra.mxu0 %v2184
    %2202 = vmatmul.f32.gmra.mxu0 %v2181
    %v2203 = vpop.f32.mrf.mxu0
    %v2204 = vadd.f32 %v727, %v2203
    %2205 = vdwg.mxu0
    %v2206 = vsel %vm499, %v2204, -inf
    %2207 = vmax.xlane.f32.xlu0 %v2206
    %v2208 = vpop.xlane.xlu0 %2207
    %v2209 = vsub.f32 %v2204, %v2208
    %v2210 = vmul.f32 %v2209, 1.442695
    %v2211 = vpow.pop %v2210
    %v2212 = vsel %vm499, %v2211, 0.0
    %2213 = vadd.xlane.f32.xlu0 %v2212
    %v2214 = vpop.xlane.xlu0 %2213
    %v2215 = vrcp.pop %v2214
    %v2216 = vmul.f32 %v2211, %v2215
    %v2218 = vsel %vm499, %v2216, 0
    %2220 = vmatpush.msra.mxu0 0.0
    %2221 = vmatpush.msra.mxu0 0.0
    %2222 = vmatpush.msra.mxu0 0.0
    %2223 = vmatpush.msra.mxu0 0.0
    %2224 = vmatpush.msra.mxu0 0.0
    %2225 = vmatpush.msra.mxu0 0.0
    %2226 = vmatpush.msra.mxu0 0.0
    %2227 = vmatpush.msra.mxu0 0.0
    %2228 = vmatpush.msra.mxu0 0.0
    %2229 = vmatpush.msra.mxu0 0.0
    %2230 = vmatpush.msra.mxu0 0.0
    %2231 = vmatpush.msra.mxu0 0.0
    %2232 = vmatpush.msra.mxu0 0.0
    %2233 = vmatpush.msra.mxu0 0.0
    %2234 = vmatpush.msra.mxu0 0.0
    %2235 = vmatpush.msra.mxu0 %v1924
    %2236 = vmatmul.f32.gmra.mxu0 %v2218
    %v2237 = vpop.f32.mrf.mxu0
    %v2238 = vadd.f32 0.0, %v2237
    %2239 = vdwg.mxu0
    %2240 = vrot.lane.b32.xlu0 %v1886, 64
    %v2241 = vpop.permute.xlu0 %2240
    %2242 = vrot.lane.b32.xlu0 %v1905, 64
    %v2243 = vpop.permute.xlu0 %2242
    %v2244 = vsel %vm472, %v2241, 0
    %v2246 = vsel %vm472, %v2243, 0
    %2248 = vmatpush.xpose.msra.mxu0 0.0
    %2249 = vmatpush.xpose.msra.mxu0 0.0
    %2250 = vmatpush.xpose.msra.mxu0 0.0
    %2251 = vmatpush.xpose.msra.mxu0 0.0
    %2252 = vmatpush.xpose.msra.mxu0 0.0
    %2253 = vmatpush.xpose.msra.mxu0 0.0
    %2254 = vmatpush.xpose.msra.mxu0 0.0
    %2255 = vmatpush.xpose.msra.mxu0 0.0
    %2256 = vmatpush.xpose.msra.mxu0 0.0
    %2257 = vmatpush.xpose.msra.mxu0 0.0
    %2258 = vmatpush.xpose.msra.mxu0 0.0
    %2259 = vmatpush.xpose.msra.mxu0 0.0
    %2260 = vmatpush.xpose.msra.mxu0 0.0
    %2261 = vmatpush.xpose.msra.mxu0 0.0
    %2262 = vmatpush.xpose.msra.mxu0 0.0
    %2263 = vmatpush.xpose.msra.mxu0 %v2246
    %2264 = vmatmul.f32.gmra.mxu0 %v2244
    %v2265 = vpop.f32.mrf.mxu0
    %v2266 = vadd.f32 %v727, %v2265
    %2267 = vdwg.mxu0
    %v2268 = vsel %vm499, %v2266, -inf
    %2269 = vmax.xlane.f32.xlu0 %v2268
    %v2270 = vpop.xlane.xlu0 %2269
    %v2271 = vsub.f32 %v2266, %v2270
    %v2272 = vmul.f32 %v2271, 1.442695
    %v2273 = vpow.pop %v2272
    %v2274 = vsel %vm499, %v2273, 0.0
    %2275 = vadd.xlane.f32.xlu0 %v2274
    %v2276 = vpop.xlane.xlu0 %2275
    %v2277 = vrcp.pop %v2276
    %v2278 = vmul.f32 %v2273, %v2277
    %2280 = vrot.lane.b32.xlu0 %v1924, 64
    %v2281 = vpop.permute.xlu0 %2280
    %v2284 = vsel %vm499, %v2278, 0
    %2286 = vmatpush.msra.mxu0 0.0
    %2287 = vmatpush.msra.mxu0 0.0
    %2288 = vmatpush.msra.mxu0 0.0
    %2289 = vmatpush.msra.mxu0 0.0
    %2290 = vmatpush.msra.mxu0 0.0
    %2291 = vmatpush.msra.mxu0 0.0
    %2292 = vmatpush.msra.mxu0 0.0
    %2293 = vmatpush.msra.mxu0 0.0
    %2294 = vmatpush.msra.mxu0 0.0
    %2295 = vmatpush.msra.mxu0 0.0
    %2296 = vmatpush.msra.mxu0 0.0
    %2297 = vmatpush.msra.mxu0 0.0
    %2298 = vmatpush.msra.mxu0 0.0
    %2299 = vmatpush.msra.mxu0 0.0
    %2300 = vmatpush.msra.mxu0 0.0
    %2301 = vmatpush.msra.mxu0 %v2281
    %2302 = vmatmul.f32.gmra.mxu0 %v2284
    %v2303 = vpop.f32.mrf.mxu0
    %v2304 = vadd.f32 0.0, %v2303
    %2305 = vdwg.mxu0
    %v2307 = vsel %vm472, %v1888, 0
    %v2310 = vsel %vm472, %v1907, 0
    %2312 = vmatpush.xpose.msra.mxu0 0.0
    %2313 = vmatpush.xpose.msra.mxu0 0.0
    %2314 = vmatpush.xpose.msra.mxu0 0.0
    %2315 = vmatpush.xpose.msra.mxu0 0.0
    %2316 = vmatpush.xpose.msra.mxu0 0.0
    %2317 = vmatpush.xpose.msra.mxu0 0.0
    %2318 = vmatpush.xpose.msra.mxu0 0.0
    %2319 = vmatpush.xpose.msra.mxu0 0.0
    %2320 = vmatpush.xpose.msra.mxu0 0.0
    %2321 = vmatpush.xpose.msra.mxu0 0.0
    %2322 = vmatpush.xpose.msra.mxu0 0.0
    %2323 = vmatpush.xpose.msra.mxu0 0.0
    %2324 = vmatpush.xpose.msra.mxu0 0.0
    %2325 = vmatpush.xpose.msra.mxu0 0.0
    %2326 = vmatpush.xpose.msra.mxu0 0.0
    %2327 = vmatpush.xpose.msra.mxu0 %v2310
    %2328 = vmatmul.f32.gmra.mxu0 %v2307
    %v2329 = vpop.f32.mrf.mxu0
    %v2330 = vadd.f32 %v854, %v2329
    %2331 = vdwg.mxu0
    %v2332 = vsel %vm499, %v2330, -inf
    %2333 = vmax.xlane.f32.xlu0 %v2332
    %v2334 = vpop.xlane.xlu0 %2333
    %v2335 = vsub.f32 %v2330, %v2334
    %v2336 = vmul.f32 %v2335, 1.442695
    %v2337 = vpow.pop %v2336
    %v2338 = vsel %vm499, %v2337, 0.0
    %2339 = vadd.xlane.f32.xlu0 %v2338
    %v2340 = vpop.xlane.xlu0 %2339
    %v2341 = vrcp.pop %v2340
    %v2342 = vmul.f32 %v2337, %v2341
    %v2344 = vsel %vm499, %v2342, 0
    %2346 = vmatpush.msra.mxu0 0.0
    %2347 = vmatpush.msra.mxu0 0.0
    %2348 = vmatpush.msra.mxu0 0.0
    %2349 = vmatpush.msra.mxu0 0.0
    %2350 = vmatpush.msra.mxu0 0.0
    %2351 = vmatpush.msra.mxu0 0.0
    %2352 = vmatpush.msra.mxu0 0.0
    %2353 = vmatpush.msra.mxu0 0.0
    %2354 = vmatpush.msra.mxu0 0.0
    %2355 = vmatpush.msra.mxu0 0.0
    %2356 = vmatpush.msra.mxu0 0.0
    %2357 = vmatpush.msra.mxu0 0.0
    %2358 = vmatpush.msra.mxu0 0.0
    %2359 = vmatpush.msra.mxu0 0.0
    %2360 = vmatpush.msra.mxu0 0.0
    %2361 = vmatpush.msra.mxu0 %v1926
    %2362 = vmatmul.f32.gmra.mxu0 %v2344
    %v2363 = vpop.f32.mrf.mxu0
    %v2364 = vadd.f32 0.0, %v2363
    %2365 = vdwg.mxu0
    %2366 = vrot.lane.b32.xlu0 %v1888, 64
    %v2367 = vpop.permute.xlu0 %2366
    %2368 = vrot.lane.b32.xlu0 %v1907, 64
    %v2369 = vpop.permute.xlu0 %2368
    %v2370 = vsel %vm472, %v2367, 0
    %v2372 = vsel %vm472, %v2369, 0
    %2374 = vmatpush.xpose.msra.mxu0 0.0
    %2375 = vmatpush.xpose.msra.mxu0 0.0
    %2376 = vmatpush.xpose.msra.mxu0 0.0
    %2377 = vmatpush.xpose.msra.mxu0 0.0
    %2378 = vmatpush.xpose.msra.mxu0 0.0
    %2379 = vmatpush.xpose.msra.mxu0 0.0
    %2380 = vmatpush.xpose.msra.mxu0 0.0
    %2381 = vmatpush.xpose.msra.mxu0 0.0
    %2382 = vmatpush.xpose.msra.mxu0 0.0
    %2383 = vmatpush.xpose.msra.mxu0 0.0
    %2384 = vmatpush.xpose.msra.mxu0 0.0
    %2385 = vmatpush.xpose.msra.mxu0 0.0
    %2386 = vmatpush.xpose.msra.mxu0 0.0
    %2387 = vmatpush.xpose.msra.mxu0 0.0
    %2388 = vmatpush.xpose.msra.mxu0 0.0
    %2389 = vmatpush.xpose.msra.mxu0 %v2372
    %2390 = vmatmul.f32.gmra.mxu0 %v2370
    %v2391 = vpop.f32.mrf.mxu0
    %v2392 = vadd.f32 %v854, %v2391
    %2393 = vdwg.mxu0
    %v2394 = vsel %vm499, %v2392, -inf
    %2395 = vmax.xlane.f32.xlu0 %v2394
    %v2396 = vpop.xlane.xlu0 %2395
    %v2397 = vsub.f32 %v2392, %v2396
    %v2398 = vmul.f32 %v2397, 1.442695
    %v2399 = vpow.pop %v2398
    %v2400 = vsel %vm499, %v2399, 0.0
    %2401 = vadd.xlane.f32.xlu0 %v2400
    %v2402 = vpop.xlane.xlu0 %2401
    %v2403 = vrcp.pop %v2402
    %v2404 = vmul.f32 %v2399, %v2403
    %2406 = vrot.lane.b32.xlu0 %v1926, 64
    %v2407 = vpop.permute.xlu0 %2406
    %v2410 = vsel %vm499, %v2404, 0
    %2412 = vmatpush.msra.mxu0 0.0
    %2413 = vmatpush.msra.mxu0 0.0
    %2414 = vmatpush.msra.mxu0 0.0
    %2415 = vmatpush.msra.mxu0 0.0
    %2416 = vmatpush.msra.mxu0 0.0
    %2417 = vmatpush.msra.mxu0 0.0
    %2418 = vmatpush.msra.mxu0 0.0
    %2419 = vmatpush.msra.mxu0 0.0
    %2420 = vmatpush.msra.mxu0 0.0
    %2421 = vmatpush.msra.mxu0 0.0
    %2422 = vmatpush.msra.mxu0 0.0
    %2423 = vmatpush.msra.mxu0 0.0
    %2424 = vmatpush.msra.mxu0 0.0
    %2425 = vmatpush.msra.mxu0 0.0
    %2426 = vmatpush.msra.mxu0 0.0
    %2427 = vmatpush.msra.mxu0 %v2407
    %2428 = vmatmul.f32.gmra.mxu0 %v2410
    %v2429 = vpop.f32.mrf.mxu0
    %v2430 = vadd.f32 0.0, %v2429
    %2431 = vdwg.mxu0
    %s2432 = scalar_lea.vmem [#allocation2], 64
    %v2433 = vld [vmem:[%s2432] sm:$0xf]
    %v2434 = vld [vmem:[%s2432 + $0x4] sm:$0xf]
    %v2435 = vld [vmem:[%s2432 + $0x8] sm:$0xf]
    %v2436 = vld [vmem:[%s2432 + $0xc] sm:$0xf]
    %v2437 = vld [vmem:[%s2432 + $0x10] sm:$0xf]
    %v2438 = vld [vmem:[%s2432 + $0x14] sm:$0xf]
    %v2439 = vld [vmem:[%s2432 + $0x18] sm:$0xf]
    %v2440 = vld [vmem:[%s2432 + $0x1c] sm:$0xf]
    %v2441 = vld [vmem:[%s2432 + $0x20] sm:$0xf]
    %v2442 = vld [vmem:[%s2432 + $0x24] sm:$0xf]
    %v2443 = vld [vmem:[%s2432 + $0x28] sm:$0xf]
    %v2444 = vld [vmem:[%s2432 + $0x2c] sm:$0xf]
    %v2445 = vld [vmem:[%s2432 + $0x30] sm:$0xf]
    %v2446 = vld [vmem:[%s2432 + $0x34] sm:$0xf]
    %v2447 = vld [vmem:[%s2432 + $0x38] sm:$0xf]
    %v2448 = vld [vmem:[%s2432 + $0x3c] sm:$0xf]
    %s2449 = scalar_lea.vmem %s7, 1
    %v2450 = vld [vmem:[%s2449] sm:$0x1]
    %v2451 = vpack.c.bf16 %v2112, %v1986
    %v2452 = vpack.c.bf16 %v2364, %v2238
    %v2461 = vunpack.c.l.b16 %v2433
    %v2462 = vunpack.c.l.b16 %v2434
    %v2463 = vunpack.c.l.b16 %v2435
    %v2464 = vunpack.c.l.b16 %v2436
    %v2465 = vunpack.c.l.b16 %v2437
    %v2466 = vunpack.c.l.b16 %v2438
    %v2467 = vunpack.c.l.b16 %v2439
    %v2468 = vunpack.c.l.b16 %v2440
    %v2469 = vpack.c.b16 %v2462, %v2461
    %v2470 = vpack.c.b16 %v2464, %v2463
    %v2471 = vpack.c.b16 %v2466, %v2465
    %v2472 = vpack.c.b16 %v2468, %v2467
    %v2478 = vsel %vm472, %v2451, 0
    %v2481 = vsel %vm472, %v2452, 0
    %2483 = vmatpush.bf16.msra.mxu0 0
    %2484 = vmatpush.bf16.msra.mxu0 0
    %2485 = vmatpush.bf16.msra.mxu0 0
    %2486 = vmatpush.bf16.msra.mxu0 0
    %2487 = vmatpush.bf16.msra.mxu0 %v2472
    %2488 = vmatpush.bf16.msra.mxu0 %v2471
    %2489 = vmatpush.bf16.msra.mxu0 %v2470
    %2490 = vmatpush.bf16.msra.mxu0 %v2469
    %2491 = vmatmul.bf16.gmra.mxu0 %v2478
    %v2492 = vpop.f32.mrf.mxu0
    %v2493 = vadd.f32 0.0, %v2492
    %v2494 = vpop.f32.mrf.mxu0
    %v2495 = vadd.f32 0.0, %v2494
    %2496 = vmatmul.bf16.gmra.mxu0 %v2481
    %v2497 = vpop.f32.mrf.mxu0
    %v2498 = vadd.f32 0.0, %v2497
    %v2499 = vpop.f32.mrf.mxu0
    %v2500 = vadd.f32 0.0, %v2499
    %2501 = vdwg.mxu0
    %v2503 = vperm.slane %v2450, 0
    %v2505 = vadd.f32 %v2503, %v2493
    %v2506 = vadd.f32 %v2503, %v2495
    %v2507 = vadd.f32 %v2503, %v2498
    %v2508 = vadd.f32 %v2503, %v2500
    %v2509 = vpack.c.bf16 %v2178, %v2052
    %v2510 = vpack.c.bf16 %v2430, %v2304
    %v2519 = vunpack.c.l.b16 %v2441
    %v2520 = vunpack.c.l.b16 %v2442
    %v2521 = vunpack.c.l.b16 %v2443
    %v2522 = vunpack.c.l.b16 %v2444
    %v2523 = vunpack.c.l.b16 %v2445
    %v2524 = vunpack.c.l.b16 %v2446
    %v2525 = vunpack.c.l.b16 %v2447
    %v2526 = vunpack.c.l.b16 %v2448
    %v2527 = vpack.c.b16 %v2520, %v2519
    %v2528 = vpack.c.b16 %v2522, %v2521
    %v2529 = vpack.c.b16 %v2524, %v2523
    %v2530 = vpack.c.b16 %v2526, %v2525
    %v2536 = vsel %vm472, %v2509, 0
    %v2539 = vsel %vm472, %v2510, 0
    %2541 = vmatpush.bf16.msra.mxu0 0
    %2542 = vmatpush.bf16.msra.mxu0 0
    %2543 = vmatpush.bf16.msra.mxu0 0
    %2544 = vmatpush.bf16.msra.mxu0 0
    %2545 = vmatpush.bf16.msra.mxu0 %v2530
    %2546 = vmatpush.bf16.msra.mxu0 %v2529
    %2547 = vmatpush.bf16.msra.mxu0 %v2528
    %2548 = vmatpush.bf16.msra.mxu0 %v2527
    %2549 = vmatmul.bf16.gmra.mxu0 %v2536
    %v2550 = vpop.f32.mrf.mxu0
    %v2551 = vadd.f32 0.0, %v2550
    %v2552 = vpop.f32.mrf.mxu0
    %v2553 = vadd.f32 0.0, %v2552
    %2554 = vmatmul.bf16.gmra.mxu0 %v2539
    %v2555 = vpop.f32.mrf.mxu0
    %v2556 = vadd.f32 0.0, %v2555
    %v2557 = vpop.f32.mrf.mxu0
    %v2558 = vadd.f32 0.0, %v2557
    %2559 = vdwg.mxu0
    %v2560 = vadd.f32 %v2505, %v2551
    %v2561 = vadd.f32 %v2506, %v2553
    %v2562 = vadd.f32 %v2507, %v2556
    %v2563 = vadd.f32 %v2508, %v2558
    %v2564 = vadd.f32 %v1695, %v2560
    %v2565 = vadd.f32 %v1696, %v2561
    %v2566 = vadd.f32 %v1697, %v2562
    %v2567 = vadd.f32 %v1698, %v2563
    %s2568 = scalar_lea.vmem %s8, 1
    %v2569 = vld [vmem:[%s2568] sm:$0x1]
    %s2570 = scalar_lea.vmem %s9, 1
    %v2571 = vld [vmem:[%s2570] sm:$0x1]
    %2572 = vadd.xlane.f32.xlu0 %v2564
    %v2573 = vpop.xlane.xlu0 %2572
    %2574 = vadd.xlane.f32.xlu0 %v2565
    %v2575 = vpop.xlane.xlu0 %2574
    %2576 = vadd.xlane.f32.xlu0 %v2566
    %v2577 = vpop.xlane.xlu0 %2576
    %2578 = vadd.xlane.f32.xlu0 %v2567
    %v2579 = vpop.xlane.xlu0 %2578
    %v2580 = vmul.f32 %v2573, %v156
    %v2581 = vmul.f32 %v2575, %v156
    %v2582 = vmul.f32 %v2577, %v156
    %v2583 = vmul.f32 %v2579, %v156
    %v2584 = vsub.f32 %v2564, %v2580
    %v2585 = vsub.f32 %v2565, %v2581
    %v2586 = vsub.f32 %v2566, %v2582
    %v2587 = vsub.f32 %v2567, %v2583
    %v2588 = vmul.f32 %v2584, %v2584
    %v2589 = vmul.f32 %v2585, %v2585
    %v2590 = vmul.f32 %v2586, %v2586
    %v2591 = vmul.f32 %v2587, %v2587
    %2592 = vadd.xlane.f32.xlu0 %v2588
    %v2593 = vpop.xlane.xlu0 %2592
    %2594 = vadd.xlane.f32.xlu0 %v2589
    %v2595 = vpop.xlane.xlu0 %2594
    %2596 = vadd.xlane.f32.xlu0 %v2590
    %v2597 = vpop.xlane.xlu0 %2596
    %2598 = vadd.xlane.f32.xlu0 %v2591
    %v2599 = vpop.xlane.xlu0 %2598
    %v2600 = vmul.f32 %v2593, %v156
    %v2601 = vmul.f32 %v2595, %v156
    %v2602 = vmul.f32 %v2597, %v156
    %v2603 = vmul.f32 %v2599, %v156
    %v2604 = vadd.f32 %v2600, 1e-12
    %v2605 = vadd.f32 %v2601, 1e-12
    %v2606 = vadd.f32 %v2602, 1e-12
    %v2607 = vadd.f32 %v2603, 1e-12
    %v2608 = vrsqrt.pop %v2604
    %v2609 = vmul.f32 %v2608, %v2604
    %v2610 = vmul.f32 %v2609, %v2608
    %v2611 = vmul.f32 0.5, %v2610
    %v2612 = vsub.f32 1.5, %v2611
    %v2613 = vmul.f32 %v2608, %v2612
    %vm2614 = vweird.f32 %v2604
    %vm2615 = vweird.f32 %v2608
    %vm2616 = vmor %vm2614, %vm2615
    %v2617 = vsel %vm2616, %v2608, %v2613
    %v2618 = vrsqrt.pop %v2605
    %v2619 = vmul.f32 %v2618, %v2605
    %v2620 = vmul.f32 %v2619, %v2618
    %v2621 = vmul.f32 0.5, %v2620
    %v2622 = vsub.f32 1.5, %v2621
    %v2623 = vmul.f32 %v2618, %v2622
    %vm2624 = vweird.f32 %v2605
    %vm2625 = vweird.f32 %v2618
    %vm2626 = vmor %vm2624, %vm2625
    %v2627 = vsel %vm2626, %v2618, %v2623
    %v2628 = vrsqrt.pop %v2606
    %v2629 = vmul.f32 %v2628, %v2606
    %v2630 = vmul.f32 %v2629, %v2628
    %v2631 = vmul.f32 0.5, %v2630
    %v2632 = vsub.f32 1.5, %v2631
    %v2633 = vmul.f32 %v2628, %v2632
    %vm2634 = vweird.f32 %v2606
    %vm2635 = vweird.f32 %v2628
    %vm2636 = vmor %vm2634, %vm2635
    %v2637 = vsel %vm2636, %v2628, %v2633
    %v2638 = vrsqrt.pop %v2607
    %v2639 = vmul.f32 %v2638, %v2607
    %v2640 = vmul.f32 %v2639, %v2638
    %v2641 = vmul.f32 0.5, %v2640
    %v2642 = vsub.f32 1.5, %v2641
    %v2643 = vmul.f32 %v2638, %v2642
    %vm2644 = vweird.f32 %v2607
    %vm2645 = vweird.f32 %v2638
    %vm2646 = vmor %vm2644, %vm2645
    %v2647 = vsel %vm2646, %v2638, %v2643
    %v2648 = vmul.f32 %v2584, %v2617
    %v2649 = vmul.f32 %v2585, %v2627
    %v2650 = vmul.f32 %v2586, %v2637
    %v2651 = vmul.f32 %v2587, %v2647
    %v2653 = vperm.slane %v2569, 0
    %v2655 = vmul.f32 %v2648, %v2653
    %v2656 = vmul.f32 %v2649, %v2653
    %v2657 = vmul.f32 %v2650, %v2653
    %v2658 = vmul.f32 %v2651, %v2653
    %v2660 = vperm.slane %v2571, 0
    %v2662 = vadd.f32 %v2655, %v2660
    %v2663 = vadd.f32 %v2656, %v2660
    %v2664 = vadd.f32 %v2657, %v2660
    %v2665 = vadd.f32 %v2658, %v2660
    %v2666 = vpack.c.bf16 %v2663, %v2662
    %v2667 = vpack.c.bf16 %v2665, %v2664
    %s2668 = scalar_lea.vmem %s10, 128
    %v2669 = vld [vmem:[%s2668] sm:$0xff]
    %v2670 = vld [vmem:[%s2668 + $0x8] sm:$0xff]
    %v2671 = vld [vmem:[%s2668 + $0x10] sm:$0xff]
    %v2672 = vld [vmem:[%s2668 + $0x18] sm:$0xff]
    %v2673 = vld [vmem:[%s2668 + $0x20] sm:$0xff]
    %v2674 = vld [vmem:[%s2668 + $0x28] sm:$0xff]
    %v2675 = vld [vmem:[%s2668 + $0x30] sm:$0xff]
    %v2676 = vld [vmem:[%s2668 + $0x38] sm:$0xff]
    %v2677 = vld [vmem:[%s2668 + $0x40] sm:$0xff]
    %v2678 = vld [vmem:[%s2668 + $0x48] sm:$0xff]
    %v2679 = vld [vmem:[%s2668 + $0x50] sm:$0xff]
    %v2680 = vld [vmem:[%s2668 + $0x58] sm:$0xff]
    %v2681 = vld [vmem:[%s2668 + $0x60] sm:$0xff]
    %v2682 = vld [vmem:[%s2668 + $0x68] sm:$0xff]
    %v2683 = vld [vmem:[%s2668 + $0x70] sm:$0xff]
    %v2684 = vld [vmem:[%s2668 + $0x78] sm:$0xff]
    %s2685 = scalar_lea.vmem %s11, 2
    %v2686 = vld [vmem:[%s2685] sm:$0x3]
    %v2688 = vperm.slane %v2686, 0
    %v2689 = vperm.slane %v2686, 1
    %v2708 = vunpack.c.l.b16 %v2669
    %v2709 = vunpack.c.h.b16 %v2669
    %v2710 = vunpack.c.l.b16 %v2670
    %v2711 = vunpack.c.h.b16 %v2670
    %v2712 = vunpack.c.l.b16 %v2671
    %v2713 = vunpack.c.h.b16 %v2671
    %v2714 = vunpack.c.l.b16 %v2672
    %v2715 = vunpack.c.h.b16 %v2672
    %v2716 = vunpack.c.l.b16 %v2673
    %v2717 = vunpack.c.h.b16 %v2673
    %v2718 = vunpack.c.l.b16 %v2674
    %v2719 = vunpack.c.h.b16 %v2674
    %v2720 = vunpack.c.l.b16 %v2675
    %v2721 = vunpack.c.h.b16 %v2675
    %v2722 = vunpack.c.l.b16 %v2676
    %v2723 = vunpack.c.h.b16 %v2676
    %v2724 = vunpack.c.l.b16 %v2677
    %v2725 = vunpack.c.h.b16 %v2677
    %v2726 = vunpack.c.l.b16 %v2678
    %v2727 = vunpack.c.h.b16 %v2678
    %v2728 = vunpack.c.l.b16 %v2679
    %v2729 = vunpack.c.h.b16 %v2679
    %v2730 = vunpack.c.l.b16 %v2680
    %v2731 = vunpack.c.h.b16 %v2680
    %v2732 = vunpack.c.l.b16 %v2681
    %v2733 = vunpack.c.h.b16 %v2681
    %v2734 = vunpack.c.l.b16 %v2682
    %v2735 = vunpack.c.h.b16 %v2682
    %v2736 = vunpack.c.l.b16 %v2683
    %v2737 = vunpack.c.h.b16 %v2683
    %v2738 = vunpack.c.l.b16 %v2684
    %v2739 = vunpack.c.h.b16 %v2684
    %v2740 = vpack.c.b16 %v2710, %v2708
    %v2741 = vpack.c.b16 %v2711, %v2709
    %v2742 = vpack.c.b16 %v2714, %v2712
    %v2743 = vpack.c.b16 %v2715, %v2713
    %v2744 = vpack.c.b16 %v2718, %v2716
    %v2745 = vpack.c.b16 %v2719, %v2717
    %v2746 = vpack.c.b16 %v2722, %v2720
    %v2747 = vpack.c.b16 %v2723, %v2721
    %v2748 = vpack.c.b16 %v2726, %v2724
    %v2749 = vpack.c.b16 %v2727, %v2725
    %v2750 = vpack.c.b16 %v2730, %v2728
    %v2751 = vpack.c.b16 %v2731, %v2729
    %v2752 = vpack.c.b16 %v2734, %v2732
    %v2753 = vpack.c.b16 %v2735, %v2733
    %v2754 = vpack.c.b16 %v2738, %v2736
    %v2755 = vpack.c.b16 %v2739, %v2737
    %2772 = vmatpush.bf16.msra.mxu0 %v2754
    %2773 = vmatpush.bf16.msra.mxu0 %v2752
    %2774 = vmatpush.bf16.msra.mxu0 %v2750
    %2775 = vmatpush.bf16.msra.mxu0 %v2748
    %2776 = vmatpush.bf16.msra.mxu0 %v2746
    %2777 = vmatpush.bf16.msra.mxu0 %v2744
    %2778 = vmatpush.bf16.msra.mxu0 %v2742
    %2779 = vmatpush.bf16.msra.mxu0 %v2740
    %2780 = vmatmul.bf16.gmra.mxu0 %v2666
    %v2781 = vpop.f32.mrf.mxu0
    %v2782 = vadd.f32 %v2688, %v2781
    %v2783 = vpop.f32.mrf.mxu0
    %v2784 = vadd.f32 %v2688, %v2783
    %2785 = vmatmul.bf16.gmra.mxu0 %v2667
    %v2786 = vpop.f32.mrf.mxu0
    %v2787 = vadd.f32 %v2688, %v2786
    %v2788 = vpop.f32.mrf.mxu0
    %v2789 = vadd.f32 %v2688, %v2788
    %2790 = vdwg.mxu0
    %2791 = vmatpush.bf16.msra.mxu0 %v2755
    %2792 = vmatpush.bf16.msra.mxu0 %v2753
    %2793 = vmatpush.bf16.msra.mxu0 %v2751
    %2794 = vmatpush.bf16.msra.mxu0 %v2749
    %2795 = vmatpush.bf16.msra.mxu0 %v2747
    %2796 = vmatpush.bf16.msra.mxu0 %v2745
    %2797 = vmatpush.bf16.msra.mxu0 %v2743
    %2798 = vmatpush.bf16.msra.mxu0 %v2741
    %2799 = vmatmul.bf16.gmra.mxu0 %v2666
    %v2800 = vpop.f32.mrf.mxu0
    %v2801 = vadd.f32 %v2689, %v2800
    %v2802 = vpop.f32.mrf.mxu0
    %v2803 = vadd.f32 %v2689, %v2802
    %2804 = vmatmul.bf16.gmra.mxu0 %v2667
    %v2805 = vpop.f32.mrf.mxu0
    %v2806 = vadd.f32 %v2689, %v2805
    %v2807 = vpop.f32.mrf.mxu0
    %v2808 = vadd.f32 %v2689, %v2807
    %2809 = vdwg.mxu0
    %v2810 = vmul.f32 %v2782, 0.5
    %v2811 = vmul.f32 %v2801, 0.5
    %v2812 = vmul.f32 %v2784, 0.5
    %v2813 = vmul.f32 %v2803, 0.5
    %v2814 = vmul.f32 %v2787, 0.5
    %v2815 = vmul.f32 %v2806, 0.5
    %v2816 = vmul.f32 %v2789, 0.5
    %v2817 = vmul.f32 %v2808, 0.5
    %v2818 = vmul.f32 %v2782, 0.044715
    %v2819 = vmul.f32 %v2801, 0.044715
    %v2820 = vmul.f32 %v2784, 0.044715
    %v2821 = vmul.f32 %v2803, 0.044715
    %v2822 = vmul.f32 %v2787, 0.044715
    %v2823 = vmul.f32 %v2806, 0.044715
    %v2824 = vmul.f32 %v2789, 0.044715
    %v2825 = vmul.f32 %v2808, 0.044715
    %v2826 = vmul.f32 %v2818, %v2782
    %v2827 = vmul.f32 %v2819, %v2801
    %v2828 = vmul.f32 %v2820, %v2784
    %v2829 = vmul.f32 %v2821, %v2803
    %v2830 = vmul.f32 %v2822, %v2787
    %v2831 = vmul.f32 %v2823, %v2806
    %v2832 = vmul.f32 %v2824, %v2789
    %v2833 = vmul.f32 %v2825, %v2808
    %v2834 = vmul.f32 %v2826, %v2782
    %v2835 = vmul.f32 %v2827, %v2801
    %v2836 = vmul.f32 %v2828, %v2784
    %v2837 = vmul.f32 %v2829, %v2803
    %v2838 = vmul.f32 %v2830, %v2787
    %v2839 = vmul.f32 %v2831, %v2806
    %v2840 = vmul.f32 %v2832, %v2789
    %v2841 = vmul.f32 %v2833, %v2808
    %v2842 = vadd.f32 %v2782, %v2834
    %v2843 = vadd.f32 %v2801, %v2835
    %v2844 = vadd.f32 %v2784, %v2836
    %v2845 = vadd.f32 %v2803, %v2837
    %v2846 = vadd.f32 %v2787, %v2838
    %v2847 = vadd.f32 %v2806, %v2839
    %v2848 = vadd.f32 %v2789, %v2840
    %v2849 = vadd.f32 %v2808, %v2841
    %v2850 = vmul.f32 %v2842, 0.7978846
    %v2851 = vmul.f32 %v2843, 0.7978846
    %v2852 = vmul.f32 %v2844, 0.7978846
    %v2853 = vmul.f32 %v2845, 0.7978846
    %v2854 = vmul.f32 %v2846, 0.7978846
    %v2855 = vmul.f32 %v2847, 0.7978846
    %v2856 = vmul.f32 %v2848, 0.7978846
    %v2857 = vmul.f32 %v2849, 0.7978846
    %v2858 = vtanh.pop %v2850
    %v2859 = vtanh.pop %v2851
    %v2860 = vtanh.pop %v2852
    %v2861 = vtanh.pop %v2853
    %v2862 = vtanh.pop %v2854
    %v2863 = vtanh.pop %v2855
    %v2864 = vtanh.pop %v2856
    %v2865 = vtanh.pop %v2857
    %v2866 = vadd.f32 %v2858, 1.0
    %v2867 = vadd.f32 %v2859, 1.0
    %v2868 = vadd.f32 %v2860, 1.0
    %v2869 = vadd.f32 %v2861, 1.0
    %v2870 = vadd.f32 %v2862, 1.0
    %v2871 = vadd.f32 %v2863, 1.0
    %v2872 = vadd.f32 %v2864, 1.0
    %v2873 = vadd.f32 %v2865, 1.0
    %v2874 = vmul.f32 %v2810, %v2866
    %v2875 = vmul.f32 %v2811, %v2867
    %v2876 = vmul.f32 %v2812, %v2868
    %v2877 = vmul.f32 %v2813, %v2869
    %v2878 = vmul.f32 %v2814, %v2870
    %v2879 = vmul.f32 %v2815, %v2871
    %v2880 = vmul.f32 %v2816, %v2872
    %v2881 = vmul.f32 %v2817, %v2873
    %v2882 = vpack.c.bf16 %v2876, %v2874
    %v2883 = vpack.c.bf16 %v2877, %v2875
    %v2884 = vpack.c.bf16 %v2880, %v2878
    %v2885 = vpack.c.bf16 %v2881, %v2879
    %s2886 = scalar_lea.vmem [#allocation5], 128
    %v2887 = vld [vmem:[%s2886] sm:$0xf]
    %v2888 = vld [vmem:[%s2886 + $0x4] sm:$0xf]
    %v2889 = vld [vmem:[%s2886 + $0x8] sm:$0xf]
    %v2890 = vld [vmem:[%s2886 + $0xc] sm:$0xf]
    %v2891 = vld [vmem:[%s2886 + $0x10] sm:$0xf]
    %v2892 = vld [vmem:[%s2886 + $0x14] sm:$0xf]
    %v2893 = vld [vmem:[%s2886 + $0x18] sm:$0xf]
    %v2894 = vld [vmem:[%s2886 + $0x1c] sm:$0xf]
    %v2895 = vld [vmem:[%s2886 + $0x20] sm:$0xf]
    %v2896 = vld [vmem:[%s2886 + $0x24] sm:$0xf]
    %v2897 = vld [vmem:[%s2886 + $0x28] sm:$0xf]
    %v2898 = vld [vmem:[%s2886 + $0x2c] sm:$0xf]
    %v2899 = vld [vmem:[%s2886 + $0x30] sm:$0xf]
    %v2900 = vld [vmem:[%s2886 + $0x34] sm:$0xf]
    %v2901 = vld [vmem:[%s2886 + $0x38] sm:$0xf]
    %v2902 = vld [vmem:[%s2886 + $0x3c] sm:$0xf]
    %v2903 = vld [vmem:[%s2886 + $0x40] sm:$0xf]
    %v2904 = vld [vmem:[%s2886 + $0x44] sm:$0xf]
    %v2905 = vld [vmem:[%s2886 + $0x48] sm:$0xf]
    %v2906 = vld [vmem:[%s2886 + $0x4c] sm:$0xf]
    %v2907 = vld [vmem:[%s2886 + $0x50] sm:$0xf]
    %v2908 = vld [vmem:[%s2886 + $0x54] sm:$0xf]
    %v2909 = vld [vmem:[%s2886 + $0x58] sm:$0xf]
    %v2910 = vld [vmem:[%s2886 + $0x5c] sm:$0xf]
    %v2911 = vld [vmem:[%s2886 + $0x60] sm:$0xf]
    %v2912 = vld [vmem:[%s2886 + $0x64] sm:$0xf]
    %v2913 = vld [vmem:[%s2886 + $0x68] sm:$0xf]
    %v2914 = vld [vmem:[%s2886 + $0x6c] sm:$0xf]
    %v2915 = vld [vmem:[%s2886 + $0x70] sm:$0xf]
    %v2916 = vld [vmem:[%s2886 + $0x74] sm:$0xf]
    %v2917 = vld [vmem:[%s2886 + $0x78] sm:$0xf]
    %v2918 = vld [vmem:[%s2886 + $0x7c] sm:$0xf]
    %s2919 = scalar_lea.vmem %s13, 1
    %v2920 = vld [vmem:[%s2919] sm:$0x1]
    %v2922 = vperm.slane %v2920, 0
    %v2956 = vunpack.c.l.b16 %v2887
    %v2957 = vunpack.c.l.b16 %v2888
    %v2958 = vunpack.c.l.b16 %v2889
    %v2959 = vunpack.c.l.b16 %v2890
    %v2960 = vunpack.c.l.b16 %v2891
    %v2961 = vunpack.c.l.b16 %v2892
    %v2962 = vunpack.c.l.b16 %v2893
    %v2963 = vunpack.c.l.b16 %v2894
    %v2964 = vunpack.c.l.b16 %v2895
    %v2965 = vunpack.c.l.b16 %v2896
    %v2966 = vunpack.c.l.b16 %v2897
    %v2967 = vunpack.c.l.b16 %v2898
    %v2968 = vunpack.c.l.b16 %v2899
    %v2969 = vunpack.c.l.b16 %v2900
    %v2970 = vunpack.c.l.b16 %v2901
    %v2971 = vunpack.c.l.b16 %v2902
    %v2972 = vunpack.c.l.b16 %v2903
    %v2973 = vunpack.c.l.b16 %v2904
    %v2974 = vunpack.c.l.b16 %v2905
    %v2975 = vunpack.c.l.b16 %v2906
    %v2976 = vunpack.c.l.b16 %v2907
    %v2977 = vunpack.c.l.b16 %v2908
    %v2978 = vunpack.c.l.b16 %v2909
    %v2979 = vunpack.c.l.b16 %v2910
    %v2980 = vunpack.c.l.b16 %v2911
    %v2981 = vunpack.c.l.b16 %v2912
    %v2982 = vunpack.c.l.b16 %v2913
    %v2983 = vunpack.c.l.b16 %v2914
    %v2984 = vunpack.c.l.b16 %v2915
    %v2985 = vunpack.c.l.b16 %v2916
    %v2986 = vunpack.c.l.b16 %v2917
    %v2987 = vunpack.c.l.b16 %v2918
    %v2988 = vpack.c.b16 %v2957, %v2956
    %v2989 = vpack.c.b16 %v2959, %v2958
    %v2990 = vpack.c.b16 %v2961, %v2960
    %v2991 = vpack.c.b16 %v2963, %v2962
    %v2992 = vpack.c.b16 %v2965, %v2964
    %v2993 = vpack.c.b16 %v2967, %v2966
    %v2994 = vpack.c.b16 %v2969, %v2968
    %v2995 = vpack.c.b16 %v2971, %v2970
    %v2996 = vpack.c.b16 %v2973, %v2972
    %v2997 = vpack.c.b16 %v2975, %v2974
    %v2998 = vpack.c.b16 %v2977, %v2976
    %v2999 = vpack.c.b16 %v2979, %v2978
    %v3000 = vpack.c.b16 %v2981, %v2980
    %v3001 = vpack.c.b16 %v2983, %v2982
    %v3002 = vpack.c.b16 %v2985, %v2984
    %v3003 = vpack.c.b16 %v2987, %v2986
    %3020 = vmatpush.bf16.msra.mxu0 %v2995
    %3021 = vmatpush.bf16.msra.mxu0 %v2994
    %3022 = vmatpush.bf16.msra.mxu0 %v2993
    %3023 = vmatpush.bf16.msra.mxu0 %v2992
    %3024 = vmatpush.bf16.msra.mxu0 %v2991
    %3025 = vmatpush.bf16.msra.mxu0 %v2990
    %3026 = vmatpush.bf16.msra.mxu0 %v2989
    %3027 = vmatpush.bf16.msra.mxu0 %v2988
    %3028 = vmatmul.bf16.gmra.mxu0 %v2882
    %v3029 = vpop.f32.mrf.mxu0
    %v3030 = vadd.f32 %v2922, %v3029
    %v3031 = vpop.f32.mrf.mxu0
    %v3032 = vadd.f32 %v2922, %v3031
    %3033 = vmatmul.bf16.gmra.mxu0 %v2884
    %v3034 = vpop.f32.mrf.mxu0
    %v3035 = vadd.f32 %v2922, %v3034
    %v3036 = vpop.f32.mrf.mxu0
    %v3037 = vadd.f32 %v2922, %v3036
    %3038 = vdwg.mxu0
    %3039 = vmatpush.bf16.msra.mxu0 %v3003
    %3040 = vmatpush.bf16.msra.mxu0 %v3002
    %3041 = vmatpush.bf16.msra.mxu0 %v3001
    %3042 = vmatpush.bf16.msra.mxu0 %v3000
    %3043 = vmatpush.bf16.msra.mxu0 %v2999
    %3044 = vmatpush.bf16.msra.mxu0 %v2998
    %3045 = vmatpush.bf16.msra.mxu0 %v2997
    %3046 = vmatpush.bf16.msra.mxu0 %v2996
    %3047 = vmatmul.bf16.gmra.mxu0 %v2883
    %v3048 = vpop.f32.mrf.mxu0
    %v3049 = vadd.f32 %v3030, %v3048
    %v3050 = vpop.f32.mrf.mxu0
    %v3051 = vadd.f32 %v3032, %v3050
    %3052 = vmatmul.bf16.gmra.mxu0 %v2885
    %v3053 = vpop.f32.mrf.mxu0
    %v3054 = vadd.f32 %v3035, %v3053
    %v3055 = vpop.f32.mrf.mxu0
    %v3056 = vadd.f32 %v3037, %v3055
    %3057 = vdwg.mxu0
    %v3058 = vadd.f32 %v2662, %v3049
    %v3059 = vadd.f32 %v2663, %v3051
    %v3060 = vadd.f32 %v2664, %v3054
    %v3061 = vadd.f32 %v2665, %v3056
    %s3062 = scalar_lea.vmem %s14, 1
    %v3063 = vld [vmem:[%s3062] sm:$0x1]
    %s3064 = scalar_lea.vmem %s15, 1
    %v3065 = vld [vmem:[%s3064] sm:$0x1]
    %3066 = vadd.xlane.f32.xlu0 %v3058
    %v3067 = vpop.xlane.xlu0 %3066
    %3068 = vadd.xlane.f32.xlu0 %v3059
    %v3069 = vpop.xlane.xlu0 %3068
    %3070 = vadd.xlane.f32.xlu0 %v3060
    %v3071 = vpop.xlane.xlu0 %3070
    %3072 = vadd.xlane.f32.xlu0 %v3061
    %v3073 = vpop.xlane.xlu0 %3072
    %v3074 = vmul.f32 %v3067, %v156
    %v3075 = vmul.f32 %v3069, %v156
    %v3076 = vmul.f32 %v3071, %v156
    %v3077 = vmul.f32 %v3073, %v156
    %v3078 = vsub.f32 %v3058, %v3074
    %v3079 = vsub.f32 %v3059, %v3075
    %v3080 = vsub.f32 %v3060, %v3076
    %v3081 = vsub.f32 %v3061, %v3077
    %v3082 = vmul.f32 %v3078, %v3078
    %v3083 = vmul.f32 %v3079, %v3079
    %v3084 = vmul.f32 %v3080, %v3080
    %v3085 = vmul.f32 %v3081, %v3081
    %3086 = vadd.xlane.f32.xlu0 %v3082
    %v3087 = vpop.xlane.xlu0 %3086
    %3088 = vadd.xlane.f32.xlu0 %v3083
    %v3089 = vpop.xlane.xlu0 %3088
    %3090 = vadd.xlane.f32.xlu0 %v3084
    %v3091 = vpop.xlane.xlu0 %3090
    %3092 = vadd.xlane.f32.xlu0 %v3085
    %v3093 = vpop.xlane.xlu0 %3092
    %v3094 = vmul.f32 %v3087, %v156
    %v3095 = vmul.f32 %v3089, %v156
    %v3096 = vmul.f32 %v3091, %v156
    %v3097 = vmul.f32 %v3093, %v156
    %v3098 = vadd.f32 %v3094, 1e-12
    %v3099 = vadd.f32 %v3095, 1e-12
    %v3100 = vadd.f32 %v3096, 1e-12
    %v3101 = vadd.f32 %v3097, 1e-12
    %v3102 = vrsqrt.pop %v3098
    %v3103 = vmul.f32 %v3102, %v3098
    %v3104 = vmul.f32 %v3103, %v3102
    %v3105 = vmul.f32 0.5, %v3104
    %v3106 = vsub.f32 1.5, %v3105
    %v3107 = vmul.f32 %v3102, %v3106
    %vm3108 = vweird.f32 %v3098
    %vm3109 = vweird.f32 %v3102
    %vm3110 = vmor %vm3108, %vm3109
    %v3111 = vsel %vm3110, %v3102, %v3107
    %v3112 = vrsqrt.pop %v3099
    %v3113 = vmul.f32 %v3112, %v3099
    %v3114 = vmul.f32 %v3113, %v3112
    %v3115 = vmul.f32 0.5, %v3114
    %v3116 = vsub.f32 1.5, %v3115
    %v3117 = vmul.f32 %v3112, %v3116
    %vm3118 = vweird.f32 %v3099
    %vm3119 = vweird.f32 %v3112
    %vm3120 = vmor %vm3118, %vm3119
    %v3121 = vsel %vm3120, %v3112, %v3117
    %v3122 = vrsqrt.pop %v3100
    %v3123 = vmul.f32 %v3122, %v3100
    %v3124 = vmul.f32 %v3123, %v3122
    %v3125 = vmul.f32 0.5, %v3124
    %v3126 = vsub.f32 1.5, %v3125
    %v3127 = vmul.f32 %v3122, %v3126
    %vm3128 = vweird.f32 %v3100
    %vm3129 = vweird.f32 %v3122
    %vm3130 = vmor %vm3128, %vm3129
    %v3131 = vsel %vm3130, %v3122, %v3127
    %v3132 = vrsqrt.pop %v3101
    %v3133 = vmul.f32 %v3132, %v3101
    %v3134 = vmul.f32 %v3133, %v3132
    %v3135 = vmul.f32 0.5, %v3134
    %v3136 = vsub.f32 1.5, %v3135
    %v3137 = vmul.f32 %v3132, %v3136
    %vm3138 = vweird.f32 %v3101
    %vm3139 = vweird.f32 %v3132
    %vm3140 = vmor %vm3138, %vm3139
    %v3141 = vsel %vm3140, %v3132, %v3137
    %v3142 = vmul.f32 %v3078, %v3111
    %v3143 = vmul.f32 %v3079, %v3121
    %v3144 = vmul.f32 %v3080, %v3131
    %v3145 = vmul.f32 %v3081, %v3141
    %v3147 = vperm.slane %v3063, 0
    %v3149 = vmul.f32 %v3142, %v3147
    %v3150 = vmul.f32 %v3143, %v3147
    %v3151 = vmul.f32 %v3144, %v3147
    %v3152 = vmul.f32 %v3145, %v3147
    %v3154 = vperm.slane %v3065, 0
    %v3156 = vadd.f32 %v3149, %v3154
    %v3157 = vadd.f32 %v3150, %v3154
    %v3158 = vadd.f32 %v3151, %v3154
    %v3159 = vadd.f32 %v3152, %v3154
    %v3161 = vrot.slane %v3157, 7
    %v3164 = vrot.slane %v3158, 6
    %v3167 = vrot.slane %v3159, 5
    %vm3169 = vcmask 1040384
    %v3170 = vsel %vm3169, %v3156, %v3161
    %vm3171 = vcmask 1041408
    %v3172 = vsel %vm3171, %v3170, %v3164
    %vm3173 = vcmask 1042432
    %v3174 = vsel %vm3173, %v3172, %v3167
    %v3175 = vld [vmem:[%s16] sm:$0xf]
    %v3176 = vadd.f32 %v3174, %v3175
    %v3177 = vpack.c.bf16 %v3176, %v3176
    %v3178 = vld [vmem:[#allocation7] sm:$0xff]
    %v3179 = vld [vmem:[#allocation7 + $0x8] sm:$0xff]
    %v3180 = vld [vmem:[#allocation7 + $0x10] sm:$0xff]
    %v3181 = vld [vmem:[#allocation7 + $0x18] sm:$0xff]
    %v3182 = vld [vmem:[#allocation7 + $0x20] sm:$0xff]
    %v3183 = vld [vmem:[#allocation7 + $0x28] sm:$0xff]
    %v3184 = vld [vmem:[#allocation7 + $0x30] sm:$0xff]
    %v3185 = vld [vmem:[#allocation7 + $0x38] sm:$0xff]
    %v3186 = vld [vmem:[#allocation7 + $0x40] sm:$0xff]
    %v3187 = vld [vmem:[#allocation7 + $0x48] sm:$0xff]
    %v3188 = vld [vmem:[#allocation7 + $0x50] sm:$0xff]
    %v3189 = vld [vmem:[#allocation7 + $0x58] sm:$0xff]
    %v3190 = vld [vmem:[#allocation7 + $0x60] sm:$0xff]
    %v3191 = vld [vmem:[#allocation7 + $0x68] sm:$0xff]
    %v3192 = vld [vmem:[#allocation7 + $0x70] sm:$0xff]
    %v3193 = vld [vmem:[#allocation7 + $0x78] sm:$0xff]
    %v3194 = vld [vmem:[#allocation7 + $0x80] sm:$0xff]
    %v3195 = vld [vmem:[#allocation7 + $0x88] sm:$0xff]
    %v3196 = vld [vmem:[#allocation7 + $0x90] sm:$0xff]
    %v3197 = vld [vmem:[#allocation7 + $0x98] sm:$0xff]
    %v3198 = vld [vmem:[#allocation7 + $0xa0] sm:$0xff]
    %v3199 = vld [vmem:[#allocation7 + $0xa8] sm:$0xff]
    %v3200 = vld [vmem:[#allocation7 + $0xb0] sm:$0xff]
    %v3201 = vld [vmem:[#allocation7 + $0xb8] sm:$0xff]
    %v3202 = vld [vmem:[#allocation7 + $0xc0] sm:$0xff]
    %v3203 = vld [vmem:[#allocation7 + $0xc8] sm:$0xff]
    %v3204 = vld [vmem:[#allocation7 + $0xd0] sm:$0xff]
    %v3205 = vld [vmem:[#allocation7 + $0xd8] sm:$0xff]
    %v3206 = vld [vmem:[#allocation7 + $0xe0] sm:$0xff]
    %v3207 = vld [vmem:[#allocation7 + $0xe8] sm:$0xff]
    %v3208 = vld [vmem:[#allocation7 + $0xf0] sm:$0xff]
    %v3209 = vld [vmem:[#allocation7 + $0xf8] sm:$0xff]
    %v3210 = vld [vmem:[%s19] sm:$0xf]
    %v3212 = vperm.slane %v3210, 0
    %v3213 = vperm.slane %v3210, 1
    %v3214 = vperm.slane %v3210, 2
    %v3215 = vperm.slane %v3210, 3
    %v3252 = vunpack.c.l.b16 %v3178
    %v3253 = vunpack.c.h.b16 %v3178
    %v3254 = vunpack.c.l.b16 %v3179
    %v3255 = vunpack.c.h.b16 %v3179
    %v3256 = vunpack.c.l.b16 %v3180
    %v3257 = vunpack.c.h.b16 %v3180
    %v3258 = vunpack.c.l.b16 %v3181
    %v3259 = vunpack.c.h.b16 %v3181
    %v3260 = vunpack.c.l.b16 %v3182
    %v3261 = vunpack.c.h.b16 %v3182
    %v3262 = vunpack.c.l.b16 %v3183
    %v3263 = vunpack.c.h.b16 %v3183
    %v3264 = vunpack.c.l.b16 %v3184
    %v3265 = vunpack.c.h.b16 %v3184
    %v3266 = vunpack.c.l.b16 %v3185
    %v3267 = vunpack.c.h.b16 %v3185
    %v3268 = vunpack.c.l.b16 %v3186
    %v3269 = vunpack.c.h.b16 %v3186
    %v3270 = vunpack.c.l.b16 %v3187
    %v3271 = vunpack.c.h.b16 %v3187
    %v3272 = vunpack.c.l.b16 %v3188
    %v3273 = vunpack.c.h.b16 %v3188
    %v3274 = vunpack.c.l.b16 %v3189
    %v3275 = vunpack.c.h.b16 %v3189
    %v3276 = vunpack.c.l.b16 %v3190
    %v3277 = vunpack.c.h.b16 %v3190
    %v3278 = vunpack.c.l.b16 %v3191
    %v3279 = vunpack.c.h.b16 %v3191
    %v3280 = vunpack.c.l.b16 %v3192
    %v3281 = vunpack.c.h.b16 %v3192
    %v3282 = vunpack.c.l.b16 %v3193
    %v3283 = vunpack.c.h.b16 %v3193
    %v3284 = vunpack.c.l.b16 %v3194
    %v3285 = vunpack.c.h.b16 %v3194
    %v3286 = vunpack.c.l.b16 %v3195
    %v3287 = vunpack.c.h.b16 %v3195
    %v3288 = vunpack.c.l.b16 %v3196
    %v3289 = vunpack.c.h.b16 %v3196
    %v3290 = vunpack.c.l.b16 %v3197
    %v3291 = vunpack.c.h.b16 %v3197
    %v3292 = vunpack.c.l.b16 %v3198
    %v3293 = vunpack.c.h.b16 %v3198
    %v3294 = vunpack.c.l.b16 %v3199
    %v3295 = vunpack.c.h.b16 %v3199
    %v3296 = vunpack.c.l.b16 %v3200
    %v3297 = vunpack.c.h.b16 %v3200
    %v3298 = vunpack.c.l.b16 %v3201
    %v3299 = vunpack.c.h.b16 %v3201
    %v3300 = vunpack.c.l.b16 %v3202
    %v3301 = vunpack.c.h.b16 %v3202
    %v3302 = vunpack.c.l.b16 %v3203
    %v3303 = vunpack.c.h.b16 %v3203
    %v3304 = vunpack.c.l.b16 %v3204
    %v3305 = vunpack.c.h.b16 %v3204
    %v3306 = vunpack.c.l.b16 %v3205
    %v3307 = vunpack.c.h.b16 %v3205
    %v3308 = vunpack.c.l.b16 %v3206
    %v3309 = vunpack.c.h.b16 %v3206
    %v3310 = vunpack.c.l.b16 %v3207
    %v3311 = vunpack.c.h.b16 %v3207
    %v3312 = vunpack.c.l.b16 %v3208
    %v3313 = vunpack.c.h.b16 %v3208
    %v3314 = vunpack.c.l.b16 %v3209
    %v3315 = vunpack.c.h.b16 %v3209
    %v3316 = vpack.c.b16 %v3256, %v3252
    %v3317 = vpack.c.b16 %v3257, %v3253
    %v3318 = vpack.c.b16 %v3258, %v3254
    %v3319 = vpack.c.b16 %v3259, %v3255
    %v3320 = vpack.c.b16 %v3264, %v3260
    %v3321 = vpack.c.b16 %v3265, %v3261
    %v3322 = vpack.c.b16 %v3266, %v3262
    %v3323 = vpack.c.b16 %v3267, %v3263
    %v3324 = vpack.c.b16 %v3272, %v3268
    %v3325 = vpack.c.b16 %v3273, %v3269
    %v3326 = vpack.c.b16 %v3274, %v3270
    %v3327 = vpack.c.b16 %v3275, %v3271
    %v3328 = vpack.c.b16 %v3280, %v3276
    %v3329 = vpack.c.b16 %v3281, %v3277
    %v3330 = vpack.c.b16 %v3282, %v3278
    %v3331 = vpack.c.b16 %v3283, %v3279
    %v3332 = vpack.c.b16 %v3288, %v3284
    %v3333 = vpack.c.b16 %v3289, %v3285
    %v3334 = vpack.c.b16 %v3290, %v3286
    %v3335 = vpack.c.b16 %v3291, %v3287
    %v3336 = vpack.c.b16 %v3296, %v3292
    %v3337 = vpack.c.b16 %v3297, %v3293
    %v3338 = vpack.c.b16 %v3298, %v3294
    %v3339 = vpack.c.b16 %v3299, %v3295
    %v3340 = vpack.c.b16 %v3304, %v3300
    %v3341 = vpack.c.b16 %v3305, %v3301
    %v3342 = vpack.c.b16 %v3306, %v3302
    %v3343 = vpack.c.b16 %v3307, %v3303
    %v3344 = vpack.c.b16 %v3312, %v3308
    %v3345 = vpack.c.b16 %v3313, %v3309
    %v3346 = vpack.c.b16 %v3314, %v3310
    %v3347 = vpack.c.b16 %v3315, %v3311
    %3380 = vmatpush.bf16.msra.mxu0 %v3344
    %3381 = vmatpush.bf16.msra.mxu0 %v3340
    %3382 = vmatpush.bf16.msra.mxu0 %v3336
    %3383 = vmatpush.bf16.msra.mxu0 %v3332
    %3384 = vmatpush.bf16.msra.mxu0 %v3328
    %3385 = vmatpush.bf16.msra.mxu0 %v3324
    %3386 = vmatpush.bf16.msra.mxu0 %v3320
    %3387 = vmatpush.bf16.msra.mxu0 %v3316
    %3388 = vmatmul.bf16.gmra.mxu0 %v3177
    %v3389 = vpop.f32.mrf.mxu0
    %v3390 = vadd.f32 %v3212, %v3389
    %v3391 = vpop.f32.mrf.mxu0
    %3392 = vdwg.mxu0
    %3393 = vmatpush.bf16.msra.mxu0 %v3345
    %3394 = vmatpush.bf16.msra.mxu0 %v3341
    %3395 = vmatpush.bf16.msra.mxu0 %v3337
    %3396 = vmatpush.bf16.msra.mxu0 %v3333
    %3397 = vmatpush.bf16.msra.mxu0 %v3329
    %3398 = vmatpush.bf16.msra.mxu0 %v3325
    %3399 = vmatpush.bf16.msra.mxu0 %v3321
    %3400 = vmatpush.bf16.msra.mxu0 %v3317
    %3401 = vmatmul.bf16.gmra.mxu0 %v3177
    %v3402 = vpop.f32.mrf.mxu0
    %v3403 = vadd.f32 %v3213, %v3402
    %v3404 = vpop.f32.mrf.mxu0
    %3405 = vdwg.mxu0
    %3406 = vmatpush.bf16.msra.mxu0 %v3346
    %3407 = vmatpush.bf16.msra.mxu0 %v3342
    %3408 = vmatpush.bf16.msra.mxu0 %v3338
    %3409 = vmatpush.bf16.msra.mxu0 %v3334
    %3410 = vmatpush.bf16.msra.mxu0 %v3330
    %3411 = vmatpush.bf16.msra.mxu0 %v3326
    %3412 = vmatpush.bf16.msra.mxu0 %v3322
    %3413 = vmatpush.bf16.msra.mxu0 %v3318
    %3414 = vmatmul.bf16.gmra.mxu0 %v3177
    %v3415 = vpop.f32.mrf.mxu0
    %v3416 = vadd.f32 %v3214, %v3415
    %v3417 = vpop.f32.mrf.mxu0
    %3418 = vdwg.mxu0
    %3419 = vmatpush.bf16.msra.mxu0 %v3347
    %3420 = vmatpush.bf16.msra.mxu0 %v3343
    %3421 = vmatpush.bf16.msra.mxu0 %v3339
    %3422 = vmatpush.bf16.msra.mxu0 %v3335
    %3423 = vmatpush.bf16.msra.mxu0 %v3331
    %3424 = vmatpush.bf16.msra.mxu0 %v3327
    %3425 = vmatpush.bf16.msra.mxu0 %v3323
    %3426 = vmatpush.bf16.msra.mxu0 %v3319
    %3427 = vmatmul.bf16.gmra.mxu0 %v3177
    %v3428 = vpop.f32.mrf.mxu0
    %v3429 = vadd.f32 %v3215, %v3428
    %v3430 = vpop.f32.mrf.mxu0
    %3431 = vdwg.mxu0
    %v3432 = vld [vmem:[#allocation8] sm:$0xff]
    %v3433 = vld [vmem:[#allocation8 + $0x8] sm:$0xff]
    %v3434 = vld [vmem:[#allocation8 + $0x10] sm:$0xff]
    %v3435 = vld [vmem:[#allocation8 + $0x18] sm:$0xff]
    %v3436 = vld [vmem:[#allocation8 + $0x20] sm:$0xff]
    %v3437 = vld [vmem:[#allocation8 + $0x28] sm:$0xff]
    %v3438 = vld [vmem:[#allocation8 + $0x30] sm:$0xff]
    %v3439 = vld [vmem:[#allocation8 + $0x38] sm:$0xff]
    %v3440 = vld [vmem:[#allocation8 + $0x40] sm:$0xff]
    %v3441 = vld [vmem:[#allocation8 + $0x48] sm:$0xff]
    %v3442 = vld [vmem:[#allocation8 + $0x50] sm:$0xff]
    %v3443 = vld [vmem:[#allocation8 + $0x58] sm:$0xff]
    %v3444 = vld [vmem:[#allocation8 + $0x60] sm:$0xff]
    %v3445 = vld [vmem:[#allocation8 + $0x68] sm:$0xff]
    %v3446 = vld [vmem:[#allocation8 + $0x70] sm:$0xff]
    %v3447 = vld [vmem:[#allocation8 + $0x78] sm:$0xff]
    %v3448 = vld [vmem:[#allocation8 + $0x80] sm:$0xff]
    %v3449 = vld [vmem:[#allocation8 + $0x88] sm:$0xff]
    %v3450 = vld [vmem:[#allocation8 + $0x90] sm:$0xff]
    %v3451 = vld [vmem:[#allocation8 + $0x98] sm:$0xff]
    %v3452 = vld [vmem:[#allocation8 + $0xa0] sm:$0xff]
    %v3453 = vld [vmem:[#allocation8 + $0xa8] sm:$0xff]
    %v3454 = vld [vmem:[#allocation8 + $0xb0] sm:$0xff]
    %v3455 = vld [vmem:[#allocation8 + $0xb8] sm:$0xff]
    %v3456 = vld [vmem:[#allocation8 + $0xc0] sm:$0xff]
    %v3457 = vld [vmem:[#allocation8 + $0xc8] sm:$0xff]
    %v3458 = vld [vmem:[#allocation8 + $0xd0] sm:$0xff]
    %v3459 = vld [vmem:[#allocation8 + $0xd8] sm:$0xff]
    %v3460 = vld [vmem:[#allocation8 + $0xe0] sm:$0xff]
    %v3461 = vld [vmem:[#allocation8 + $0xe8] sm:$0xff]
    %v3462 = vld [vmem:[#allocation8 + $0xf0] sm:$0xff]
    %v3463 = vld [vmem:[#allocation8 + $0xf8] sm:$0xff]
    %v3496 = vunpack.c.l.b16 %v3432
    %v3497 = vunpack.c.h.b16 %v3432
    %v3498 = vunpack.c.l.b16 %v3433
    %v3499 = vunpack.c.h.b16 %v3433
    %v3500 = vunpack.c.l.b16 %v3434
    %v3501 = vunpack.c.h.b16 %v3434
    %v3502 = vunpack.c.l.b16 %v3435
    %v3503 = vunpack.c.h.b16 %v3435
    %v3504 = vunpack.c.l.b16 %v3436
    %v3505 = vunpack.c.h.b16 %v3436
    %v3506 = vunpack.c.l.b16 %v3437
    %v3507 = vunpack.c.h.b16 %v3437
    %v3508 = vunpack.c.l.b16 %v3438
    %v3509 = vunpack.c.h.b16 %v3438
    %v3510 = vunpack.c.l.b16 %v3439
    %v3511 = vunpack.c.h.b16 %v3439
    %v3512 = vunpack.c.l.b16 %v3440
    %v3513 = vunpack.c.h.b16 %v3440
    %v3514 = vunpack.c.l.b16 %v3441
    %v3515 = vunpack.c.h.b16 %v3441
    %v3516 = vunpack.c.l.b16 %v3442
    %v3517 = vunpack.c.h.b16 %v3442
    %v3518 = vunpack.c.l.b16 %v3443
    %v3519 = vunpack.c.h.b16 %v3443
    %v3520 = vunpack.c.l.b16 %v3444
    %v3521 = vunpack.c.h.b16 %v3444
    %v3522 = vunpack.c.l.b16 %v3445
    %v3523 = vunpack.c.h.b16 %v3445
    %v3524 = vunpack.c.l.b16 %v3446
    %v3525 = vunpack.c.h.b16 %v3446
    %v3526 = vunpack.c.l.b16 %v3447
    %v3527 = vunpack.c.h.b16 %v3447
    %v3528 = vunpack.c.l.b16 %v3448
    %v3529 = vunpack.c.h.b16 %v3448
    %v3530 = vunpack.c.l.b16 %v3449
    %v3531 = vunpack.c.h.b16 %v3449
    %v3532 = vunpack.c.l.b16 %v3450
    %v3533 = vunpack.c.h.b16 %v3450
    %v3534 = vunpack.c.l.b16 %v3451
    %v3535 = vunpack.c.h.b16 %v3451
    %v3536 = vunpack.c.l.b16 %v3452
    %v3537 = vunpack.c.h.b16 %v3452
    %v3538 = vunpack.c.l.b16 %v3453
    %v3539 = vunpack.c.h.b16 %v3453
    %v3540 = vunpack.c.l.b16 %v3454
    %v3541 = vunpack.c.h.b16 %v3454
    %v3542 = vunpack.c.l.b16 %v3455
    %v3543 = vunpack.c.h.b16 %v3455
    %v3544 = vunpack.c.l.b16 %v3456
    %v3545 = vunpack.c.h.b16 %v3456
    %v3546 = vunpack.c.l.b16 %v3457
    %v3547 = vunpack.c.h.b16 %v3457
    %v3548 = vunpack.c.l.b16 %v3458
    %v3549 = vunpack.c.h.b16 %v3458
    %v3550 = vunpack.c.l.b16 %v3459
    %v3551 = vunpack.c.h.b16 %v3459
    %v3552 = vunpack.c.l.b16 %v3460
    %v3553 = vunpack.c.h.b16 %v3460
    %v3554 = vunpack.c.l.b16 %v3461
    %v3555 = vunpack.c.h.b16 %v3461
    %v3556 = vunpack.c.l.b16 %v3462
    %v3557 = vunpack.c.h.b16 %v3462
    %v3558 = vunpack.c.l.b16 %v3463
    %v3559 = vunpack.c.h.b16 %v3463
    %v3560 = vpack.c.b16 %v3500, %v3496
    %v3561 = vpack.c.b16 %v3501, %v3497
    %v3562 = vpack.c.b16 %v3502, %v3498
    %v3563 = vpack.c.b16 %v3503, %v3499
    %v3564 = vpack.c.b16 %v3508, %v3504
    %v3565 = vpack.c.b16 %v3509, %v3505
    %v3566 = vpack.c.b16 %v3510, %v3506
    %v3567 = vpack.c.b16 %v3511, %v3507
    %v3568 = vpack.c.b16 %v3516, %v3512
    %v3569 = vpack.c.b16 %v3517, %v3513
    %v3570 = vpack.c.b16 %v3518, %v3514
    %v3571 = vpack.c.b16 %v3519, %v3515
    %v3572 = vpack.c.b16 %v3524, %v3520
    %v3573 = vpack.c.b16 %v3525, %v3521
    %v3574 = vpack.c.b16 %v3526, %v3522
    %v3575 = vpack.c.b16 %v3527, %v3523
    %v3576 = vpack.c.b16 %v3532, %v3528
    %v3577 = vpack.c.b16 %v3533, %v3529
    %v3578 = vpack.c.b16 %v3534, %v3530
    %v3579 = vpack.c.b16 %v3535, %v3531
    %v3580 = vpack.c.b16 %v3540, %v3536
    %v3581 = vpack.c.b16 %v3541, %v3537
    %v3582 = vpack.c.b16 %v3542, %v3538
    %v3583 = vpack.c.b16 %v3543, %v3539
    %v3584 = vpack.c.b16 %v3548, %v3544
    %v3585 = vpack.c.b16 %v3549, %v3545
    %v3586 = vpack.c.b16 %v3550, %v3546
    %v3587 = vpack.c.b16 %v3551, %v3547
    %v3588 = vpack.c.b16 %v3556, %v3552
    %v3589 = vpack.c.b16 %v3557, %v3553
    %v3590 = vpack.c.b16 %v3558, %v3554
    %v3591 = vpack.c.b16 %v3559, %v3555
    %3624 = vmatpush.bf16.msra.mxu0 %v3588
    %3625 = vmatpush.bf16.msra.mxu0 %v3584
    %3626 = vmatpush.bf16.msra.mxu0 %v3580
    %3627 = vmatpush.bf16.msra.mxu0 %v3576
    %3628 = vmatpush.bf16.msra.mxu0 %v3572
    %3629 = vmatpush.bf16.msra.mxu0 %v3568
    %3630 = vmatpush.bf16.msra.mxu0 %v3564
    %3631 = vmatpush.bf16.msra.mxu0 %v3560
    %3632 = vmatmul.bf16.gmra.mxu0 0
    %v3633 = vpop.f32.mrf.mxu0
    %v3634 = vadd.f32 0.0, %v3633
    %v3635 = vpop.f32.mrf.mxu0
    %3636 = vdwg.mxu0
    %3637 = vmatpush.bf16.msra.mxu0 %v3589
    %3638 = vmatpush.bf16.msra.mxu0 %v3585
    %3639 = vmatpush.bf16.msra.mxu0 %v3581
    %3640 = vmatpush.bf16.msra.mxu0 %v3577
    %3641 = vmatpush.bf16.msra.mxu0 %v3573
    %3642 = vmatpush.bf16.msra.mxu0 %v3569
    %3643 = vmatpush.bf16.msra.mxu0 %v3565
    %3644 = vmatpush.bf16.msra.mxu0 %v3561
    %3645 = vmatmul.bf16.gmra.mxu0 0
    %v3646 = vpop.f32.mrf.mxu0
    %v3647 = vadd.f32 0.0, %v3646
    %v3648 = vpop.f32.mrf.mxu0
    %3649 = vdwg.mxu0
    %3650 = vmatpush.bf16.msra.mxu0 %v3590
    %3651 = vmatpush.bf16.msra.mxu0 %v3586
    %3652 = vmatpush.bf16.msra.mxu0 %v3582
    %3653 = vmatpush.bf16.msra.mxu0 %v3578
    %3654 = vmatpush.bf16.msra.mxu0 %v3574
    %3655 = vmatpush.bf16.msra.mxu0 %v3570
    %3656 = vmatpush.bf16.msra.mxu0 %v3566
    %3657 = vmatpush.bf16.msra.mxu0 %v3562
    %3658 = vmatmul.bf16.gmra.mxu0 0
    %v3659 = vpop.f32.mrf.mxu0
    %v3660 = vadd.f32 0.0, %v3659
    %v3661 = vpop.f32.mrf.mxu0
    %3662 = vdwg.mxu0
    %3663 = vmatpush.bf16.msra.mxu0 %v3591
    %3664 = vmatpush.bf16.msra.mxu0 %v3587
    %3665 = vmatpush.bf16.msra.mxu0 %v3583
    %3666 = vmatpush.bf16.msra.mxu0 %v3579
    %3667 = vmatpush.bf16.msra.mxu0 %v3575
    %3668 = vmatpush.bf16.msra.mxu0 %v3571
    %3669 = vmatpush.bf16.msra.mxu0 %v3567
    %3670 = vmatpush.bf16.msra.mxu0 %v3563
    %3671 = vmatmul.bf16.gmra.mxu0 0
    %v3672 = vpop.f32.mrf.mxu0
    %v3673 = vadd.f32 0.0, %v3672
    %v3674 = vpop.f32.mrf.mxu0
    %3675 = vdwg.mxu0
    %v3676 = vadd.f32 %v3390, %v3634
    %v3677 = vadd.f32 %v3403, %v3647
    %v3678 = vadd.f32 %v3416, %v3660
    %v3679 = vadd.f32 %v3429, %v3673
    %v3680 = vxor.u32 %v3676, 2147483648
    %v3681 = vmul.f32 %v3680, 1.442695
    %v3682 = vpow.pop %v3681
    %v3683 = vadd.f32 %v3682, 1.0
    %v3684 = vrcp.pop %v3683
    %v3685 = vmul.f32 %v3683, %v3684
    %v3686 = vsub.f32 1.0, %v3685
    %v3687 = vmul.f32 %v3684, %v3686
    %v3688 = vadd.f32 %v3684, %v3687
    %vm3689 = vweird.f32 %v3683
    %vm3690 = vweird.f32 %v3684
    %vm3691 = vmor %vm3689, %vm3690
    %v3692 = vsel %vm3691, %v3684, %v3688
    %v3693 = vand.u32 2147483647, %v3683
    %vm3694 = vcmp.eq.f32.partialorder %v3693, 8.507059e+37
    %v3695 = vand.u32 %v3683, 2147483648
    %v3696 = vor.u32 1.1754944e-38, %v3695
    %v3697 = vsel %vm3694, %v3696, %v3692
    %v3698 = vmul.f32 1.0, %v3697
    %v3699 = vxor.u32 %v3677, 2147483648
    %v3700 = vmul.f32 %v3699, 1.442695
    %v3701 = vpow.pop %v3700
    %v3702 = vadd.f32 %v3701, 1.0
    %v3703 = vrcp.pop %v3702
    %v3704 = vmul.f32 %v3702, %v3703
    %v3705 = vsub.f32 1.0, %v3704
    %v3706 = vmul.f32 %v3703, %v3705
    %v3707 = vadd.f32 %v3703, %v3706
    %vm3708 = vweird.f32 %v3702
    %vm3709 = vweird.f32 %v3703
    %vm3710 = vmor %vm3708, %vm3709
    %v3711 = vsel %vm3710, %v3703, %v3707
    %v3712 = vand.u32 2147483647, %v3702
    %vm3713 = vcmp.eq.f32.partialorder %v3712, 8.507059e+37
    %v3714 = vand.u32 %v3702, 2147483648
    %v3715 = vor.u32 1.1754944e-38, %v3714
    %v3716 = vsel %vm3713, %v3715, %v3711
    %v3717 = vmul.f32 1.0, %v3716
    %v3718 = vtanh.pop %v3678
    %v3719 = vxor.u32 %v3679, 2147483648
    %v3720 = vmul.f32 %v3719, 1.442695
    %v3721 = vpow.pop %v3720
    %v3722 = vadd.f32 %v3721, 1.0
    %v3723 = vrcp.pop %v3722
    %v3724 = vmul.f32 %v3722, %v3723
    %v3725 = vsub.f32 1.0, %v3724
    %v3726 = vmul.f32 %v3723, %v3725
    %v3727 = vadd.f32 %v3723, %v3726
    %vm3728 = vweird.f32 %v3722
    %vm3729 = vweird.f32 %v3723
    %vm3730 = vmor %vm3728, %vm3729
    %v3731 = vsel %vm3730, %v3723, %v3727
    %v3732 = vand.u32 2147483647, %v3722
    %vm3733 = vcmp.eq.f32.partialorder %v3732, 8.507059e+37
    %v3734 = vand.u32 %v3722, 2147483648
    %v3735 = vor.u32 1.1754944e-38, %v3734
    %v3736 = vsel %vm3733, %v3735, %v3731
    %v3737 = vmul.f32 1.0, %v3736
    %v3738 = vmul.f32 %v3717, 0.0
    %v3739 = vmul.f32 %v3698, %v3718
    %v3740 = vadd.f32 %v3738, %v3739
    %v3741 = vtanh.pop %v3740
    %v3742 = vmul.f32 %v3737, %v3741
    %v3743 = vpack.c.bf16 %v3742, %v3742
    %3744 = vmatpush.bf16.msra.mxu0 %v3588
    %3745 = vmatpush.bf16.msra.mxu0 %v3584
    %3746 = vmatpush.bf16.msra.mxu0 %v3580
    %3747 = vmatpush.bf16.msra.mxu0 %v3576
    %3748 = vmatpush.bf16.msra.mxu0 %v3572
    %3749 = vmatpush.bf16.msra.mxu0 %v3568
    %3750 = vmatpush.bf16.msra.mxu0 %v3564
    %3751 = vmatpush.bf16.msra.mxu0 %v3560
    %3752 = vmatmul.bf16.gmra.mxu0 %v3743
    %v3753 = vpop.f32.mrf.mxu0
    %v3754 = vadd.f32 0.0, %v3753
    %v3755 = vpop.f32.mrf.mxu0
    %3756 = vdwg.mxu0
    %3757 = vmatpush.bf16.msra.mxu0 %v3589
    %3758 = vmatpush.bf16.msra.mxu0 %v3585
    %3759 = vmatpush.bf16.msra.mxu0 %v3581
    %3760 = vmatpush.bf16.msra.mxu0 %v3577
    %3761 = vmatpush.bf16.msra.mxu0 %v3573
    %3762 = vmatpush.bf16.msra.mxu0 %v3569
    %3763 = vmatpush.bf16.msra.mxu0 %v3565
    %3764 = vmatpush.bf16.msra.mxu0 %v3561
    %3765 = vmatmul.bf16.gmra.mxu0 %v3743
    %v3766 = vpop.f32.mrf.mxu0
    %v3767 = vadd.f32 0.0, %v3766
    %v3768 = vpop.f32.mrf.mxu0
    %3769 = vdwg.mxu0
    %3770 = vmatpush.bf16.msra.mxu0 %v3590
    %3771 = vmatpush.bf16.msra.mxu0 %v3586
    %3772 = vmatpush.bf16.msra.mxu0 %v3582
    %3773 = vmatpush.bf16.msra.mxu0 %v3578
    %3774 = vmatpush.bf16.msra.mxu0 %v3574
    %3775 = vmatpush.bf16.msra.mxu0 %v3570
    %3776 = vmatpush.bf16.msra.mxu0 %v3566
    %3777 = vmatpush.bf16.msra.mxu0 %v3562
    %3778 = vmatmul.bf16.gmra.mxu0 %v3743
    %v3779 = vpop.f32.mrf.mxu0
    %v3780 = vadd.f32 0.0, %v3779
    %v3781 = vpop.f32.mrf.mxu0
    %3782 = vdwg.mxu0
    %3783 = vmatpush.bf16.msra.mxu0 %v3591
    %3784 = vmatpush.bf16.msra.mxu0 %v3587
    %3785 = vmatpush.bf16.msra.mxu0 %v3583
    %3786 = vmatpush.bf16.msra.mxu0 %v3579
    %3787 = vmatpush.bf16.msra.mxu0 %v3575
    %3788 = vmatpush.bf16.msra.mxu0 %v3571
    %3789 = vmatpush.bf16.msra.mxu0 %v3567
    %3790 = vmatpush.bf16.msra.mxu0 %v3563
    %3791 = vmatmul.bf16.gmra.mxu0 %v3743
    %v3792 = vpop.f32.mrf.mxu0
    %v3793 = vadd.f32 0.0, %v3792
    %v3794 = vpop.f32.mrf.mxu0
    %3795 = vdwg.mxu0
    %v3800 = vrot.slane %v3754, 7
    %v3801 = vrot.slane %v3767, 7
    %v3802 = vrot.slane %v3780, 7
    %v3803 = vrot.slane %v3793, 7
    %v3808 = vadd.f32 %v3390, %v3800
    %v3809 = vadd.f32 %v3403, %v3801
    %v3810 = vadd.f32 %v3416, %v3802
    %v3811 = vadd.f32 %v3429, %v3803
    %v3812 = vxor.u32 %v3808, 2147483648
    %v3813 = vmul.f32 %v3812, 1.442695
    %v3814 = vpow.pop %v3813
    %v3815 = vadd.f32 %v3814, 1.0
    %v3816 = vrcp.pop %v3815
    %v3817 = vmul.f32 %v3815, %v3816
    %v3818 = vsub.f32 1.0, %v3817
    %v3819 = vmul.f32 %v3816, %v3818
    %v3820 = vadd.f32 %v3816, %v3819
    %vm3821 = vweird.f32 %v3815
    %vm3822 = vweird.f32 %v3816
    %vm3823 = vmor %vm3821, %vm3822
    %v3824 = vsel %vm3823, %v3816, %v3820
    %v3825 = vand.u32 2147483647, %v3815
    %vm3826 = vcmp.eq.f32.partialorder %v3825, 8.507059e+37
    %v3827 = vand.u32 %v3815, 2147483648
    %v3828 = vor.u32 1.1754944e-38, %v3827
    %v3829 = vsel %vm3826, %v3828, %v3824
    %v3830 = vmul.f32 1.0, %v3829
    %v3831 = vxor.u32 %v3809, 2147483648
    %v3832 = vmul.f32 %v3831, 1.442695
    %v3833 = vpow.pop %v3832
    %v3834 = vadd.f32 %v3833, 1.0
    %v3835 = vrcp.pop %v3834
    %v3836 = vmul.f32 %v3834, %v3835
    %v3837 = vsub.f32 1.0, %v3836
    %v3838 = vmul.f32 %v3835, %v3837
    %v3839 = vadd.f32 %v3835, %v3838
    %vm3840 = vweird.f32 %v3834
    %vm3841 = vweird.f32 %v3835
    %vm3842 = vmor %vm3840, %vm3841
    %v3843 = vsel %vm3842, %v3835, %v3839
    %v3844 = vand.u32 2147483647, %v3834
    %vm3845 = vcmp.eq.f32.partialorder %v3844, 8.507059e+37
    %v3846 = vand.u32 %v3834, 2147483648
    %v3847 = vor.u32 1.1754944e-38, %v3846
    %v3848 = vsel %vm3845, %v3847, %v3843
    %v3849 = vmul.f32 1.0, %v3848
    %v3850 = vtanh.pop %v3810
    %v3851 = vxor.u32 %v3811, 2147483648
    %v3852 = vmul.f32 %v3851, 1.442695
    %v3853 = vpow.pop %v3852
    %v3854 = vadd.f32 %v3853, 1.0
    %v3855 = vrcp.pop %v3854
    %v3856 = vmul.f32 %v3854, %v3855
    %v3857 = vsub.f32 1.0, %v3856
    %v3858 = vmul.f32 %v3855, %v3857
    %v3859 = vadd.f32 %v3855, %v3858
    %vm3860 = vweird.f32 %v3854
    %vm3861 = vweird.f32 %v3855
    %vm3862 = vmor %vm3860, %vm3861
    %v3863 = vsel %vm3862, %v3855, %v3859
    %v3864 = vand.u32 2147483647, %v3854
    %vm3865 = vcmp.eq.f32.partialorder %v3864, 8.507059e+37
    %v3866 = vand.u32 %v3854, 2147483648
    %v3867 = vor.u32 1.1754944e-38, %v3866
    %v3868 = vsel %vm3865, %v3867, %v3863
    %v3869 = vmul.f32 1.0, %v3868
    %v3871 = vrot.slane %v3740, 7
    %v3873 = vmul.f32 %v3849, %v3871
    %v3874 = vmul.f32 %v3830, %v3850
    %v3875 = vadd.f32 %v3873, %v3874
    %v3876 = vtanh.pop %v3875
    %v3877 = vmul.f32 %v3869, %v3876
    %v3878 = vpack.c.bf16 %v3877, %v3877
    %v3880 = vshrl.u32 %v3878, 16
    %3883 = vmatpush.bf16.msra.mxu0 %v3588
    %3884 = vmatpush.bf16.msra.mxu0 %v3584
    %3885 = vmatpush.bf16.msra.mxu0 %v3580
    %3886 = vmatpush.bf16.msra.mxu0 %v3576
    %3887 = vmatpush.bf16.msra.mxu0 %v3572
    %3888 = vmatpush.bf16.msra.mxu0 %v3568
    %3889 = vmatpush.bf16.msra.mxu0 %v3564
    %3890 = vmatpush.bf16.msra.mxu0 %v3560
    %3891 = vmatmul.bf16.gmra.mxu0 %v3880
    %v3892 = vpop.f32.mrf.mxu0
    %v3893 = vadd.f32 0.0, %v3892
    %v3894 = vpop.f32.mrf.mxu0
    %3895 = vdwg.mxu0
    %3896 = vmatpush.bf16.msra.mxu0 %v3589
    %3897 = vmatpush.bf16.msra.mxu0 %v3585
    %3898 = vmatpush.bf16.msra.mxu0 %v3581
    %3899 = vmatpush.bf16.msra.mxu0 %v3577
    %3900 = vmatpush.bf16.msra.mxu0 %v3573
    %3901 = vmatpush.bf16.msra.mxu0 %v3569
    %3902 = vmatpush.bf16.msra.mxu0 %v3565
    %3903 = vmatpush.bf16.msra.mxu0 %v3561
    %3904 = vmatmul.bf16.gmra.mxu0 %v3880
    %v3905 = vpop.f32.mrf.mxu0
    %v3906 = vadd.f32 0.0, %v3905
    %v3907 = vpop.f32.mrf.mxu0
    %3908 = vdwg.mxu0
    %3909 = vmatpush.bf16.msra.mxu0 %v3590
    %3910 = vmatpush.bf16.msra.mxu0 %v3586
    %3911 = vmatpush.bf16.msra.mxu0 %v3582
    %3912 = vmatpush.bf16.msra.mxu0 %v3578
    %3913 = vmatpush.bf16.msra.mxu0 %v3574
    %3914 = vmatpush.bf16.msra.mxu0 %v3570
    %3915 = vmatpush.bf16.msra.mxu0 %v3566
    %3916 = vmatpush.bf16.msra.mxu0 %v3562
    %3917 = vmatmul.bf16.gmra.mxu0 %v3880
    %v3918 = vpop.f32.mrf.mxu0
    %v3919 = vadd.f32 0.0, %v3918
    %v3920 = vpop.f32.mrf.mxu0
    %3921 = vdwg.mxu0
    %3922 = vmatpush.bf16.msra.mxu0 %v3591
    %3923 = vmatpush.bf16.msra.mxu0 %v3587
    %3924 = vmatpush.bf16.msra.mxu0 %v3583
    %3925 = vmatpush.bf16.msra.mxu0 %v3579
    %3926 = vmatpush.bf16.msra.mxu0 %v3575
    %3927 = vmatpush.bf16.msra.mxu0 %v3571
    %3928 = vmatpush.bf16.msra.mxu0 %v3567
    %3929 = vmatpush.bf16.msra.mxu0 %v3563
    %3930 = vmatmul.bf16.gmra.mxu0 %v3880
    %v3931 = vpop.f32.mrf.mxu0
    %v3932 = vadd.f32 0.0, %v3931
    %v3933 = vpop.f32.mrf.mxu0
    %3934 = vdwg.mxu0
    %v3939 = vrot.slane %v3893, 6
    %v3940 = vrot.slane %v3906, 6
    %v3941 = vrot.slane %v3919, 6
    %v3942 = vrot.slane %v3932, 6
    %v3947 = vadd.f32 %v3390, %v3939
    %v3948 = vadd.f32 %v3403, %v3940
    %v3949 = vadd.f32 %v3416, %v3941
    %v3950 = vadd.f32 %v3429, %v3942
    %v3951 = vxor.u32 %v3947, 2147483648
    %v3952 = vmul.f32 %v3951, 1.442695
    %v3953 = vpow.pop %v3952
    %v3954 = vadd.f32 %v3953, 1.0
    %v3955 = vrcp.pop %v3954
    %v3956 = vmul.f32 %v3954, %v3955
    %v3957 = vsub.f32 1.0, %v3956
    %v3958 = vmul.f32 %v3955, %v3957
    %v3959 = vadd.f32 %v3955, %v3958
    %vm3960 = vweird.f32 %v3954
    %vm3961 = vweird.f32 %v3955
    %vm3962 = vmor %vm3960, %vm3961
    %v3963 = vsel %vm3962, %v3955, %v3959
    %v3964 = vand.u32 2147483647, %v3954
    %vm3965 = vcmp.eq.f32.partialorder %v3964, 8.507059e+37
    %v3966 = vand.u32 %v3954, 2147483648
    %v3967 = vor.u32 1.1754944e-38, %v3966
    %v3968 = vsel %vm3965, %v3967, %v3963
    %v3969 = vmul.f32 1.0, %v3968
    %v3970 = vxor.u32 %v3948, 2147483648
    %v3971 = vmul.f32 %v3970, 1.442695
    %v3972 = vpow.pop %v3971
    %v3973 = vadd.f32 %v3972, 1.0
    %v3974 = vrcp.pop %v3973
    %v3975 = vmul.f32 %v3973, %v3974
    %v3976 = vsub.f32 1.0, %v3975
    %v3977 = vmul.f32 %v3974, %v3976
    %v3978 = vadd.f32 %v3974, %v3977
    %vm3979 = vweird.f32 %v3973
    %vm3980 = vweird.f32 %v3974
    %vm3981 = vmor %vm3979, %vm3980
    %v3982 = vsel %vm3981, %v3974, %v3978
    %v3983 = vand.u32 2147483647, %v3973
    %vm3984 = vcmp.eq.f32.partialorder %v3983, 8.507059e+37
    %v3985 = vand.u32 %v3973, 2147483648
    %v3986 = vor.u32 1.1754944e-38, %v3985
    %v3987 = vsel %vm3984, %v3986, %v3982
    %v3988 = vmul.f32 1.0, %v3987
    %v3989 = vtanh.pop %v3949
    %v3990 = vxor.u32 %v3950, 2147483648
    %v3991 = vmul.f32 %v3990, 1.442695
    %v3992 = vpow.pop %v3991
    %v3993 = vadd.f32 %v3992, 1.0
    %v3994 = vrcp.pop %v3993
    %v3995 = vmul.f32 %v3993, %v3994
    %v3996 = vsub.f32 1.0, %v3995
    %v3997 = vmul.f32 %v3994, %v3996
    %v3998 = vadd.f32 %v3994, %v3997
    %vm3999 = vweird.f32 %v3993
    %vm4000 = vweird.f32 %v3994
    %vm4001 = vmor %vm3999, %vm4000
    %v4002 = vsel %vm4001, %v3994, %v3998
    %v4003 = vand.u32 2147483647, %v3993
    %vm4004 = vcmp.eq.f32.partialorder %v4003, 8.507059e+37
    %v4005 = vand.u32 %v3993, 2147483648
    %v4006 = vor.u32 1.1754944e-38, %v4005
    %v4007 = vsel %vm4004, %v4006, %v4002
    %v4008 = vmul.f32 1.0, %v4007
    %v4010 = vrot.slane %v3875, 7
    %v4012 = vmul.f32 %v3988, %v4010
    %v4013 = vmul.f32 %v3969, %v3989
    %v4014 = vadd.f32 %v4012, %v4013
    %v4015 = vtanh.pop %v4014
    %v4016 = vmul.f32 %v4008, %v4015
    %v4017 = vpack.c.bf16 %v4016, %v4016
    %v4019 = vrot.slane %v4017, 1
    %4021 = vmatpush.bf16.msra.mxu0 %v3588
    %4022 = vmatpush.bf16.msra.mxu0 %v3584
    %4023 = vmatpush.bf16.msra.mxu0 %v3580
    %4024 = vmatpush.bf16.msra.mxu0 %v3576
    %4025 = vmatpush.bf16.msra.mxu0 %v3572
    %4026 = vmatpush.bf16.msra.mxu0 %v3568
    %4027 = vmatpush.bf16.msra.mxu0 %v3564
    %4028 = vmatpush.bf16.msra.mxu0 %v3560
    %4029 = vmatmul.bf16.gmra.mxu0 %v4019
    %v4030 = vpop.f32.mrf.mxu0
    %v4031 = vadd.f32 0.0, %v4030
    %v4032 = vpop.f32.mrf.mxu0
    %4033 = vdwg.mxu0
    %4034 = vmatpush.bf16.msra.mxu0 %v3589
    %4035 = vmatpush.bf16.msra.mxu0 %v3585
    %4036 = vmatpush.bf16.msra.mxu0 %v3581
    %4037 = vmatpush.bf16.msra.mxu0 %v3577
    %4038 = vmatpush.bf16.msra.mxu0 %v3573
    %4039 = vmatpush.bf16.msra.mxu0 %v3569
    %4040 = vmatpush.bf16.msra.mxu0 %v3565
    %4041 = vmatpush.bf16.msra.mxu0 %v3561
    %4042 = vmatmul.bf16.gmra.mxu0 %v4019
    %v4043 = vpop.f32.mrf.mxu0
    %v4044 = vadd.f32 0.0, %v4043
    %v4045 = vpop.f32.mrf.mxu0
    %4046 = vdwg.mxu0
    %4047 = vmatpush.bf16.msra.mxu0 %v3590
    %4048 = vmatpush.bf16.msra.mxu0 %v3586
    %4049 = vmatpush.bf16.msra.mxu0 %v3582
    %4050 = vmatpush.bf16.msra.mxu0 %v3578
    %4051 = vmatpush.bf16.msra.mxu0 %v3574
    %4052 = vmatpush.bf16.msra.mxu0 %v3570
    %4053 = vmatpush.bf16.msra.mxu0 %v3566
    %4054 = vmatpush.bf16.msra.mxu0 %v3562
    %4055 = vmatmul.bf16.gmra.mxu0 %v4019
    %v4056 = vpop.f32.mrf.mxu0
    %v4057 = vadd.f32 0.0, %v4056
    %v4058 = vpop.f32.mrf.mxu0
    %4059 = vdwg.mxu0
    %4060 = vmatpush.bf16.msra.mxu0 %v3591
    %4061 = vmatpush.bf16.msra.mxu0 %v3587
    %4062 = vmatpush.bf16.msra.mxu0 %v3583
    %4063 = vmatpush.bf16.msra.mxu0 %v3579
    %4064 = vmatpush.bf16.msra.mxu0 %v3575
    %4065 = vmatpush.bf16.msra.mxu0 %v3571
    %4066 = vmatpush.bf16.msra.mxu0 %v3567
    %4067 = vmatpush.bf16.msra.mxu0 %v3563
    %4068 = vmatmul.bf16.gmra.mxu0 %v4019
    %v4069 = vpop.f32.mrf.mxu0
    %v4070 = vadd.f32 0.0, %v4069
    %v4071 = vpop.f32.mrf.mxu0
    %4072 = vdwg.mxu0
    %v4077 = vrot.slane %v4031, 5
    %v4078 = vrot.slane %v4044, 5
    %v4079 = vrot.slane %v4057, 5
    %v4080 = vrot.slane %v4070, 5
    %v4085 = vadd.f32 %v3390, %v4077
    %v4086 = vadd.f32 %v3403, %v4078
    %v4087 = vadd.f32 %v3416, %v4079
    %v4088 = vadd.f32 %v3429, %v4080
    %v4089 = vxor.u32 %v4085, 2147483648
    %v4090 = vmul.f32 %v4089, 1.442695
    %v4091 = vpow.pop %v4090
    %v4092 = vadd.f32 %v4091, 1.0
    %v4093 = vrcp.pop %v4092
    %v4094 = vmul.f32 %v4092, %v4093
    %v4095 = vsub.f32 1.0, %v4094
    %v4096 = vmul.f32 %v4093, %v4095
    %v4097 = vadd.f32 %v4093, %v4096
    %vm4098 = vweird.f32 %v4092
    %vm4099 = vweird.f32 %v4093
    %vm4100 = vmor %vm4098, %vm4099
    %v4101 = vsel %vm4100, %v4093, %v4097
    %v4102 = vand.u32 2147483647, %v4092
    %vm4103 = vcmp.eq.f32.partialorder %v4102, 8.507059e+37
    %v4104 = vand.u32 %v4092, 2147483648
    %v4105 = vor.u32 1.1754944e-38, %v4104
    %v4106 = vsel %vm4103, %v4105, %v4101
    %v4107 = vmul.f32 1.0, %v4106
    %v4108 = vxor.u32 %v4086, 2147483648
    %v4109 = vmul.f32 %v4108, 1.442695
    %v4110 = vpow.pop %v4109
    %v4111 = vadd.f32 %v4110, 1.0
    %v4112 = vrcp.pop %v4111
    %v4113 = vmul.f32 %v4111, %v4112
    %v4114 = vsub.f32 1.0, %v4113
    %v4115 = vmul.f32 %v4112, %v4114
    %v4116 = vadd.f32 %v4112, %v4115
    %vm4117 = vweird.f32 %v4111
    %vm4118 = vweird.f32 %v4112
    %vm4119 = vmor %vm4117, %vm4118
    %v4120 = vsel %vm4119, %v4112, %v4116
    %v4121 = vand.u32 2147483647, %v4111
    %vm4122 = vcmp.eq.f32.partialorder %v4121, 8.507059e+37
    %v4123 = vand.u32 %v4111, 2147483648
    %v4124 = vor.u32 1.1754944e-38, %v4123
    %v4125 = vsel %vm4122, %v4124, %v4120
    %v4126 = vmul.f32 1.0, %v4125
    %v4127 = vtanh.pop %v4087
    %v4128 = vxor.u32 %v4088, 2147483648
    %v4129 = vmul.f32 %v4128, 1.442695
    %v4130 = vpow.pop %v4129
    %v4131 = vadd.f32 %v4130, 1.0
    %v4132 = vrcp.pop %v4131
    %v4133 = vmul.f32 %v4131, %v4132
    %v4134 = vsub.f32 1.0, %v4133
    %v4135 = vmul.f32 %v4132, %v4134
    %v4136 = vadd.f32 %v4132, %v4135
    %vm4137 = vweird.f32 %v4131
    %vm4138 = vweird.f32 %v4132
    %vm4139 = vmor %vm4137, %vm4138
    %v4140 = vsel %vm4139, %v4132, %v4136
    %v4141 = vand.u32 2147483647, %v4131
    %vm4142 = vcmp.eq.f32.partialorder %v4141, 8.507059e+37
    %v4143 = vand.u32 %v4131, 2147483648
    %v4144 = vor.u32 1.1754944e-38, %v4143
    %v4145 = vsel %vm4142, %v4144, %v4140
    %v4146 = vmul.f32 1.0, %v4145
    %v4148 = vrot.slane %v4014, 7
    %v4150 = vmul.f32 %v4126, %v4148
    %v4151 = vmul.f32 %v4107, %v4127
    %v4152 = vadd.f32 %v4150, %v4151
    %v4153 = vtanh.pop %v4152
    %v4154 = vmul.f32 %v4146, %v4153
    %v4155 = vsel %vm3169, %v3742, %v3877
    %v4156 = vsel %vm3171, %v4155, %v4016
    %v4157 = vsel %vm3173, %v4156, %v4154
    %v4158 = vpack.c.bf16 %v4157, %v4157
    %v4159 = vld [vmem:[%s20] sm:$0xf]
    %v4160 = vld [vmem:[%s20 + $0x4] sm:$0xf]
    %v4161 = vld [vmem:[%s20 + $0x8] sm:$0xf]
    %v4162 = vld [vmem:[%s20 + $0xc] sm:$0xf]
    %v4163 = vld [vmem:[%s20 + $0x10] sm:$0xf]
    %v4164 = vld [vmem:[%s20 + $0x14] sm:$0xf]
    %v4165 = vld [vmem:[%s20 + $0x18] sm:$0xf]
    %v4166 = vld [vmem:[%s20 + $0x1c] sm:$0xf]
    %v4167 = vld [vmem:[%s20 + $0x20] sm:$0xf]
    %v4168 = vld [vmem:[%s20 + $0x24] sm:$0xf]
    %v4169 = vld [vmem:[%s20 + $0x28] sm:$0xf]
    %v4170 = vld [vmem:[%s20 + $0x2c] sm:$0xf]
    %v4171 = vld [vmem:[%s20 + $0x30] sm:$0xf]
    %v4172 = vld [vmem:[%s20 + $0x34] sm:$0xf]
    %v4173 = vld [vmem:[%s20 + $0x38] sm:$0xf]
    %v4174 = vld [vmem:[%s20 + $0x3c] sm:$0xf]
    %v4175 = vld [vmem:[%s21] sm:$0x1]
    %v4177 = vperm.slane %v4175, 0
    %v4195 = vunpack.c.l.b16 %v4159
    %v4196 = vunpack.c.l.b16 %v4160
    %v4197 = vunpack.c.l.b16 %v4161
    %v4198 = vunpack.c.l.b16 %v4162
    %v4199 = vunpack.c.l.b16 %v4163
    %v4200 = vunpack.c.l.b16 %v4164
    %v4201 = vunpack.c.l.b16 %v4165
    %v4202 = vunpack.c.l.b16 %v4166
    %v4203 = vunpack.c.l.b16 %v4167
    %v4204 = vunpack.c.l.b16 %v4168
    %v4205 = vunpack.c.l.b16 %v4169
    %v4206 = vunpack.c.l.b16 %v4170
    %v4207 = vunpack.c.l.b16 %v4171
    %v4208 = vunpack.c.l.b16 %v4172
    %v4209 = vunpack.c.l.b16 %v4173
    %v4210 = vunpack.c.l.b16 %v4174
    %v4211 = vpack.c.b16 %v4196, %v4195
    %v4212 = vpack.c.b16 %v4198, %v4197
    %v4213 = vpack.c.b16 %v4200, %v4199
    %v4214 = vpack.c.b16 %v4202, %v4201
    %v4215 = vpack.c.b16 %v4204, %v4203
    %v4216 = vpack.c.b16 %v4206, %v4205
    %v4217 = vpack.c.b16 %v4208, %v4207
    %v4218 = vpack.c.b16 %v4210, %v4209
    %4227 = vmatpush.bf16.msra.mxu0 %v4218
    %4228 = vmatpush.bf16.msra.mxu0 %v4217
    %4229 = vmatpush.bf16.msra.mxu0 %v4216
    %4230 = vmatpush.bf16.msra.mxu0 %v4215
    %4231 = vmatpush.bf16.msra.mxu0 %v4214
    %4232 = vmatpush.bf16.msra.mxu0 %v4213
    %4233 = vmatpush.bf16.msra.mxu0 %v4212
    %4234 = vmatpush.bf16.msra.mxu0 %v4211
    %4235 = vmatmul.bf16.gmra.mxu0 %v4158
    %v4236 = vpop.f32.mrf.mxu0
    %v4237 = vadd.f32 %v4177, %v4236
    %v4238 = vpop.f32.mrf.mxu0
    %4239 = vdwg.mxu0
    %4240 = vst [vmem:[#allocation10] sm:$0xf] %v4237
    // Predicated region
    $region106: #{bert_qpp_forward.1} parent=1 // pred_check
      _
    $region107: #{bert_qpp_forward.1} parent=1 // pred_check_branch
      %4242 = sbr.rel (0) target = $region109
    $region108: #{bert_qpp_forward.1} parent=1 // pred_region
      %4244 = vsyncadd [#allocation4], 0
      %s4246 = sshll.u32 [#allocation10], 4
      %s4247 = int_to_ptr.vmem [resolvable:$true] %s4246
      %s4248 = sshll.u32 %s22, 4
      %s4249 = int_to_ptr.hbm [resolvable:$true] %s4248
      %4251 = dma.vmem_to_hbm [thread:$0]  %s4247, 64, %s4249, [#allocation4]
    $region109: #{bert_qpp_forward.1} parent=1 // pred_fallthru
      _
    // Predicated region
    $region110: #{bert_qpp_forward.1} parent=1 // pred_check
      _
    $region111: #{bert_qpp_forward.1} parent=1 // pred_check_branch
      %4253 = sbr.rel (0) target = $region113
    $region112: #{bert_qpp_forward.1} parent=1 // pred_region
      %4255 = dma.done [#allocation4], 64
    $region113: #{bert_qpp_forward.1} parent=1 // pred_fallthru
      _
    %4256 = vsyncpa [#allocation3], 1
    %4257 = vsyncpa [#allocation6], 1
    %4258 = vsyncpa [#allocation9], 1
    %4259 = vsyncpa [#allocation4], 1

</llo_original>
